<compile_context>
chip_gen: v7x
topology: tpu7x:2x2x1
jax: 0.10.0
libtpu: 0.0.40
codegen_flags: <defaults>
</compile_context>

<pallas_src>
import jax
import jax.numpy as jnp
from jax.experimental import pallas as pl
from jax.experimental.pallas import tpu as pltpu

_BN_EPS = 1e-5
_LS = 128  # PatchDeformationMLP layer size; also the lane-padding width


def _bn(h, gamma, beta):
    # PyTorch BatchNorm1d (training mode): batch statistics, biased variance, two-pass (stable).
    mean = jnp.mean(h, axis=0, keepdims=True)
    c = h - mean
    var = jnp.mean(c * c, axis=0, keepdims=True)
    return c * jax.lax.rsqrt(var + _BN_EPS) * gamma + beta


# Packed per-patch vector slab row indices (see init_params):
#  0..2  db1, dg1, dbt1      3..5  db2, dg2, dbt2      6  db3 (padded)
#  7..9  cb1, cg1, cbt1     10..12 cb2, cg2, cbt2     13..15 cb3, cg3, cbt3
# 16     cb4 (padded)       17..23 zero padding (rows -> multiple of 8)


def _atlas_kernel(g_ref, lat_ref, vecs_ref,
                  dw1_ref, dw2_ref, dw3_ref,
                  cw1a_ref, cw1b_ref, cw2_ref, cw3_ref, cw4_ref,
                  deform_ref, part_ref):
    p = pl.program_id(0)
    bf = jnp.bfloat16
    f32 = jnp.float32

    g = g_ref[...]                      # (B*P, 128) bf16; lanes >= patch_dim_in are zero
    lat = lat_ref[...]                  # (B, latent) f32 (head MLP output, computed in XLA)
    vecs = vecs_ref[p]                  # (24, 128) f32: packed per-patch biases / BN params

    B = lat.shape[0]
    rows = g.shape[0]
    P = deform_ref.shape[0]
    c1 = cw1a_ref.shape[2]
    c2 = cw2_ref.shape[2]
    c3 = cw3_ref.shape[2]

    db1, dg1, dbt1 = vecs[0:1], vecs[1:2], vecs[2:3]
    db2, dg2, dbt2 = vecs[3:4], vecs[4:5], vecs[5:6]
    db3 = vecs[6:7]
    cb1, cg1, cbt1 = vecs[7:8, :c1], vecs[8:9, :c1], vecs[9:10, :c1]
    cb2, cg2, cbt2 = vecs[10:11, :c2], vecs[11:12, :c2], vecs[12:13, :c2]
    cb3, cg3, cbt3 = vecs[13:14, :c3], vecs[14:15, :c3], vecs[15:16, :c3]
    cb4 = vecs[16:17]

    # --- PatchDeformationMLP: conv1+bn+relu, conv2+bn+relu, conv3+tanh ---
    h = jnp.dot(g, dw1_ref[p], preferred_element_type=f32) + db1        # K=128 (zero-padded)
    h = jnp.maximum(_bn(h, dg1, dbt1), 0.0)
    h = jnp.dot(h.astype(bf), dw2_ref[p], preferred_element_type=f32) + db2
    h = jnp.maximum(_bn(h, dg2, dbt2), 0.0)
    # dw3/db3 zero-padded to 128 output lanes -> padding lanes are tanh(0) = 0 (lane-dense store).
    d = jnp.tanh(jnp.dot(h.astype(bf), dw3_ref[p], preferred_element_type=f32) + db3)
    deform_ref[...] = d[:P, :]          # sample 0 only (reference returns rand_grid[0])

    # --- MLPAdj decoder on concat(deformed_patch, latent):
    #       concat(d, lat) @ cw1 == d @ cw1a + lat @ cw1b (identical math; cw1a rows >= pdo are 0).
    #     The latent term is computed at batch granularity (B rows) and broadcast to the B*P
    #     point rows with a layout-safe reshape (P is a multiple of 8) + add.
    d_c = jnp.dot(d.astype(bf), cw1a_ref[p], preferred_element_type=f32)       # (rows, c1)
    lat_c = jnp.dot(lat.astype(bf), cw1b_ref[p], preferred_element_type=f32)   # (B, c1)
    h = (d_c.reshape(B, P, c1) + lat_c.reshape(B, 1, c1)).reshape(rows, c1) + cb1
    h = jnp.maximum(_bn(h, cg1, cbt1), 0.0)
    h = jnp.dot(h.astype(bf), cw2_ref[p], preferred_element_type=f32) + cb2
    h = jnp.maximum(_bn(h, cg2, cbt2), 0.0)
    h = jnp.dot(h.astype(bf), cw3_ref[p], preferred_element_type=f32) + cb3
    h = jnp.maximum(_bn(h, cg3, cbt3), 0.0)
    # cw4/cb4 zero-padded to 128 output lanes -> padding lanes are exactly 0 (lane-dense store).
    part_ref[...] = jnp.tanh(jnp.dot(h.astype(bf), cw4_ref[p], preferred_element_type=f32) + cb4)


# ---------------------------------------------------------------------------
# Fused pallas_call wrapper: grid=(n_patches,).  The rand grid is per-patch blocked
# (pipelined prefetch); latent code, packed vectors and all stacked weights are
# invariant blocks (resident in VMEM across the whole grid, indexed [p] in-kernel).
# ---------------------------------------------------------------------------
def atlas_fused_forward(g, lat, vecs, weights, P, n_patches):
    rows = g.shape[1]

    def invariant(a):                       # same block every grid step -> fetched once
        nd = a.ndim
        return pl.BlockSpec(a.shape, lambda i, nd=nd: (0,) * nd)

    in_specs = ([pl.BlockSpec((None, rows, _LS), lambda i: (i, 0, 0)),   # rand grid, per patch
                 invariant(lat), invariant(vecs)]
                + [invariant(w) for w in weights])

    out_specs = (pl.BlockSpec((None, P, _LS), lambda i: (i, 0, 0)),      # deform (sample 0)
                 pl.BlockSpec((None, rows, _LS), lambda i: (i, 0, 0)))   # decoder output

    return pl.pallas_call(
        _atlas_kernel,
        grid=(n_patches,),
        in_specs=in_specs,
        out_specs=out_specs,
        out_shape=(jax.ShapeDtypeStruct((n_patches, P, _LS), jnp.float32),
                   jax.ShapeDtypeStruct((n_patches, rows, _LS), jnp.float32)),
        compiler_params=pltpu.CompilerParams(
            dimension_semantics=("arbitrary",)),   # per-patch work is tiny; megacore break-even
    )(g, lat, vecs, *weights)


# ---------------------------------------------------------------------------
# Deterministic parameter initialization (same shapes as the PyTorch module, stacked over
# patches).  Weights are zero-padded for lane-dense matmuls and pre-cast to bf16; all tiny
# per-patch 1xC vectors are packed into a single (n_patches, 24, 128) f32 slab.
# ---------------------------------------------------------------------------
def init_params(key, latent_dim, n_patches, patch_dim_in, patch_dim_out):
    dec_in = patch_dim_out + latent_dim
    c1, c2, c3 = dec_in, dec_in // 2, dec_in // 4
    keys = iter(jax.random.split(key, 32))

    def u(shape, s):
        return jax.random.uniform(next(keys), shape, jnp.float32, -s, s)

    def lin(cin, cout):
        s = float(cin) ** -0.5
        return u((n_patches, cin, cout), s), u((n_patches, 1, cout), s)

    # ----- head (patch-invariant; runs in plain XLA in the wrapper) -----
    s1, s2 = 1024.0 ** -0.5, float(latent_dim) ** -0.5
    head = (u((1024, latent_dim), s1), u((1, latent_dim), s1),
            u((latent_dim, latent_dim), s2), u((1, latent_dim), s2))

    # ----- PatchDeformationMLP (stacked over patches) -----
    dw1, db1 = lin(patch_dim_in, _LS)
    dw2, db2 = lin(_LS, _LS)
    dw3, db3 = lin(_LS, patch_dim_out)

    # ----- MLPAdj decoder (stacked over patches) -----
    s = float(dec_in) ** -0.5
    cw1 = u((n_patches, dec_in, c1), s)
    cb1 = u((n_patches, 1, c1), s)
    cw1a, cw1b = cw1[:, :patch_dim_out, :], cw1[:, patch_dim_out:, :]
    cw2, cb2 = lin(c1, c2)
    cw3, cb3 = lin(c2, c3)
    cw4, cb4 = lin(c3, 3)

    # Zero-padding keeps the math identical: extra contraction rows multiply zero activations,
    # extra output columns produce tanh(0) = 0 lanes that are sliced off outside the kernel.
    def pad_in(w):   # pad contraction (cin) dim with zero rows -> K = 128
        return jnp.pad(w, ((0, 0), (0, _LS - w.shape[1]), (0, 0)))

    def pad_out(w):  # pad output (cout) dim with zero cols -> lane-dense stores
        return jnp.pad(w, ((0, 0), (0, 0), (0, _LS - w.shape[2])))

    bf = jnp.bfloat16
    weights = (pad_in(dw1).astype(bf), dw2.astype(bf), pad_out(dw3).astype(bf),
               pad_in(cw1a).astype(bf), cw1b.astype(bf),
               cw2.astype(bf), cw3.astype(bf), pad_out(cw4).astype(bf))

    # ----- pack all per-patch 1xC vectors (biases + BN gamma/beta) into one slab -----
    ones = lambda C: jnp.ones((n_patches, 1, C), jnp.float32)
    zeros = lambda C: jnp.zeros((n_patches, 1, C), jnp.float32)
    vrows = [db1, ones(_LS), zeros(_LS),       # deform bn1
             db2, ones(_LS), zeros(_LS),       # deform bn2
             db3,                              # deform conv3 bias (tanh; pad lanes -> 0)
             cb1, ones(c1), zeros(c1),         # decoder bn1
             cb2, ones(c2), zeros(c2),         # decoder bn2
             cb3, ones(c3), zeros(c3),         # decoder bn3
             cb4]                              # decoder conv4 bias (tanh; pad lanes -> 0)
    vrows = [jnp.pad(r, ((0, 0), (0, 0), (0, _LS - r.shape[2]))) for r in vrows]
    vrows.append(jnp.zeros((n_patches, 24 - len(vrows), _LS), jnp.float32))  # rows -> 24 (mult of 8)
    vecs = jnp.concatenate(vrows, axis=1)      # (n_patches, 24, 128)

    return head, weights, vecs


# ---------------------------------------------------------------------------
# AtlasNet forward: head MLP + RNG + reshape glue in XLA, everything else in one Pallas call.
# ---------------------------------------------------------------------------
def atlasnet_forward(x_img, params, key, n_points, n_patches, patch_dim_in, patch_dim_out):
    head, weights, vecs = params
    hw1, hb1, hw2, hb2 = head
    B = x_img.shape[0]
    P = n_points // n_patches
    rows = B * P

    # TODO(synk): external encoder replaced by deterministic flatten (B, 4*16*16) = (B, 1024).
    feat = x_img.reshape(B, -1).astype(jnp.float32)

    # Head MLP hoisted out of the kernel (patch-invariant; was recomputed every grid step).
    lat = jnp.maximum(feat @ hw1 + hb1, 0.0) @ hw2 + hb2                  # (B, latent)

    # rand_grid ~ U(0,1): host-generated (TPU PRNG primitives don't lower in interpret mode),
    # zero-padded to 128 lanes -> the first deform matmul is a clean K=128 bf16 contraction.
    g = jax.random.uniform(key, (n_patches, rows, patch_dim_in), jnp.float32)
    g = jnp.pad(g, ((0, 0), (0, 0), (0, _LS - patch_dim_in))).astype(jnp.bfloat16)

    deform_all, part_all = atlas_fused_forward(g, lat, vecs, weights, P, n_patches)
    # deform_all: (n_patches, P, 128)   -- sample-0 deformed patches, lane-padded with zeros
    # part_all:   (n_patches, B*P, 128) -- decoder outputs, lanes >= 3 are exactly zero

    part3 = part_all[:, :, :3].reshape(n_patches, B, P, 3)
    out = jnp.transpose(part3, (1, 0, 2, 3)).reshape(B, n_patches * P, 3)  # == cat(parts,2).T(2,1)
    parts_stack = jnp.transpose(part3, (0, 1, 3, 2))                       # (n_patches, B, 3, P)
    parts = [parts_stack[i] for i in range(n_patches)]                     # PyTorch (B, 3, P)
    pat = deform_all[:, :, :patch_dim_out]                                 # (n_patches, P, pdo)
    patches = [pat[i] for i in range(n_patches)]                           # rand_grid[0].T
    return out, patches, parts


if __name__ == "__main__":
    B = 2
    latent_dim = 32
    n_points = 256
    n_patches = 2
    patch_dim_in = 2
    patch_dim_out = 3

    root = jax.random.PRNGKey(0)
    pkey, gkey, xkey = jax.random.split(root, 3)

    params = init_params(pkey, latent_dim, n_patches, patch_dim_in, patch_dim_out)
    x = jax.random.normal(xkey, (B, 4, 16, 16), jnp.float32)   # NCHW image input

    out, patches, parts = atlasnet_forward(
        x, params, gkey, n_points, n_patches, patch_dim_in, patch_dim_out)

    jax.block_until_ready(out)
    for t in patches + parts:
        jax.block_until_ready(t)

    P = n_points // n_patches
    assert out.shape == (B, n_points, 3)
    assert all(pc.shape == (P, patch_dim_out) for pc in patches)
    assert all(pc.shape == (B, 3, P) for pc in parts)
    assert bool(jnp.all(jnp.isfinite(out)))
    print("KERNEL_OK")
</pallas_src>

<mosaic_0001>
module attributes {stable_mosaic.version = 11 : i64} {
  func.func @_atlas_kernel(%arg0: i32, %arg1: memref<1x256x128xbf16, #tpu.memory_space<vmem>>, %arg2: memref<2x32xf32, #tpu.memory_space<vmem>>, %arg3: memref<2x24x128xf32, #tpu.memory_space<vmem>>, %arg4: memref<2x128x128xbf16, #tpu.memory_space<vmem>>, %arg5: memref<2x128x128xbf16, #tpu.memory_space<vmem>>, %arg6: memref<2x128x128xbf16, #tpu.memory_space<vmem>>, %arg7: memref<2x128x35xbf16, #tpu.memory_space<vmem>>, %arg8: memref<2x32x35xbf16, #tpu.memory_space<vmem>>, %arg9: memref<2x35x17xbf16, #tpu.memory_space<vmem>>, %arg10: memref<2x17x8xbf16, #tpu.memory_space<vmem>>, %arg11: memref<2x8x128xbf16, #tpu.memory_space<vmem>>, %arg12: memref<1x128x128xf32, #tpu.memory_space<vmem>>, %arg13: memref<1x256x128xf32, #tpu.memory_space<vmem>>) attributes {dimension_semantics = [#tpu.dimension_semantics<arbitrary>], iteration_bounds = array<i64: 2>, scalar_prefetch = 0 : i64, scratch_operands = 0 : i64, tpu.core_type = #tpu.core_type<tc>, window_params = [{transform_indices = @transform_0, window_bounds = array<i64: 1, 256, 128>}, {pipeline_mode = #tpu.pipeline_mode<synchronous>, transform_indices = @transform_1, window_bounds = array<i64: 2, 32>}, {pipeline_mode = #tpu.pipeline_mode<synchronous>, transform_indices = @transform_2, window_bounds = array<i64: 2, 24, 128>}, {pipeline_mode = #tpu.pipeline_mode<synchronous>, transform_indices = @transform_3, window_bounds = array<i64: 2, 128, 128>}, {pipeline_mode = #tpu.pipeline_mode<synchronous>, transform_indices = @transform_4, window_bounds = array<i64: 2, 128, 128>}, {pipeline_mode = #tpu.pipeline_mode<synchronous>, transform_indices = @transform_5, window_bounds = array<i64: 2, 128, 128>}, {pipeline_mode = #tpu.pipeline_mode<synchronous>, transform_indices = @transform_6, window_bounds = array<i64: 2, 128, 35>}, {pipeline_mode = #tpu.pipeline_mode<synchronous>, transform_indices = @transform_7, window_bounds = array<i64: 2, 32, 35>}, {pipeline_mode = #tpu.pipeline_mode<synchronous>, transform_indices = @transform_8, window_bounds = array<i64: 2, 35, 17>}, {pipeline_mode = #tpu.pipeline_mode<synchronous>, transform_indices = @transform_9, window_bounds = array<i64: 2, 17, 8>}, {pipeline_mode = #tpu.pipeline_mode<synchronous>, transform_indices = @transform_10, window_bounds = array<i64: 2, 8, 128>}, {transform_indices = @transform_11, window_bounds = array<i64: 1, 128, 128>}, {transform_indices = @transform_12, window_bounds = array<i64: 1, 256, 128>}]} {
    %c0 = arith.constant 0 : index
    %c0_0 = arith.constant 0 : index
    %c0_1 = arith.constant 0 : index
    %0 = vector.load %arg1[%c0, %c0_0, %c0_1] : memref<1x256x128xbf16, #tpu.memory_space<vmem>>, vector<1x256x128xbf16>
    %1 = vector.shape_cast %0 : vector<1x256x128xbf16> to vector<256x128xbf16>
    %c0_2 = arith.constant 0 : index
    %c0_3 = arith.constant 0 : index
    %2 = vector.load %arg2[%c0_2, %c0_3] : memref<2x32xf32, #tpu.memory_space<vmem>>, vector<2x32xf32>
    %3 = arith.index_cast %arg0 : i32 to index
    %c0_4 = arith.constant 0 : index
    %c0_5 = arith.constant 0 : index
    %4 = vector.load %arg3[%3, %c0_4, %c0_5] : memref<2x24x128xf32, #tpu.memory_space<vmem>>, vector<1x24x128xf32>
    %5 = vector.shape_cast %4 : vector<1x24x128xf32> to vector<24x128xf32>
    %6 = vector.extract_strided_slice %5 {offsets = [0, 0], sizes = [1, 128], strides = [1, 1]} : vector<24x128xf32> to vector<1x128xf32>
    %7 = vector.extract_strided_slice %5 {offsets = [1, 0], sizes = [1, 128], strides = [1, 1]} : vector<24x128xf32> to vector<1x128xf32>
    %8 = vector.extract_strided_slice %5 {offsets = [2, 0], sizes = [1, 128], strides = [1, 1]} : vector<24x128xf32> to vector<1x128xf32>
    %9 = vector.extract_strided_slice %5 {offsets = [3, 0], sizes = [1, 128], strides = [1, 1]} : vector<24x128xf32> to vector<1x128xf32>
    %10 = vector.extract_strided_slice %5 {offsets = [4, 0], sizes = [1, 128], strides = [1, 1]} : vector<24x128xf32> to vector<1x128xf32>
    %11 = vector.extract_strided_slice %5 {offsets = [5, 0], sizes = [1, 128], strides = [1, 1]} : vector<24x128xf32> to vector<1x128xf32>
    %12 = vector.extract_strided_slice %5 {offsets = [6, 0], sizes = [1, 128], strides = [1, 1]} : vector<24x128xf32> to vector<1x128xf32>
    %13 = vector.extract_strided_slice %5 {offsets = [7, 0], sizes = [1, 35], strides = [1, 1]} : vector<24x128xf32> to vector<1x35xf32>
    %14 = vector.extract_strided_slice %5 {offsets = [8, 0], sizes = [1, 35], strides = [1, 1]} : vector<24x128xf32> to vector<1x35xf32>
    %15 = vector.extract_strided_slice %5 {offsets = [9, 0], sizes = [1, 35], strides = [1, 1]} : vector<24x128xf32> to vector<1x35xf32>
    %16 = vector.extract_strided_slice %5 {offsets = [10, 0], sizes = [1, 17], strides = [1, 1]} : vector<24x128xf32> to vector<1x17xf32>
    %17 = vector.extract_strided_slice %5 {offsets = [11, 0], sizes = [1, 17], strides = [1, 1]} : vector<24x128xf32> to vector<1x17xf32>
    %18 = vector.extract_strided_slice %5 {offsets = [12, 0], sizes = [1, 17], strides = [1, 1]} : vector<24x128xf32> to vector<1x17xf32>
    %19 = vector.extract_strided_slice %5 {offsets = [13, 0], sizes = [1, 8], strides = [1, 1]} : vector<24x128xf32> to vector<1x8xf32>
    %20 = vector.extract_strided_slice %5 {offsets = [14, 0], sizes = [1, 8], strides = [1, 1]} : vector<24x128xf32> to vector<1x8xf32>
    %21 = vector.extract_strided_slice %5 {offsets = [15, 0], sizes = [1, 8], strides = [1, 1]} : vector<24x128xf32> to vector<1x8xf32>
    %22 = vector.extract_strided_slice %5 {offsets = [16, 0], sizes = [1, 128], strides = [1, 1]} : vector<24x128xf32> to vector<1x128xf32>
    %23 = arith.index_cast %arg0 : i32 to index
    %c0_6 = arith.constant 0 : index
    %c0_7 = arith.constant 0 : index
    %24 = vector.load %arg4[%23, %c0_6, %c0_7] : memref<2x128x128xbf16, #tpu.memory_space<vmem>>, vector<1x128x128xbf16>
    %25 = vector.shape_cast %24 : vector<1x128x128xbf16> to vector<128x128xbf16>
    %cst = arith.constant dense<0.000000e+00> : vector<256x128xf32>
    %26 = tpu.matmul %1, %25, %cst {dimension_numbers = #tpu.dot_dimension_numbers<[1], [0], [0], [1], [0, 0, 1, 1], [], []>} : vector<256x128xbf16>, vector<128x128xbf16>, vector<256x128xf32> -> vector<256x128xf32>
    %27 = vector.broadcast %6 : vector<1x128xf32> to vector<256x128xf32>
    %28 = arith.addf %26, %27 : vector<256x128xf32>
    %cst_8 = arith.constant dense<0.000000e+00> : vector<128xf32>
    %29 = vector.multi_reduction <add>, %28, %cst_8 [0] : vector<256x128xf32> to vector<128xf32>
    %30 = vector.shape_cast %29 : vector<128xf32> to vector<1x128xf32>
    %cst_9 = arith.constant 2.560000e+02 : f32
    %31 = vector.broadcast %cst_9 : f32 to vector<1x128xf32>
    %32 = arith.divf %30, %31 : vector<1x128xf32>
    %33 = vector.broadcast %32 : vector<1x128xf32> to vector<256x128xf32>
    %34 = arith.subf %28, %33 : vector<256x128xf32>
    %35 = arith.mulf %34, %34 : vector<256x128xf32>
    %cst_10 = arith.constant dense<0.000000e+00> : vector<128xf32>
    %36 = vector.multi_reduction <add>, %35, %cst_10 [0] : vector<256x128xf32> to vector<128xf32>
    %37 = vector.shape_cast %36 : vector<128xf32> to vector<1x128xf32>
    %cst_11 = arith.constant 2.560000e+02 : f32
    %38 = vector.broadcast %cst_11 : f32 to vector<1x128xf32>
    %39 = arith.divf %37, %38 : vector<1x128xf32>
    %cst_12 = arith.constant 9.99999974E-6 : f32
    %40 = vector.broadcast %cst_12 : f32 to vector<1x128xf32>
    %41 = arith.addf %39, %40 : vector<1x128xf32>
    %42 = math.rsqrt %41 : vector<1x128xf32>
    %43 = vector.broadcast %42 : vector<1x128xf32> to vector<256x128xf32>
    %44 = arith.mulf %34, %43 : vector<256x128xf32>
    %45 = vector.broadcast %7 : vector<1x128xf32> to vector<256x128xf32>
    %46 = arith.mulf %44, %45 : vector<256x128xf32>
    %47 = vector.broadcast %8 : vector<1x128xf32> to vector<256x128xf32>
    %48 = arith.addf %46, %47 : vector<256x128xf32>
    %cst_13 = arith.constant 0.000000e+00 : f32
    %49 = vector.broadcast %cst_13 : f32 to vector<256x128xf32>
    %50 = arith.maximumf %48, %49 : vector<256x128xf32>
    %51 = arith.truncf %50 : vector<256x128xf32> to vector<256x128xbf16>
    %52 = arith.index_cast %arg0 : i32 to index
    %c0_14 = arith.constant 0 : index
    %c0_15 = arith.constant 0 : index
    %53 = vector.load %arg5[%52, %c0_14, %c0_15] : memref<2x128x128xbf16, #tpu.memory_space<vmem>>, vector<1x128x128xbf16>
    %54 = vector.shape_cast %53 : vector<1x128x128xbf16> to vector<128x128xbf16>
    %cst_16 = arith.constant dense<0.000000e+00> : vector<256x128xf32>
    %55 = tpu.matmul %51, %54, %cst_16 {dimension_numbers = #tpu.dot_dimension_numbers<[1], [0], [0], [1], [0, 0, 1, 1], [], []>} : vector<256x128xbf16>, vector<128x128xbf16>, vector<256x128xf32> -> vector<256x128xf32>
    %56 = vector.broadcast %9 : vector<1x128xf32> to vector<256x128xf32>
    %57 = arith.addf %55, %56 : vector<256x128xf32>
    %cst_17 = arith.constant dense<0.000000e+00> : vector<128xf32>
    %58 = vector.multi_reduction <add>, %57, %cst_17 [0] : vector<256x128xf32> to vector<128xf32>
    %59 = vector.shape_cast %58 : vector<128xf32> to vector<1x128xf32>
    %cst_18 = arith.constant 2.560000e+02 : f32
    %60 = vector.broadcast %cst_18 : f32 to vector<1x128xf32>
    %61 = arith.divf %59, %60 : vector<1x128xf32>
    %62 = vector.broadcast %61 : vector<1x128xf32> to vector<256x128xf32>
    %63 = arith.subf %57, %62 : vector<256x128xf32>
    %64 = arith.mulf %63, %63 : vector<256x128xf32>
    %cst_19 = arith.constant dense<0.000000e+00> : vector<128xf32>
    %65 = vector.multi_reduction <add>, %64, %cst_19 [0] : vector<256x128xf32> to vector<128xf32>
    %66 = vector.shape_cast %65 : vector<128xf32> to vector<1x128xf32>
    %cst_20 = arith.constant 2.560000e+02 : f32
    %67 = vector.broadcast %cst_20 : f32 to vector<1x128xf32>
    %68 = arith.divf %66, %67 : vector<1x128xf32>
    %cst_21 = arith.constant 9.99999974E-6 : f32
    %69 = vector.broadcast %cst_21 : f32 to vector<1x128xf32>
    %70 = arith.addf %68, %69 : vector<1x128xf32>
    %71 = math.rsqrt %70 : vector<1x128xf32>
    %72 = vector.broadcast %71 : vector<1x128xf32> to vector<256x128xf32>
    %73 = arith.mulf %63, %72 : vector<256x128xf32>
    %74 = vector.broadcast %10 : vector<1x128xf32> to vector<256x128xf32>
    %75 = arith.mulf %73, %74 : vector<256x128xf32>
    %76 = vector.broadcast %11 : vector<1x128xf32> to vector<256x128xf32>
    %77 = arith.addf %75, %76 : vector<256x128xf32>
    %cst_22 = arith.constant 0.000000e+00 : f32
    %78 = vector.broadcast %cst_22 : f32 to vector<256x128xf32>
    %79 = arith.maximumf %77, %78 : vector<256x128xf32>
    %80 = arith.truncf %79 : vector<256x128xf32> to vector<256x128xbf16>
    %81 = arith.index_cast %arg0 : i32 to index
    %c0_23 = arith.constant 0 : index
    %c0_24 = arith.constant 0 : index
    %82 = vector.load %arg6[%81, %c0_23, %c0_24] : memref<2x128x128xbf16, #tpu.memory_space<vmem>>, vector<1x128x128xbf16>
    %83 = vector.shape_cast %82 : vector<1x128x128xbf16> to vector<128x128xbf16>
    %cst_25 = arith.constant dense<0.000000e+00> : vector<256x128xf32>
    %84 = tpu.matmul %80, %83, %cst_25 {dimension_numbers = #tpu.dot_dimension_numbers<[1], [0], [0], [1], [0, 0, 1, 1], [], []>} : vector<256x128xbf16>, vector<128x128xbf16>, vector<256x128xf32> -> vector<256x128xf32>
    %85 = vector.broadcast %12 : vector<1x128xf32> to vector<256x128xf32>
    %86 = arith.addf %84, %85 : vector<256x128xf32>
    %87 = math.tanh %86 : vector<256x128xf32>
    %88 = vector.extract_strided_slice %87 {offsets = [0, 0], sizes = [128, 128], strides = [1, 1]} : vector<256x128xf32> to vector<128x128xf32>
    %c0_26 = arith.constant 0 : index
    %c0_27 = arith.constant 0 : index
    %c0_28 = arith.constant 0 : index
    %89 = vector.load %arg12[%c0_26, %c0_27, %c0_28] : memref<1x128x128xf32, #tpu.memory_space<vmem>>, vector<1x128x128xf32>
    %90 = vector.shape_cast %89 : vector<1x128x128xf32> to vector<128x128xf32>
    %91 = vector.shape_cast %88 : vector<128x128xf32> to vector<1x128x128xf32>
    tpu.vector_store %arg12[%c0_26, %c0_27, %c0_28], %91 {strides = array<i32>} : memref<1x128x128xf32, #tpu.memory_space<vmem>>, vector<1x128x128xf32>,
    %92 = arith.truncf %87 : vector<256x128xf32> to vector<256x128xbf16>
    %93 = arith.index_cast %arg0 : i32 to index
    %c0_29 = arith.constant 0 : index
    %c0_30 = arith.constant 0 : index
    %94 = vector.load %arg7[%93, %c0_29, %c0_30] : memref<2x128x35xbf16, #tpu.memory_space<vmem>>, vector<1x128x35xbf16>
    %95 = vector.shape_cast %94 : vector<1x128x35xbf16> to vector<128x35xbf16>
    %cst_31 = arith.constant dense<0.000000e+00> : vector<256x35xf32>
    %96 = tpu.matmul %92, %95, %cst_31 {dimension_numbers = #tpu.dot_dimension_numbers<[1], [0], [0], [1], [0, 0, 1, 1], [], []>} : vector<256x128xbf16>, vector<128x35xbf16>, vector<256x35xf32> -> vector<256x35xf32>
    %97 = arith.truncf %2 : vector<2x32xf32> to vector<2x32xbf16>
    %98 = arith.index_cast %arg0 : i32 to index
    %c0_32 = arith.constant 0 : index
    %c0_33 = arith.constant 0 : index
    %99 = vector.load %arg8[%98, %c0_32, %c0_33] : memref<2x32x35xbf16, #tpu.memory_space<vmem>>, vector<1x32x35xbf16>
    %100 = vector.shape_cast %99 : vector<1x32x35xbf16> to vector<32x35xbf16>
    %cst_34 = arith.constant dense<0.000000e+00> : vector<2x35xf32>
    %101 = tpu.matmul %97, %100, %cst_34 {dimension_numbers = #tpu.dot_dimension_numbers<[1], [0], [0], [1], [0, 0, 1, 1], [], []>} : vector<2x32xbf16>, vector<32x35xbf16>, vector<2x35xf32> -> vector<2x35xf32>
    %102 = vector.shape_cast %96 : vector<256x35xf32> to vector<2x128x35xf32>
    %103 = vector.shape_cast %101 : vector<2x35xf32> to vector<2x1x35xf32>
    %104 = vector.broadcast %103 : vector<2x1x35xf32> to vector<2x128x35xf32>
    %105 = arith.addf %102, %104 : vector<2x128x35xf32>
    %106 = vector.shape_cast %105 : vector<2x128x35xf32> to vector<256x35xf32>
    %107 = vector.broadcast %13 : vector<1x35xf32> to vector<256x35xf32>
    %108 = arith.addf %106, %107 : vector<256x35xf32>
    %cst_35 = arith.constant dense<0.000000e+00> : vector<35xf32>
    %109 = vector.multi_reduction <add>, %108, %cst_35 [0] : vector<256x35xf32> to vector<35xf32>
    %110 = vector.shape_cast %109 : vector<35xf32> to vector<1x35xf32>
    %cst_36 = arith.constant 2.560000e+02 : f32
    %111 = vector.broadcast %cst_36 : f32 to vector<1x35xf32>
    %112 = arith.divf %110, %111 : vector<1x35xf32>
    %113 = vector.broadcast %112 : vector<1x35xf32> to vector<256x35xf32>
    %114 = arith.subf %108, %113 : vector<256x35xf32>
    %115 = arith.mulf %114, %114 : vector<256x35xf32>
    %cst_37 = arith.constant dense<0.000000e+00> : vector<35xf32>
    %116 = vector.multi_reduction <add>, %115, %cst_37 [0] : vector<256x35xf32> to vector<35xf32>
    %117 = vector.shape_cast %116 : vector<35xf32> to vector<1x35xf32>
    %cst_38 = arith.constant 2.560000e+02 : f32
    %118 = vector.broadcast %cst_38 : f32 to vector<1x35xf32>
    %119 = arith.divf %117, %118 : vector<1x35xf32>
    %cst_39 = arith.constant 9.99999974E-6 : f32
    %120 = vector.broadcast %cst_39 : f32 to vector<1x35xf32>
    %121 = arith.addf %119, %120 : vector<1x35xf32>
    %122 = math.rsqrt %121 : vector<1x35xf32>
    %123 = vector.broadcast %122 : vector<1x35xf32> to vector<256x35xf32>
    %124 = arith.mulf %114, %123 : vector<256x35xf32>
    %125 = vector.broadcast %14 : vector<1x35xf32> to vector<256x35xf32>
    %126 = arith.mulf %124, %125 : vector<256x35xf32>
    %127 = vector.broadcast %15 : vector<1x35xf32> to vector<256x35xf32>
    %128 = arith.addf %126, %127 : vector<256x35xf32>
    %cst_40 = arith.constant 0.000000e+00 : f32
    %129 = vector.broadcast %cst_40 : f32 to vector<256x35xf32>
    %130 = arith.maximumf %128, %129 : vector<256x35xf32>
    %131 = arith.truncf %130 : vector<256x35xf32> to vector<256x35xbf16>
    %132 = arith.index_cast %arg0 : i32 to index
    %c0_41 = arith.constant 0 : index
    %c0_42 = arith.constant 0 : index
    %133 = vector.load %arg9[%132, %c0_41, %c0_42] : memref<2x35x17xbf16, #tpu.memory_space<vmem>>, vector<1x35x17xbf16>
    %134 = vector.shape_cast %133 : vector<1x35x17xbf16> to vector<35x17xbf16>
    %cst_43 = arith.constant dense<0.000000e+00> : vector<256x17xf32>
    %135 = tpu.matmul %131, %134, %cst_43 {dimension_numbers = #tpu.dot_dimension_numbers<[1], [0], [0], [1], [0, 0, 1, 1], [], []>} : vector<256x35xbf16>, vector<35x17xbf16>, vector<256x17xf32> -> vector<256x17xf32>
    %136 = vector.broadcast %16 : vector<1x17xf32> to vector<256x17xf32>
    %137 = arith.addf %135, %136 : vector<256x17xf32>
    %cst_44 = arith.constant dense<0.000000e+00> : vector<17xf32>
    %138 = vector.multi_reduction <add>, %137, %cst_44 [0] : vector<256x17xf32> to vector<17xf32>
    %139 = vector.shape_cast %138 : vector<17xf32> to vector<1x17xf32>
    %cst_45 = arith.constant 2.560000e+02 : f32
    %140 = vector.broadcast %cst_45 : f32 to vector<1x17xf32>
    %141 = arith.divf %139, %140 : vector<1x17xf32>
    %142 = vector.broadcast %141 : vector<1x17xf32> to vector<256x17xf32>
    %143 = arith.subf %137, %142 : vector<256x17xf32>
    %144 = arith.mulf %143, %143 : vector<256x17xf32>
    %cst_46 = arith.constant dense<0.000000e+00> : vector<17xf32>
    %145 = vector.multi_reduction <add>, %144, %cst_46 [0] : vector<256x17xf32> to vector<17xf32>
    %146 = vector.shape_cast %145 : vector<17xf32> to vector<1x17xf32>
    %cst_47 = arith.constant 2.560000e+02 : f32
    %147 = vector.broadcast %cst_47 : f32 to vector<1x17xf32>
    %148 = arith.divf %146, %147 : vector<1x17xf32>
    %cst_48 = arith.constant 9.99999974E-6 : f32
    %149 = vector.broadcast %cst_48 : f32 to vector<1x17xf32>
    %150 = arith.addf %148, %149 : vector<1x17xf32>
    %151 = math.rsqrt %150 : vector<1x17xf32>
    %152 = vector.broadcast %151 : vector<1x17xf32> to vector<256x17xf32>
    %153 = arith.mulf %143, %152 : vector<256x17xf32>
    %154 = vector.broadcast %17 : vector<1x17xf32> to vector<256x17xf32>
    %155 = arith.mulf %153, %154 : vector<256x17xf32>
    %156 = vector.broadcast %18 : vector<1x17xf32> to vector<256x17xf32>
    %157 = arith.addf %155, %156 : vector<256x17xf32>
    %cst_49 = arith.constant 0.000000e+00 : f32
    %158 = vector.broadcast %cst_49 : f32 to vector<256x17xf32>
    %159 = arith.maximumf %157, %158 : vector<256x17xf32>
    %160 = arith.truncf %159 : vector<256x17xf32> to vector<256x17xbf16>
    %161 = arith.index_cast %arg0 : i32 to index
    %c0_50 = arith.constant 0 : index
    %c0_51 = arith.constant 0 : index
    %162 = vector.load %arg10[%161, %c0_50, %c0_51] : memref<2x17x8xbf16, #tpu.memory_space<vmem>>, vector<1x17x8xbf16>
    %163 = vector.shape_cast %162 : vector<1x17x8xbf16> to vector<17x8xbf16>
    %cst_52 = arith.constant dense<0.000000e+00> : vector<256x8xf32>
    %164 = tpu.matmul %160, %163, %cst_52 {dimension_numbers = #tpu.dot_dimension_numbers<[1], [0], [0], [1], [0, 0, 1, 1], [], []>} : vector<256x17xbf16>, vector<17x8xbf16>, vector<256x8xf32> -> vector<256x8xf32>
    %165 = vector.broadcast %19 : vector<1x8xf32> to vector<256x8xf32>
    %166 = arith.addf %164, %165 : vector<256x8xf32>
    %cst_53 = arith.constant dense<0.000000e+00> : vector<8xf32>
    %167 = vector.multi_reduction <add>, %166, %cst_53 [0] : vector<256x8xf32> to vector<8xf32>
    %168 = vector.shape_cast %167 : vector<8xf32> to vector<1x8xf32>
    %cst_54 = arith.constant 2.560000e+02 : f32
    %169 = vector.broadcast %cst_54 : f32 to vector<1x8xf32>
    %170 = arith.divf %168, %169 : vector<1x8xf32>
    %171 = vector.broadcast %170 : vector<1x8xf32> to vector<256x8xf32>
    %172 = arith.subf %166, %171 : vector<256x8xf32>
    %173 = arith.mulf %172, %172 : vector<256x8xf32>
    %cst_55 = arith.constant dense<0.000000e+00> : vector<8xf32>
    %174 = vector.multi_reduction <add>, %173, %cst_55 [0] : vector<256x8xf32> to vector<8xf32>
    %175 = vector.shape_cast %174 : vector<8xf32> to vector<1x8xf32>
    %cst_56 = arith.constant 2.560000e+02 : f32
    %176 = vector.broadcast %cst_56 : f32 to vector<1x8xf32>
    %177 = arith.divf %175, %176 : vector<1x8xf32>
    %cst_57 = arith.constant 9.99999974E-6 : f32
    %178 = vector.broadcast %cst_57 : f32 to vector<1x8xf32>
    %179 = arith.addf %177, %178 : vector<1x8xf32>
    %180 = math.rsqrt %179 : vector<1x8xf32>
    %181 = vector.broadcast %180 : vector<1x8xf32> to vector<256x8xf32>
    %182 = arith.mulf %172, %181 : vector<256x8xf32>
    %183 = vector.broadcast %20 : vector<1x8xf32> to vector<256x8xf32>
    %184 = arith.mulf %182, %183 : vector<256x8xf32>
    %185 = vector.broadcast %21 : vector<1x8xf32> to vector<256x8xf32>
    %186 = arith.addf %184, %185 : vector<256x8xf32>
    %cst_58 = arith.constant 0.000000e+00 : f32
    %187 = vector.broadcast %cst_58 : f32 to vector<256x8xf32>
    %188 = arith.maximumf %186, %187 : vector<256x8xf32>
    %189 = arith.truncf %188 : vector<256x8xf32> to vector<256x8xbf16>
    %190 = arith.index_cast %arg0 : i32 to index
    %c0_59 = arith.constant 0 : index
    %c0_60 = arith.constant 0 : index
    %191 = vector.load %arg11[%190, %c0_59, %c0_60] : memref<2x8x128xbf16, #tpu.memory_space<vmem>>, vector<1x8x128xbf16>
    %192 = vector.shape_cast %191 : vector<1x8x128xbf16> to vector<8x128xbf16>
    %cst_61 = arith.constant dense<0.000000e+00> : vector<256x128xf32>
    %193 = tpu.matmul %189, %192, %cst_61 {dimension_numbers = #tpu.dot_dimension_numbers<[1], [0], [0], [1], [0, 0, 1, 1], [], []>} : vector<256x8xbf16>, vector<8x128xbf16>, vector<256x128xf32> -> vector<256x128xf32>
    %194 = vector.broadcast %22 : vector<1x128xf32> to vector<256x128xf32>
    %195 = arith.addf %193, %194 : vector<256x128xf32>
    %196 = math.tanh %195 : vector<256x128xf32>
    %c0_62 = arith.constant 0 : index
    %c0_63 = arith.constant 0 : index
    %c0_64 = arith.constant 0 : index
    %197 = vector.load %arg13[%c0_62, %c0_63, %c0_64] : memref<1x256x128xf32, #tpu.memory_space<vmem>>, vector<1x256x128xf32>
    %198 = vector.shape_cast %197 : vector<1x256x128xf32> to vector<256x128xf32>
    %199 = vector.shape_cast %196 : vector<256x128xf32> to vector<1x256x128xf32>
    tpu.vector_store %arg13[%c0_62, %c0_63, %c0_64], %199 {strides = array<i32>} : memref<1x256x128xf32, #tpu.memory_space<vmem>>, vector<1x256x128xf32>,
    return
  }
  func.func @transform_0(%arg0: i32) -> (i32, i32, i32) {
    %c0_i32 = arith.constant 0 : i32
    %c0_i32_0 = arith.constant 0 : i32
    %c0_i32_1 = arith.constant 0 : i32
    return %arg0, %c0_i32, %c0_i32_0 : i32, i32, i32
  }
  func.func @transform_1(%arg0: i32) -> (i32, i32) {
    %c0_i32 = arith.constant 0 : i32
    %c0_i32_0 = arith.constant 0 : i32
    %c0_i32_1 = arith.constant 0 : i32
    return %c0_i32, %c0_i32_0 : i32, i32
  }
  func.func @transform_2(%arg0: i32) -> (i32, i32, i32) {
    %c0_i32 = arith.constant 0 : i32
    %c0_i32_0 = arith.constant 0 : i32
    %c0_i32_1 = arith.constant 0 : i32
    %c0_i32_2 = arith.constant 0 : i32
    return %c0_i32, %c0_i32_0, %c0_i32_1 : i32, i32, i32
  }
  func.func @transform_3(%arg0: i32) -> (i32, i32, i32) {
    %c0_i32 = arith.constant 0 : i32
    %c0_i32_0 = arith.constant 0 : i32
    %c0_i32_1 = arith.constant 0 : i32
    %c0_i32_2 = arith.constant 0 : i32
    return %c0_i32, %c0_i32_0, %c0_i32_1 : i32, i32, i32
  }
  func.func @transform_4(%arg0: i32) -> (i32, i32, i32) {
    %c0_i32 = arith.constant 0 : i32
    %c0_i32_0 = arith.constant 0 : i32
    %c0_i32_1 = arith.constant 0 : i32
    %c0_i32_2 = arith.constant 0 : i32
    return %c0_i32, %c0_i32_0, %c0_i32_1 : i32, i32, i32
  }
  func.func @transform_5(%arg0: i32) -> (i32, i32, i32) {
    %c0_i32 = arith.constant 0 : i32
    %c0_i32_0 = arith.constant 0 : i32
    %c0_i32_1 = arith.constant 0 : i32
    %c0_i32_2 = arith.constant 0 : i32
    return %c0_i32, %c0_i32_0, %c0_i32_1 : i32, i32, i32
  }
  func.func @transform_6(%arg0: i32) -> (i32, i32, i32) {
    %c0_i32 = arith.constant 0 : i32
    %c0_i32_0 = arith.constant 0 : i32
    %c0_i32_1 = arith.constant 0 : i32
    %c0_i32_2 = arith.constant 0 : i32
    return %c0_i32, %c0_i32_0, %c0_i32_1 : i32, i32, i32
  }
  func.func @transform_7(%arg0: i32) -> (i32, i32, i32) {
    %c0_i32 = arith.constant 0 : i32
    %c0_i32_0 = arith.constant 0 : i32
    %c0_i32_1 = arith.constant 0 : i32
    %c0_i32_2 = arith.constant 0 : i32
    return %c0_i32, %c0_i32_0, %c0_i32_1 : i32, i32, i32
  }
  func.func @transform_8(%arg0: i32) -> (i32, i32, i32) {
    %c0_i32 = arith.constant 0 : i32
    %c0_i32_0 = arith.constant 0 : i32
    %c0_i32_1 = arith.constant 0 : i32
    %c0_i32_2 = arith.constant 0 : i32
    return %c0_i32, %c0_i32_0, %c0_i32_1 : i32, i32, i32
  }
  func.func @transform_9(%arg0: i32) -> (i32, i32, i32) {
    %c0_i32 = arith.constant 0 : i32
    %c0_i32_0 = arith.constant 0 : i32
    %c0_i32_1 = arith.constant 0 : i32
    %c0_i32_2 = arith.constant 0 : i32
    return %c0_i32, %c0_i32_0, %c0_i32_1 : i32, i32, i32
  }
  func.func @transform_10(%arg0: i32) -> (i32, i32, i32) {
    %c0_i32 = arith.constant 0 : i32
    %c0_i32_0 = arith.constant 0 : i32
    %c0_i32_1 = arith.constant 0 : i32
    %c0_i32_2 = arith.constant 0 : i32
    return %c0_i32, %c0_i32_0, %c0_i32_1 : i32, i32, i32
  }
  func.func @transform_11(%arg0: i32) -> (i32, i32, i32) {
    %c0_i32 = arith.constant 0 : i32
    %c0_i32_0 = arith.constant 0 : i32
    %c0_i32_1 = arith.constant 0 : i32
    return %arg0, %c0_i32, %c0_i32_0 : i32, i32, i32
  }
  func.func @transform_12(%arg0: i32) -> (i32, i32, i32) {
    %c0_i32 = arith.constant 0 : i32
    %c0_i32_0 = arith.constant 0 : i32
    %c0_i32_1 = arith.constant 0 : i32
    return %arg0, %c0_i32, %c0_i32_0 : i32, i32, i32
  }
}

</mosaic_0001>

<llo_original>
// kernel: tpu_custom_call.1
$region0: #{tpu_custom_call.1}
  #allocation0 [shape = 'u32[]', space=smem, size = 0x4, offset = 0x4, fixed_abs, tag = 'smem constant byte address 0x4 - core index']
  #allocation1 [shape = 'u32[144,128]{1,0:T(1,128)}', space=vmem, size = 0x12000, scoped, tag = 'internal scratch']
  %s0 = inlined_call_operand.hbm [shape: bf16[2,256,128], index: 0, kind: input, shape index: {}]
  %s1 = inlined_call_operand.hbm [shape: f32[2,32], index: 1, kind: input, shape index: {}]
  %s2 = inlined_call_operand.hbm [shape: f32[2,24,128], index: 2, kind: input, shape index: {}]
  %s3 = inlined_call_operand.vmem [shape: bf16[2,128,128], index: 3, kind: input, shape index: {}]
  %s4 = inlined_call_operand.vmem [shape: bf16[2,128,128], index: 4, kind: input, shape index: {}]
  %s5 = inlined_call_operand.hbm [shape: bf16[2,128,128], index: 5, kind: input, shape index: {}]
  %s6 = inlined_call_operand.vmem [shape: bf16[2,128,35], index: 6, kind: input, shape index: {}]
  %s7 = inlined_call_operand.hbm [shape: bf16[2,32,35], index: 7, kind: input, shape index: {}]
  %s8 = inlined_call_operand.vmem [shape: bf16[2,35,17], index: 8, kind: input, shape index: {}]
  %s9 = inlined_call_operand.vmem [shape: bf16[2,17,8], index: 9, kind: input, shape index: {}]
  %s10 = inlined_call_operand.vmem [shape: bf16[2,8,128], index: 10, kind: input, shape index: {}]
  %s11 = inlined_call_operand.hbm [shape: f32[2,128,128], index: 11, kind: output, shape index: {0}]
  %s12 = inlined_call_operand.hbm [shape: f32[2,256,128], index: 12, kind: output, shape index: {1}]
  %13 = xla_tuple %s11, %s12
  %s14 = sld [smem:[#allocation0]]
  $region105: #{tpu_custom_call.1} parent=0
    _
  %s16 = ssub.s32 1, %s14
  %s17 = scalar_select 0, %s16, %s14
  $region1: #{tpu_custom_call.1} parent=0
    #allocation2 [shape = 'u8[131072]{0}', space=vmem, size = 0x20000, scoped, tag = 'input window, operand 0']
    #allocation3 [shape = 's32[2]{0}', space=sflag, size = 0x8, scoped, tag = 'scoped memory for tpu_custom_call.1']
    #allocation4 [shape = 's32[2]{0}', space=sflag, size = 0x8, scoped, tag = 'scoped memory for tpu_custom_call.1']
    #allocation5 [shape = 'u8[1024]{0}', space=vmem, size = 0x400, scoped, tag = 'input window, operand 1, single buffered']
    #allocation6 [shape = 's32[1]{0}', space=sflag, size = 0x4, scoped, tag = 'scoped memory for tpu_custom_call.1']
    #allocation7 [shape = 'u8[24576]{0}', space=vmem, size = 0x6000, scoped, tag = 'input window, operand 2, single buffered']
    #allocation8 [shape = 'u8[65536]{0}', space=vmem, size = 0x10000, scoped, tag = 'input window, operand 5, single buffered']
    #allocation9 [shape = 's32[1]{0}', space=sflag, size = 0x4, scoped, tag = 'scoped memory for tpu_custom_call.1']
    #allocation10 [shape = 'u8[16384]{0}', space=vmem, size = 0x4000, scoped, tag = 'input window, operand 7, single buffered']
    #allocation11 [shape = 'u8[131072]{0}', space=vmem, size = 0x20000, scoped, tag = 'output window, operand 0']
    #allocation12 [shape = 'u8[262144]{0}', space=vmem, size = 0x40000, scoped, tag = 'output window, operand 1']
    #allocation13 [shape = 's32[2]{0}', space=sflag, size = 0x8, scoped, tag = 'scoped memory for tpu_custom_call.1']
    %18 = vsyncpa [#allocation3], 0
    %s19 = scalar_lea.sflag [#allocation3], 1
    %20 = vsyncpa %s19, 0
    %21 = vsyncpa [#allocation6], 0
    %22 = vsyncpa [#allocation9], 0
    %23 = vsyncpa [#allocation4], 0
    %s24 = scalar_lea.sflag [#allocation4], 1
    %25 = vsyncpa %s24, 0
    %26 = vsyncpa [#allocation13], 0
    %s27 = scalar_lea.sflag [#allocation13], 1
    %28 = vsyncpa %s27, 0
    loop: start=0, step=1, limit=4
    $region2: #{tpu_custom_call.1} parent=1 // loop_pre_header
      _
    $region3: #{tpu_custom_call.1} parent=1 // loop_header
      %s30 = sphi 0, %s34
      %p31 = scmp.ge.s32.totalorder %s30, 4
      %s40 = sphi 0, %s42
      %s43 = sphi 0, %s40
      %s44 = sphi 0, %s43
      %s60 = sphi 0, %s44
      %s64 = sphi 0, %s64
      %s66 = sphi 0, %s64
      %s67 = sphi 0, %s66
      %s81 = sphi 0, %s67
      %s85 = sphi 0, %s85
      %s87 = sphi 0, %s85
      %s88 = sphi 0, %s87
      %s102 = sphi 0, %s88
      %s106 = sphi 0, %s106
      %s108 = sphi 0, %s106
      %s109 = sphi 0, %s108
      %s123 = sphi 0, %s109
      %s127 = sphi 0, %s127
      %s129 = sphi 0, %s127
      %s130 = sphi 0, %s129
      %s144 = sphi 0, %s130
      %s148 = sphi 0, %s148
      %s150 = sphi 0, %s148
      %s151 = sphi 0, %s150
      %s165 = sphi 0, %s151
      %s169 = sphi 0, %s169
      %s171 = sphi 0, %s169
      %s172 = sphi 0, %s171
      %s186 = sphi 0, %s172
      %s190 = sphi 0, %s190
      %s192 = sphi 0, %s190
      %s193 = sphi 0, %s192
      %s207 = sphi 0, %s193
      %s211 = sphi 0, %s211
      %s213 = sphi 0, %s211
      %s214 = sphi 0, %s213
      %s228 = sphi 0, %s214
      %s232 = sphi 0, %s232
      %s234 = sphi 0, %s232
      %s235 = sphi 0, %s234
      %s249 = sphi 0, %s235
      %s253 = sphi 0, %s253
      %s255 = sphi 0, %s253
      %s256 = sphi 0, %s255
      %s270 = sphi 0, %s256
      %s276 = sphi 0, %s278
      %s279 = sphi 0, %s276
      %s280 = sphi 0, %s279
      %s296 = sphi 0, %s280
      %s302 = sphi 0, %s304
      %s305 = sphi 0, %s302
      %s306 = sphi 0, %s305
      %s322 = sphi 0, %s306
    $region4: #{tpu_custom_call.1} parent=1 // loop_header_branch
      %33 = sbr.rel (%p31) target = $region8
    $region5: #{tpu_custom_call.1} parent=1 // loop_body
      %s35 = ssub.s32 %s30, 1
      %s36 = ssub.s32 %s30, 2
      %s37 = sadd.s32 %s30, 1
      %s38 = ssub.s32 %s30, %s37
      %p39 = scmp.eq.s32.totalorder %s38, 0
      %s41 = sadd.s32 %s40, 1
      %s42 = scalar_select %p39, %s40, %s41
      %p45 = pneg %p39
      %p46 = scmp.eq.s32.totalorder %s30, 1
      %p47 = por %p45, %p46
      %p48 = scmp.ne.s32.totalorder %s40, %s43
      %p49 = scmp.eq.s32.totalorder %s30, 0
      %p50 = por %p48, %p49
      %p51 = scmp.ne.s32.totalorder %s40, %s43
      %p52 = scmp.eq.s32.totalorder %s35, 1
      %p53 = por %p51, %p52
      %p54 = scmp.ne.s32.totalorder %s43, %s44
      %p55 = scmp.eq.s32.totalorder %s35, 0
      %p56 = por %p54, %p55
      %p57 = scmp.ne.s32.totalorder %s43, %s44
      %p58 = scmp.eq.s32.totalorder %s36, 1
      %p59 = por %p57, %p58
      %p61 = scmp.ne.s32.totalorder %s44, %s60
      %p62 = scmp.eq.s32.totalorder %s36, 0
      %p63 = por %p61, %p62
      %s65 = sadd.s32 %s64, 1
      %p68 = scmp.eq.s32.totalorder %s30, 1
      %p69 = scmp.ne.s32.totalorder %s64, %s66
      %p70 = scmp.eq.s32.totalorder %s30, 0
      %p71 = por %p69, %p70
      %p72 = scmp.ne.s32.totalorder %s64, %s66
      %p73 = scmp.eq.s32.totalorder %s35, 1
      %p74 = por %p72, %p73
      %p75 = scmp.ne.s32.totalorder %s66, %s67
      %p76 = scmp.eq.s32.totalorder %s35, 0
      %p77 = por %p75, %p76
      %p78 = scmp.ne.s32.totalorder %s66, %s67
      %p79 = scmp.eq.s32.totalorder %s36, 1
      %p80 = por %p78, %p79
      %p82 = scmp.ne.s32.totalorder %s67, %s81
      %p83 = scmp.eq.s32.totalorder %s36, 0
      %p84 = por %p82, %p83
      %s86 = sadd.s32 %s85, 1
      %p89 = scmp.eq.s32.totalorder %s30, 1
      %p90 = scmp.ne.s32.totalorder %s85, %s87
      %p91 = scmp.eq.s32.totalorder %s30, 0
      %p92 = por %p90, %p91
      %p93 = scmp.ne.s32.totalorder %s85, %s87
      %p94 = scmp.eq.s32.totalorder %s35, 1
      %p95 = por %p93, %p94
      %p96 = scmp.ne.s32.totalorder %s87, %s88
      %p97 = scmp.eq.s32.totalorder %s35, 0
      %p98 = por %p96, %p97
      %p99 = scmp.ne.s32.totalorder %s87, %s88
      %p100 = scmp.eq.s32.totalorder %s36, 1
      %p101 = por %p99, %p100
      %p103 = scmp.ne.s32.totalorder %s88, %s102
      %p104 = scmp.eq.s32.totalorder %s36, 0
      %p105 = por %p103, %p104
      %s107 = sadd.s32 %s106, 1
      %p110 = scmp.eq.s32.totalorder %s30, 1
      %p111 = scmp.ne.s32.totalorder %s106, %s108
      %p112 = scmp.eq.s32.totalorder %s30, 0
      %p113 = por %p111, %p112
      %p114 = scmp.ne.s32.totalorder %s106, %s108
      %p115 = scmp.eq.s32.totalorder %s35, 1
      %p116 = por %p114, %p115
      %p117 = scmp.ne.s32.totalorder %s108, %s109
      %p118 = scmp.eq.s32.totalorder %s35, 0
      %p119 = por %p117, %p118
      %p120 = scmp.ne.s32.totalorder %s108, %s109
      %p121 = scmp.eq.s32.totalorder %s36, 1
      %p122 = por %p120, %p121
      %p124 = scmp.ne.s32.totalorder %s109, %s123
      %p125 = scmp.eq.s32.totalorder %s36, 0
      %p126 = por %p124, %p125
      %s128 = sadd.s32 %s127, 1
      %p131 = scmp.eq.s32.totalorder %s30, 1
      %p132 = scmp.ne.s32.totalorder %s127, %s129
      %p133 = scmp.eq.s32.totalorder %s30, 0
      %p134 = por %p132, %p133
      %p135 = scmp.ne.s32.totalorder %s127, %s129
      %p136 = scmp.eq.s32.totalorder %s35, 1
      %p137 = por %p135, %p136
      %p138 = scmp.ne.s32.totalorder %s129, %s130
      %p139 = scmp.eq.s32.totalorder %s35, 0
      %p140 = por %p138, %p139
      %p141 = scmp.ne.s32.totalorder %s129, %s130
      %p142 = scmp.eq.s32.totalorder %s36, 1
      %p143 = por %p141, %p142
      %p145 = scmp.ne.s32.totalorder %s130, %s144
      %p146 = scmp.eq.s32.totalorder %s36, 0
      %p147 = por %p145, %p146
      %s149 = sadd.s32 %s148, 1
      %p152 = scmp.eq.s32.totalorder %s30, 1
      %p153 = scmp.ne.s32.totalorder %s148, %s150
      %p154 = scmp.eq.s32.totalorder %s30, 0
      %p155 = por %p153, %p154
      %p156 = scmp.ne.s32.totalorder %s148, %s150
      %p157 = scmp.eq.s32.totalorder %s35, 1
      %p158 = por %p156, %p157
      %p159 = scmp.ne.s32.totalorder %s150, %s151
      %p160 = scmp.eq.s32.totalorder %s35, 0
      %p161 = por %p159, %p160
      %p162 = scmp.ne.s32.totalorder %s150, %s151
      %p163 = scmp.eq.s32.totalorder %s36, 1
      %p164 = por %p162, %p163
      %p166 = scmp.ne.s32.totalorder %s151, %s165
      %p167 = scmp.eq.s32.totalorder %s36, 0
      %p168 = por %p166, %p167
      %s170 = sadd.s32 %s169, 1
      %p173 = scmp.eq.s32.totalorder %s30, 1
      %p174 = scmp.ne.s32.totalorder %s169, %s171
      %p175 = scmp.eq.s32.totalorder %s30, 0
      %p176 = por %p174, %p175
      %p177 = scmp.ne.s32.totalorder %s169, %s171
      %p178 = scmp.eq.s32.totalorder %s35, 1
      %p179 = por %p177, %p178
      %p180 = scmp.ne.s32.totalorder %s171, %s172
      %p181 = scmp.eq.s32.totalorder %s35, 0
      %p182 = por %p180, %p181
      %p183 = scmp.ne.s32.totalorder %s171, %s172
      %p184 = scmp.eq.s32.totalorder %s36, 1
      %p185 = por %p183, %p184
      %p187 = scmp.ne.s32.totalorder %s172, %s186
      %p188 = scmp.eq.s32.totalorder %s36, 0
      %p189 = por %p187, %p188
      %s191 = sadd.s32 %s190, 1
      %p194 = scmp.eq.s32.totalorder %s30, 1
      %p195 = scmp.ne.s32.totalorder %s190, %s192
      %p196 = scmp.eq.s32.totalorder %s30, 0
      %p197 = por %p195, %p196
      %p198 = scmp.ne.s32.totalorder %s190, %s192
      %p199 = scmp.eq.s32.totalorder %s35, 1
      %p200 = por %p198, %p199
      %p201 = scmp.ne.s32.totalorder %s192, %s193
      %p202 = scmp.eq.s32.totalorder %s35, 0
      %p203 = por %p201, %p202
      %p204 = scmp.ne.s32.totalorder %s192, %s193
      %p205 = scmp.eq.s32.totalorder %s36, 1
      %p206 = por %p204, %p205
      %p208 = scmp.ne.s32.totalorder %s193, %s207
      %p209 = scmp.eq.s32.totalorder %s36, 0
      %p210 = por %p208, %p209
      %s212 = sadd.s32 %s211, 1
      %p215 = scmp.eq.s32.totalorder %s30, 1
      %p216 = scmp.ne.s32.totalorder %s211, %s213
      %p217 = scmp.eq.s32.totalorder %s30, 0
      %p218 = por %p216, %p217
      %p219 = scmp.ne.s32.totalorder %s211, %s213
      %p220 = scmp.eq.s32.totalorder %s35, 1
      %p221 = por %p219, %p220
      %p222 = scmp.ne.s32.totalorder %s213, %s214
      %p223 = scmp.eq.s32.totalorder %s35, 0
      %p224 = por %p222, %p223
      %p225 = scmp.ne.s32.totalorder %s213, %s214
      %p226 = scmp.eq.s32.totalorder %s36, 1
      %p227 = por %p225, %p226
      %p229 = scmp.ne.s32.totalorder %s214, %s228
      %p230 = scmp.eq.s32.totalorder %s36, 0
      %p231 = por %p229, %p230
      %s233 = sadd.s32 %s232, 1
      %p236 = scmp.eq.s32.totalorder %s30, 1
      %p237 = scmp.ne.s32.totalorder %s232, %s234
      %p238 = scmp.eq.s32.totalorder %s30, 0
      %p239 = por %p237, %p238
      %p240 = scmp.ne.s32.totalorder %s232, %s234
      %p241 = scmp.eq.s32.totalorder %s35, 1
      %p242 = por %p240, %p241
      %p243 = scmp.ne.s32.totalorder %s234, %s235
      %p244 = scmp.eq.s32.totalorder %s35, 0
      %p245 = por %p243, %p244
      %p246 = scmp.ne.s32.totalorder %s234, %s235
      %p247 = scmp.eq.s32.totalorder %s36, 1
      %p248 = por %p246, %p247
      %p250 = scmp.ne.s32.totalorder %s235, %s249
      %p251 = scmp.eq.s32.totalorder %s36, 0
      %p252 = por %p250, %p251
      %s254 = sadd.s32 %s253, 1
      %p257 = scmp.eq.s32.totalorder %s30, 1
      %p258 = scmp.ne.s32.totalorder %s253, %s255
      %p259 = scmp.eq.s32.totalorder %s30, 0
      %p260 = por %p258, %p259
      %p261 = scmp.ne.s32.totalorder %s253, %s255
      %p262 = scmp.eq.s32.totalorder %s35, 1
      %p263 = por %p261, %p262
      %p264 = scmp.ne.s32.totalorder %s255, %s256
      %p265 = scmp.eq.s32.totalorder %s35, 0
      %p266 = por %p264, %p265
      %p267 = scmp.ne.s32.totalorder %s255, %s256
      %p268 = scmp.eq.s32.totalorder %s36, 1
      %p269 = por %p267, %p268
      %p271 = scmp.ne.s32.totalorder %s256, %s270
      %p272 = scmp.eq.s32.totalorder %s36, 0
      %p273 = por %p271, %p272
      %s274 = ssub.s32 %s30, %s37
      %p275 = scmp.eq.s32.totalorder %s274, 0
      %s277 = sadd.s32 %s276, 1
      %s278 = scalar_select %p275, %s276, %s277
      %p281 = pneg %p275
      %p282 = scmp.eq.s32.totalorder %s30, 1
      %p283 = por %p281, %p282
      %p284 = scmp.ne.s32.totalorder %s276, %s279
      %p285 = scmp.eq.s32.totalorder %s30, 0
      %p286 = por %p284, %p285
      %p287 = scmp.ne.s32.totalorder %s276, %s279
      %p288 = scmp.eq.s32.totalorder %s35, 1
      %p289 = por %p287, %p288
      %p290 = scmp.ne.s32.totalorder %s279, %s280
      %p291 = scmp.eq.s32.totalorder %s35, 0
      %p292 = por %p290, %p291
      %p293 = scmp.ne.s32.totalorder %s279, %s280
      %p294 = scmp.eq.s32.totalorder %s36, 1
      %p295 = por %p293, %p294
      %p297 = scmp.ne.s32.totalorder %s280, %s296
      %p298 = scmp.eq.s32.totalorder %s36, 0
      %p299 = por %p297, %p298
      %s300 = ssub.s32 %s30, %s37
      %p301 = scmp.eq.s32.totalorder %s300, 0
      %s303 = sadd.s32 %s302, 1
      %s304 = scalar_select %p301, %s302, %s303
      %p307 = pneg %p301
      %p308 = scmp.eq.s32.totalorder %s30, 1
      %p309 = por %p307, %p308
      %p310 = scmp.ne.s32.totalorder %s302, %s305
      %p311 = scmp.eq.s32.totalorder %s30, 0
      %p312 = por %p310, %p311
      %p313 = scmp.ne.s32.totalorder %s302, %s305
      %p314 = scmp.eq.s32.totalorder %s35, 1
      %p315 = por %p313, %p314
      %p316 = scmp.ne.s32.totalorder %s305, %s306
      %p317 = scmp.eq.s32.totalorder %s35, 0
      %p318 = por %p316, %p317
      %p319 = scmp.ne.s32.totalorder %s305, %s306
      %p320 = scmp.eq.s32.totalorder %s36, 1
      %p321 = por %p319, %p320
      %p323 = scmp.ne.s32.totalorder %s306, %s322
      %p324 = scmp.eq.s32.totalorder %s36, 0
      %p325 = por %p323, %p324
      %p326 = scmp.le.s32.totalorder 1, %s30
      %p327 = scmp.lt.s32.totalorder %s30, 3
      %p328 = pnand %p326, %p327
      %p329 = pneg %p328
      // Predicated region
      $region9: #{tpu_custom_call.1} parent=5 // pred_check
        _
      $region10: #{tpu_custom_call.1} parent=5 // pred_check_branch
        %331 = sbr.rel (%p328) target = $region12
      $region11: #{tpu_custom_call.1} parent=5 // pred_region
        %s332 = ssub.s32 %s30, 1
        // Predicated region
        $region13: #{tpu_custom_call.1} parent=11 // pred_check
          %p333 = pneg %p77
        $region14: #{tpu_custom_call.1} parent=11 // pred_check_branch
          %335 = sbr.rel (%p333) target = $region16
        $region15: #{tpu_custom_call.1} parent=11 // pred_region
          %s337 = ssub.s32 32, 32
          %338 = vsyncadd [#allocation6], %s337
          %s340 = sshll.u32 [#allocation5], 4
          %s341 = int_to_ptr.vmem [resolvable:$true] %s340
          %343 = dma.hbm_to_vmem [thread:$0]  %s1, 32, %s341, [#allocation6]
        $region16: #{tpu_custom_call.1} parent=11 // pred_fallthru
          _
        // Predicated region
        $region17: #{tpu_custom_call.1} parent=11 // pred_check
          %p344 = pneg %p98
        $region18: #{tpu_custom_call.1} parent=11 // pred_check_branch
          %346 = sbr.rel (%p344) target = $region20
        $region19: #{tpu_custom_call.1} parent=11 // pred_region
          %s348 = ssub.s32 768, 768
          %349 = vsyncadd [#allocation6], %s348
          %s350 = sshll.u32 [#allocation7], 4
          %s351 = int_to_ptr.vmem [resolvable:$true] %s350
          %356 = dma.hbm_to_vmem [thread:$0]  %s2, 768, %s351, [#allocation6], 128, 128, 8
        $region20: #{tpu_custom_call.1} parent=11 // pred_fallthru
          _
        // Predicated region
        $region21: #{tpu_custom_call.1} parent=11 // pred_check
          %p357 = pneg %p119
        $region22: #{tpu_custom_call.1} parent=11 // pred_check_branch
          %359 = sbr.rel (%p357) target = $region24
        $region23: #{tpu_custom_call.1} parent=11 // pred_region
          _
        $region24: #{tpu_custom_call.1} parent=11 // pred_fallthru
          _
        // Predicated region
        $region25: #{tpu_custom_call.1} parent=11 // pred_check
          %p360 = pneg %p140
        $region26: #{tpu_custom_call.1} parent=11 // pred_check_branch
          %362 = sbr.rel (%p360) target = $region28
        $region27: #{tpu_custom_call.1} parent=11 // pred_region
          _
        $region28: #{tpu_custom_call.1} parent=11 // pred_fallthru
          _
        // Predicated region
        $region29: #{tpu_custom_call.1} parent=11 // pred_check
          %p363 = pneg %p161
        $region30: #{tpu_custom_call.1} parent=11 // pred_check_branch
          %365 = sbr.rel (%p363) target = $region32
        $region31: #{tpu_custom_call.1} parent=11 // pred_region
          %s367 = ssub.s32 2048, 2048
          %368 = vsyncadd [#allocation9], %s367
          %s369 = sshll.u32 [#allocation8], 4
          %s370 = int_to_ptr.vmem [resolvable:$true] %s369
          %375 = dma.hbm_to_vmem [thread:$0]  %s5, 2048, %s370, [#allocation9], 64, 64, 4
        $region32: #{tpu_custom_call.1} parent=11 // pred_fallthru
          _
        // Predicated region
        $region33: #{tpu_custom_call.1} parent=11 // pred_check
          %p376 = pneg %p182
        $region34: #{tpu_custom_call.1} parent=11 // pred_check_branch
          %378 = sbr.rel (%p376) target = $region36
        $region35: #{tpu_custom_call.1} parent=11 // pred_region
          _
        $region36: #{tpu_custom_call.1} parent=11 // pred_fallthru
          _
        // Predicated region
        $region37: #{tpu_custom_call.1} parent=11 // pred_check
          %p379 = pneg %p203
        $region38: #{tpu_custom_call.1} parent=11 // pred_check_branch
          %381 = sbr.rel (%p379) target = $region40
        $region39: #{tpu_custom_call.1} parent=11 // pred_region
          %s383 = ssub.s32 512, 512
          %384 = vsyncadd [#allocation9], %s383
          %s385 = sshll.u32 [#allocation10], 4
          %s386 = int_to_ptr.vmem [resolvable:$true] %s385
          %391 = dma.hbm_to_vmem [thread:$0]  %s7, 512, %s386, [#allocation9], 64, 64, 4
        $region40: #{tpu_custom_call.1} parent=11 // pred_fallthru
          _
        // Predicated region
        $region41: #{tpu_custom_call.1} parent=11 // pred_check
          %p392 = pneg %p224
        $region42: #{tpu_custom_call.1} parent=11 // pred_check_branch
          %394 = sbr.rel (%p392) target = $region44
        $region43: #{tpu_custom_call.1} parent=11 // pred_region
          _
        $region44: #{tpu_custom_call.1} parent=11 // pred_fallthru
          _
        // Predicated region
        $region45: #{tpu_custom_call.1} parent=11 // pred_check
          %p395 = pneg %p245
        $region46: #{tpu_custom_call.1} parent=11 // pred_check_branch
          %397 = sbr.rel (%p395) target = $region48
        $region47: #{tpu_custom_call.1} parent=11 // pred_region
          _
        $region48: #{tpu_custom_call.1} parent=11 // pred_fallthru
          _
        // Predicated region
        $region49: #{tpu_custom_call.1} parent=11 // pred_check
          %p398 = pneg %p266
        $region50: #{tpu_custom_call.1} parent=11 // pred_check_branch
          %400 = sbr.rel (%p398) target = $region52
        $region51: #{tpu_custom_call.1} parent=11 // pred_region
          _
        $region52: #{tpu_custom_call.1} parent=11 // pred_fallthru
          _
      $region12: #{tpu_custom_call.1} parent=5 // pred_fallthru
        _
      %p401 = scmp.lt.s32.totalorder %s30, 2
      // Predicated region
      $region53: #{tpu_custom_call.1} parent=5 // pred_check
        %p402 = pneg %p401
      $region54: #{tpu_custom_call.1} parent=5 // pred_check_branch
        %404 = sbr.rel (%p402) target = $region56
      $region55: #{tpu_custom_call.1} parent=5 // pred_region
        // Predicated region
        $region57: #{tpu_custom_call.1} parent=55 // pred_check
          %p405 = pneg %p50
        $region58: #{tpu_custom_call.1} parent=55 // pred_check_branch
          %407 = sbr.rel (%p405) target = $region60
        $region59: #{tpu_custom_call.1} parent=55 // pred_region
          %s408 = sand.u32 %s40, 1
          %s409 = scalar_lea.sflag [#allocation3], %s408
          %s410 = sand.u32 %s40, 1
          %s411 = smul.addr %s410, 128
          %s412 = scalar_lea.vmem [#allocation2], %s411
          %s414 = ssub.s32 2048, 2048
          %415 = vsyncadd %s409, %s414
          %s416 = smul.addr %s30, 32
          %s417 = smul.addr %s416, 64
          %s418 = scalar_lea.hbm %s0, %s417
          %s419 = sshll.u32 %s412, 4
          %s420 = int_to_ptr.vmem [resolvable:$true] %s419
          %425 = dma.hbm_to_vmem [thread:$0]  %s418, 2048, %s420, %s409, 64, 64, 4
        $region60: #{tpu_custom_call.1} parent=55 // pred_fallthru
          _
      $region56: #{tpu_custom_call.1} parent=5 // pred_fallthru
        _
      %p426 = scmp.le.s32.totalorder 1, %s30
      %p427 = scmp.lt.s32.totalorder %s30, 3
      %p428 = pnand %p426, %p427
      %p429 = pneg %p428
      // Predicated region
      $region61: #{tpu_custom_call.1} parent=5 // pred_check
        _
      $region62: #{tpu_custom_call.1} parent=5 // pred_check_branch
        %431 = sbr.rel (%p428) target = $region64
      $region63: #{tpu_custom_call.1} parent=5 // pred_region
        %s432 = ssub.s32 %s30, 1
        %s433 = sand.u32 %s43, 1
        %s434 = scalar_lea.sflag [#allocation3], %s433
        %s435 = sand.u32 %s43, 1
        %s436 = smul.addr %s435, 128
        %s437 = scalar_lea.vmem [#allocation2], %s436
        // Predicated region
        $region65: #{tpu_custom_call.1} parent=63 // pred_check
          %p438 = pneg %p56
        $region66: #{tpu_custom_call.1} parent=63 // pred_check_branch
          %440 = sbr.rel (%p438) target = $region68
        $region67: #{tpu_custom_call.1} parent=63 // pred_region
          %441 = dma.done %s434, 2048
        $region68: #{tpu_custom_call.1} parent=63 // pred_fallthru
          _
        // Predicated region
        $region69: #{tpu_custom_call.1} parent=63 // pred_check
          %p442 = pneg %p77
        $region70: #{tpu_custom_call.1} parent=63 // pred_check_branch
          %444 = sbr.rel (%p442) target = $region72
        $region71: #{tpu_custom_call.1} parent=63 // pred_region
          %445 = dma.done [#allocation6], 32
        $region72: #{tpu_custom_call.1} parent=63 // pred_fallthru
          _
        // Predicated region
        $region73: #{tpu_custom_call.1} parent=63 // pred_check
          %p446 = pneg %p98
        $region74: #{tpu_custom_call.1} parent=63 // pred_check_branch
          %448 = sbr.rel (%p446) target = $region76
        $region75: #{tpu_custom_call.1} parent=63 // pred_region
          %449 = dma.done [#allocation6], 768
        $region76: #{tpu_custom_call.1} parent=63 // pred_fallthru
          _
        // Predicated region
        $region77: #{tpu_custom_call.1} parent=63 // pred_check
          %p450 = pneg %p161
        $region78: #{tpu_custom_call.1} parent=63 // pred_check_branch
          %452 = sbr.rel (%p450) target = $region80
        $region79: #{tpu_custom_call.1} parent=63 // pred_region
          %453 = dma.done [#allocation9], 2048
        $region80: #{tpu_custom_call.1} parent=63 // pred_fallthru
          _
        // Predicated region
        $region81: #{tpu_custom_call.1} parent=63 // pred_check
          %p454 = pneg %p203
        $region82: #{tpu_custom_call.1} parent=63 // pred_check_branch
          %456 = sbr.rel (%p454) target = $region84
        $region83: #{tpu_custom_call.1} parent=63 // pred_region
          %457 = dma.done [#allocation9], 512
        $region84: #{tpu_custom_call.1} parent=63 // pred_fallthru
          _
        %s458 = sand.u32 %s43, 1
        %s459 = scalar_lea.sflag [#allocation3], %s458
        %s460 = sand.u32 %s43, 1
        %s461 = smul.addr %s460, 128
        %s462 = scalar_lea.vmem [#allocation2], %s461
        %p463 = pneg %p56
        %p464 = pneg %p53
        %p465 = pneg %p77
        %p466 = pneg %p74
        %p467 = pneg %p98
        %p468 = pneg %p95
        %p469 = pneg %p119
        %p470 = pneg %p116
        %p471 = pneg %p140
        %p472 = pneg %p137
        %p473 = pneg %p161
        %p474 = pneg %p158
        %p475 = pneg %p182
        %p476 = pneg %p179
        %p477 = pneg %p203
        %p478 = pneg %p200
        %p479 = pneg %p224
        %p480 = pneg %p221
        %p481 = pneg %p245
        %p482 = pneg %p242
        %p483 = pneg %p266
        %p484 = pneg %p263
        %p485 = pneg %p292
        %p486 = pneg %p289
        %s487 = sand.u32 %s279, 1
        %s488 = scalar_lea.sflag [#allocation4], %s487
        %s489 = sand.u32 %s279, 1
        %s490 = smul.addr %s489, 128
        %s491 = scalar_lea.vmem [#allocation11], %s490
        %p492 = pneg %p318
        %p493 = pneg %p315
        %s494 = sand.u32 %s305, 1
        %s495 = scalar_lea.sflag [#allocation13], %s494
        %s496 = sand.u32 %s305, 1
        %s497 = smul.addr %s496, 256
        %s498 = scalar_lea.vmem [#allocation12], %s497
        %v500 = vld [vmem:[%s437] sm:$0xf]
        %v501 = vld [vmem:[%s437 + $0x4] sm:$0xf]
        %v502 = vld [vmem:[%s437 + $0x8] sm:$0xf]
        %v503 = vld [vmem:[%s437 + $0xc] sm:$0xf]
        %v504 = vld [vmem:[%s437 + $0x10] sm:$0xf]
        %v505 = vld [vmem:[%s437 + $0x14] sm:$0xf]
        %v506 = vld [vmem:[%s437 + $0x18] sm:$0xf]
        %v507 = vld [vmem:[%s437 + $0x1c] sm:$0xf]
        %v508 = vld [vmem:[%s437 + $0x20] sm:$0xf]
        %v509 = vld [vmem:[%s437 + $0x24] sm:$0xf]
        %v510 = vld [vmem:[%s437 + $0x28] sm:$0xf]
        %v511 = vld [vmem:[%s437 + $0x2c] sm:$0xf]
        %v512 = vld [vmem:[%s437 + $0x30] sm:$0xf]
        %v513 = vld [vmem:[%s437 + $0x34] sm:$0xf]
        %v514 = vld [vmem:[%s437 + $0x38] sm:$0xf]
        %v515 = vld [vmem:[%s437 + $0x3c] sm:$0xf]
        %v516 = vld [vmem:[%s437 + $0x40] sm:$0xf]
        %v517 = vld [vmem:[%s437 + $0x44] sm:$0xf]
        %v518 = vld [vmem:[%s437 + $0x48] sm:$0xf]
        %v519 = vld [vmem:[%s437 + $0x4c] sm:$0xf]
        %v520 = vld [vmem:[%s437 + $0x50] sm:$0xf]
        %v521 = vld [vmem:[%s437 + $0x54] sm:$0xf]
        %v522 = vld [vmem:[%s437 + $0x58] sm:$0xf]
        %v523 = vld [vmem:[%s437 + $0x5c] sm:$0xf]
        %v524 = vld [vmem:[%s437 + $0x60] sm:$0xf]
        %v525 = vld [vmem:[%s437 + $0x64] sm:$0xf]
        %v526 = vld [vmem:[%s437 + $0x68] sm:$0xf]
        %v527 = vld [vmem:[%s437 + $0x6c] sm:$0xf]
        %v528 = vld [vmem:[%s437 + $0x70] sm:$0xf]
        %v529 = vld [vmem:[%s437 + $0x74] sm:$0xf]
        %v530 = vld [vmem:[%s437 + $0x78] sm:$0xf]
        %v531 = vld [vmem:[%s437 + $0x7c] sm:$0xf]
        %v532 = vld [vmem:[#allocation5] sm:$0x3]
        %s533 = smul.u32 %s35, 24
        %s534 = scalar_lea.vmem [#allocation7], %s533
        %v535 = vld [vmem:[%s534] sm:$0xff]
        %v536 = vld [vmem:[%s534 + $0x8] sm:$0xff]
        %v537 = vld [vmem:[%s534 + $0x10] sm:$0xff]
        %s538 = smul.u32 %s35, 16
        %s539 = smul.addr %s538, 4
        %s540 = scalar_lea.vmem %s3, %s539
        %v541 = vld [vmem:[%s540] sm:$0xf]
        %v542 = vld [vmem:[%s540 + $0x4] sm:$0xf]
        %v543 = vld [vmem:[%s540 + $0x8] sm:$0xf]
        %v544 = vld [vmem:[%s540 + $0xc] sm:$0xf]
        %v545 = vld [vmem:[%s540 + $0x10] sm:$0xf]
        %v546 = vld [vmem:[%s540 + $0x14] sm:$0xf]
        %v547 = vld [vmem:[%s540 + $0x18] sm:$0xf]
        %v548 = vld [vmem:[%s540 + $0x1c] sm:$0xf]
        %v549 = vld [vmem:[%s540 + $0x20] sm:$0xf]
        %v550 = vld [vmem:[%s540 + $0x24] sm:$0xf]
        %v551 = vld [vmem:[%s540 + $0x28] sm:$0xf]
        %v552 = vld [vmem:[%s540 + $0x2c] sm:$0xf]
        %v553 = vld [vmem:[%s540 + $0x30] sm:$0xf]
        %v554 = vld [vmem:[%s540 + $0x34] sm:$0xf]
        %v555 = vld [vmem:[%s540 + $0x38] sm:$0xf]
        %v556 = vld [vmem:[%s540 + $0x3c] sm:$0xf]
        %v557 = vlaneseq
        %v558 = vshrl.u32 %v557, 7
        %v559 = vsub.s32 0, %v558
        %v560 = vrot.slane %v535, %v559
        %v593 = vunpack.c.l.b16 %v500
        %v594 = vunpack.c.l.b16 %v501
        %v595 = vunpack.c.l.b16 %v502
        %v596 = vunpack.c.l.b16 %v503
        %v597 = vunpack.c.l.b16 %v504
        %v598 = vunpack.c.l.b16 %v505
        %v599 = vunpack.c.l.b16 %v506
        %v600 = vunpack.c.l.b16 %v507
        %v601 = vunpack.c.l.b16 %v508
        %v602 = vunpack.c.l.b16 %v509
        %v603 = vunpack.c.l.b16 %v510
        %v604 = vunpack.c.l.b16 %v511
        %v605 = vunpack.c.l.b16 %v512
        %v606 = vunpack.c.l.b16 %v513
        %v607 = vunpack.c.l.b16 %v514
        %v608 = vunpack.c.l.b16 %v515
        %v609 = vunpack.c.l.b16 %v516
        %v610 = vunpack.c.l.b16 %v517
        %v611 = vunpack.c.l.b16 %v518
        %v612 = vunpack.c.l.b16 %v519
        %v613 = vunpack.c.l.b16 %v520
        %v614 = vunpack.c.l.b16 %v521
        %v615 = vunpack.c.l.b16 %v522
        %v616 = vunpack.c.l.b16 %v523
        %v617 = vunpack.c.l.b16 %v524
        %v618 = vunpack.c.l.b16 %v525
        %v619 = vunpack.c.l.b16 %v526
        %v620 = vunpack.c.l.b16 %v527
        %v621 = vunpack.c.l.b16 %v528
        %v622 = vunpack.c.l.b16 %v529
        %v623 = vunpack.c.l.b16 %v530
        %v624 = vunpack.c.l.b16 %v531
        %v625 = vpack.c.b16 %v594, %v593
        %v626 = vpack.c.b16 %v596, %v595
        %v627 = vpack.c.b16 %v598, %v597
        %v628 = vpack.c.b16 %v600, %v599
        %v629 = vpack.c.b16 %v602, %v601
        %v630 = vpack.c.b16 %v604, %v603
        %v631 = vpack.c.b16 %v606, %v605
        %v632 = vpack.c.b16 %v608, %v607
        %v633 = vpack.c.b16 %v610, %v609
        %v634 = vpack.c.b16 %v612, %v611
        %v635 = vpack.c.b16 %v614, %v613
        %v636 = vpack.c.b16 %v616, %v615
        %v637 = vpack.c.b16 %v618, %v617
        %v638 = vpack.c.b16 %v620, %v619
        %v639 = vpack.c.b16 %v622, %v621
        %v640 = vpack.c.b16 %v624, %v623
        %v673 = vunpack.c.l.b16 %v541
        %v674 = vunpack.c.l.b16 %v542
        %v675 = vunpack.c.l.b16 %v543
        %v676 = vunpack.c.l.b16 %v544
        %v677 = vunpack.c.l.b16 %v545
        %v678 = vunpack.c.l.b16 %v546
        %v679 = vunpack.c.l.b16 %v547
        %v680 = vunpack.c.l.b16 %v548
        %v681 = vunpack.c.l.b16 %v549
        %v682 = vunpack.c.l.b16 %v550
        %v683 = vunpack.c.l.b16 %v551
        %v684 = vunpack.c.l.b16 %v552
        %v685 = vunpack.c.l.b16 %v553
        %v686 = vunpack.c.l.b16 %v554
        %v687 = vunpack.c.l.b16 %v555
        %v688 = vunpack.c.l.b16 %v556
        %v689 = vpack.c.b16 %v674, %v673
        %v690 = vpack.c.b16 %v676, %v675
        %v691 = vpack.c.b16 %v678, %v677
        %v692 = vpack.c.b16 %v680, %v679
        %v693 = vpack.c.b16 %v682, %v681
        %v694 = vpack.c.b16 %v684, %v683
        %v695 = vpack.c.b16 %v686, %v685
        %v696 = vpack.c.b16 %v688, %v687
        %705 = vmatprep.subr.bf16.mxu0 0
        %706 = vmatpush1.bf16.msra.mxu0 %v689
        %707 = vmatprep.subr.bf16.mxu0 0
        %708 = vmatpush1.bf16.msra.mxu0 %v690
        %709 = vmatprep.subr.bf16.mxu0 0
        %710 = vmatpush1.bf16.msra.mxu0 %v691
        %711 = vmatprep.subr.bf16.mxu0 0
        %712 = vmatpush1.bf16.msra.mxu0 %v692
        %713 = vmatprep.subr.bf16.mxu0 0
        %714 = vmatpush1.bf16.msra.mxu0 %v693
        %715 = vmatprep.subr.bf16.mxu0 0
        %716 = vmatpush1.bf16.msra.mxu0 %v694
        %717 = vmatprep.subr.bf16.mxu0 0
        %718 = vmatpush1.bf16.msra.mxu0 %v695
        %719 = vmatprep.subr.bf16.mxu0 0
        %720 = vmatpush1.bf16.msra.mxu0 %v696
        %721 = vmatprep.subr.bf16.mxu0 0
        %722 = vmatpush1.bf16.msra.mxu0 0
        %723 = vmatprep.subr.bf16.mxu0 0
        %724 = vmatpush1.bf16.msra.mxu0 0
        %725 = vmatprep.subr.bf16.mxu0 0
        %726 = vmatpush1.bf16.msra.mxu0 0
        %727 = vmatprep.subr.bf16.mxu0 0
        %728 = vmatpush1.bf16.msra.mxu0 0
        %729 = vmatprep.subr.bf16.mxu0 0
        %730 = vmatpush1.bf16.msra.mxu0 0
        %731 = vmatprep.subr.bf16.mxu0 0
        %732 = vmatpush1.bf16.msra.mxu0 0
        %733 = vmatprep.subr.bf16.mxu0 0
        %734 = vmatpush1.bf16.msra.mxu0 0
        %735 = vmatprep.subr.bf16.mxu0 0
        %736 = vmatpush1.bf16.msra.mxu0 0
        %737 = vmatprep.mubr.bf16.mxu0 0
        %738 = vmatmul.mubr.bf16.gmra.mrb[0].mxu0 %v625
        %v739 = vpop.f32.mrb[0].mxu0
        %v740 = vadd.f32 %v560, %v739
        %v741 = vpop.f32.mrb[0].mxu0
        %v742 = vpop.f32.mrb[0].mxu0
        %v743 = vadd.f32 %v560, %v742
        %v744 = vpop.f32.mrb[0].mxu0
        %745 = vmatprep.mubr.bf16.mxu0 0
        %746 = vmatmul.mubr.bf16.gmra.mrb[0].mxu0 %v626
        %v747 = vpop.f32.mrb[0].mxu0
        %v748 = vadd.f32 %v560, %v747
        %v749 = vpop.f32.mrb[0].mxu0
        %v750 = vpop.f32.mrb[0].mxu0
        %v751 = vadd.f32 %v560, %v750
        %v752 = vpop.f32.mrb[0].mxu0
        %753 = vmatprep.mubr.bf16.mxu0 0
        %754 = vmatmul.mubr.bf16.gmra.mrb[0].mxu0 %v627
        %v755 = vpop.f32.mrb[0].mxu0
        %v756 = vadd.f32 %v560, %v755
        %v757 = vpop.f32.mrb[0].mxu0
        %v758 = vpop.f32.mrb[0].mxu0
        %v759 = vadd.f32 %v560, %v758
        %v760 = vpop.f32.mrb[0].mxu0
        %761 = vmatprep.mubr.bf16.mxu0 0
        %762 = vmatmul.mubr.bf16.gmra.mrb[0].mxu0 %v628
        %v763 = vpop.f32.mrb[0].mxu0
        %v764 = vadd.f32 %v560, %v763
        %v765 = vpop.f32.mrb[0].mxu0
        %v766 = vpop.f32.mrb[0].mxu0
        %v767 = vadd.f32 %v560, %v766
        %v768 = vpop.f32.mrb[0].mxu0
        %769 = vmatprep.mubr.bf16.mxu0 0
        %770 = vmatmul.mubr.bf16.gmra.mrb[0].mxu0 %v629
        %v771 = vpop.f32.mrb[0].mxu0
        %v772 = vadd.f32 %v560, %v771
        %v773 = vpop.f32.mrb[0].mxu0
        %v774 = vpop.f32.mrb[0].mxu0
        %v775 = vadd.f32 %v560, %v774
        %v776 = vpop.f32.mrb[0].mxu0
        %777 = vmatprep.mubr.bf16.mxu0 0
        %778 = vmatmul.mubr.bf16.gmra.mrb[0].mxu0 %v630
        %v779 = vpop.f32.mrb[0].mxu0
        %v780 = vadd.f32 %v560, %v779
        %v781 = vpop.f32.mrb[0].mxu0
        %v782 = vpop.f32.mrb[0].mxu0
        %v783 = vadd.f32 %v560, %v782
        %v784 = vpop.f32.mrb[0].mxu0
        %785 = vmatprep.mubr.bf16.mxu0 0
        %786 = vmatmul.mubr.bf16.gmra.mrb[0].mxu0 %v631
        %v787 = vpop.f32.mrb[0].mxu0
        %v788 = vadd.f32 %v560, %v787
        %v789 = vpop.f32.mrb[0].mxu0
        %v790 = vpop.f32.mrb[0].mxu0
        %v791 = vadd.f32 %v560, %v790
        %v792 = vpop.f32.mrb[0].mxu0
        %793 = vmatprep.mubr.bf16.mxu0 0
        %794 = vmatmul.mubr.bf16.gmra.mrb[0].mxu0 %v632
        %v795 = vpop.f32.mrb[0].mxu0
        %v796 = vadd.f32 %v560, %v795
        %v797 = vpop.f32.mrb[0].mxu0
        %v798 = vpop.f32.mrb[0].mxu0
        %v799 = vadd.f32 %v560, %v798
        %v800 = vpop.f32.mrb[0].mxu0
        %801 = vmatprep.mubr.bf16.mxu0 0
        %802 = vmatmul.mubr.bf16.gmra.mrb[0].mxu0 %v633
        %v803 = vpop.f32.mrb[0].mxu0
        %v804 = vadd.f32 %v560, %v803
        %v805 = vpop.f32.mrb[0].mxu0
        %v806 = vpop.f32.mrb[0].mxu0
        %v807 = vadd.f32 %v560, %v806
        %v808 = vpop.f32.mrb[0].mxu0
        %809 = vmatprep.mubr.bf16.mxu0 0
        %810 = vmatmul.mubr.bf16.gmra.mrb[0].mxu0 %v634
        %v811 = vpop.f32.mrb[0].mxu0
        %v812 = vadd.f32 %v560, %v811
        %v813 = vpop.f32.mrb[0].mxu0
        %v814 = vpop.f32.mrb[0].mxu0
        %v815 = vadd.f32 %v560, %v814
        %v816 = vpop.f32.mrb[0].mxu0
        %817 = vmatprep.mubr.bf16.mxu0 0
        %818 = vmatmul.mubr.bf16.gmra.mrb[0].mxu0 %v635
        %v819 = vpop.f32.mrb[0].mxu0
        %v820 = vadd.f32 %v560, %v819
        %v821 = vpop.f32.mrb[0].mxu0
        %v822 = vpop.f32.mrb[0].mxu0
        %v823 = vadd.f32 %v560, %v822
        %v824 = vpop.f32.mrb[0].mxu0
        %825 = vmatprep.mubr.bf16.mxu0 0
        %826 = vmatmul.mubr.bf16.gmra.mrb[0].mxu0 %v636
        %v827 = vpop.f32.mrb[0].mxu0
        %v828 = vadd.f32 %v560, %v827
        %v829 = vpop.f32.mrb[0].mxu0
        %v830 = vpop.f32.mrb[0].mxu0
        %v831 = vadd.f32 %v560, %v830
        %v832 = vpop.f32.mrb[0].mxu0
        %833 = vmatprep.mubr.bf16.mxu0 0
        %834 = vmatmul.mubr.bf16.gmra.mrb[0].mxu0 %v637
        %v835 = vpop.f32.mrb[0].mxu0
        %v836 = vadd.f32 %v560, %v835
        %v837 = vpop.f32.mrb[0].mxu0
        %v838 = vpop.f32.mrb[0].mxu0
        %v839 = vadd.f32 %v560, %v838
        %v840 = vpop.f32.mrb[0].mxu0
        %841 = vmatprep.mubr.bf16.mxu0 0
        %842 = vmatmul.mubr.bf16.gmra.mrb[0].mxu0 %v638
        %v843 = vpop.f32.mrb[0].mxu0
        %v844 = vadd.f32 %v560, %v843
        %v845 = vpop.f32.mrb[0].mxu0
        %v846 = vpop.f32.mrb[0].mxu0
        %v847 = vadd.f32 %v560, %v846
        %v848 = vpop.f32.mrb[0].mxu0
        %849 = vmatprep.mubr.bf16.mxu0 0
        %850 = vmatmul.mubr.bf16.gmra.mrb[0].mxu0 %v639
        %v851 = vpop.f32.mrb[0].mxu0
        %v852 = vadd.f32 %v560, %v851
        %v853 = vpop.f32.mrb[0].mxu0
        %v854 = vpop.f32.mrb[0].mxu0
        %v855 = vadd.f32 %v560, %v854
        %v856 = vpop.f32.mrb[0].mxu0
        %857 = vmatprep.mubr.bf16.mxu0 0
        %858 = vmatmul.mubr.bf16.gmra.mrb[0].mxu0 %v640
        %v859 = vpop.f32.mrb[0].mxu0
        %v860 = vadd.f32 %v560, %v859
        %v861 = vpop.f32.mrb[0].mxu0
        %v862 = vpop.f32.mrb[0].mxu0
        %v863 = vadd.f32 %v560, %v862
        %v864 = vpop.f32.mrb[0].mxu0
        %865 = vdwg.mxu0
        %v866 = vadd.f32 %v740, %v743
        %v867 = vadd.f32 %v866, %v748
        %v868 = vadd.f32 %v867, %v751
        %v869 = vadd.f32 %v868, %v756
        %v870 = vadd.f32 %v869, %v759
        %v871 = vadd.f32 %v870, %v764
        %v872 = vadd.f32 %v871, %v767
        %v873 = vadd.f32 %v872, %v772
        %v874 = vadd.f32 %v873, %v775
        %v875 = vadd.f32 %v874, %v780
        %v876 = vadd.f32 %v875, %v783
        %v877 = vadd.f32 %v876, %v788
        %v878 = vadd.f32 %v877, %v791
        %v879 = vadd.f32 %v878, %v796
        %v880 = vadd.f32 %v879, %v799
        %v881 = vadd.f32 %v880, %v804
        %v882 = vadd.f32 %v881, %v807
        %v883 = vadd.f32 %v882, %v812
        %v884 = vadd.f32 %v883, %v815
        %v885 = vadd.f32 %v884, %v820
        %v886 = vadd.f32 %v885, %v823
        %v887 = vadd.f32 %v886, %v828
        %v888 = vadd.f32 %v887, %v831
        %v889 = vadd.f32 %v888, %v836
        %v890 = vadd.f32 %v889, %v839
        %v891 = vadd.f32 %v890, %v844
        %v892 = vadd.f32 %v891, %v847
        %v893 = vadd.f32 %v892, %v852
        %v894 = vadd.f32 %v893, %v855
        %v895 = vadd.f32 %v894, %v860
        %v896 = vadd.f32 %v895, %v863
        %v897 = vrot.slane %v896, 4
        %v898 = vadd.f32 %v896, %v897
        %v899 = vrot.slane %v898, 2
        %v900 = vadd.f32 %v898, %v899
        %v901 = vrot.slane %v900, 1
        %v902 = vadd.f32 %v900, %v901
        %v903 = vrcp.pop 256.0
        %v904 = vmul.f32 %v902, %v903
        %v905 = vsub.f32 %v740, %v904
        %v906 = vsub.f32 %v743, %v904
        %v907 = vsub.f32 %v748, %v904
        %v908 = vsub.f32 %v751, %v904
        %v909 = vsub.f32 %v756, %v904
        %v910 = vsub.f32 %v759, %v904
        %v911 = vsub.f32 %v764, %v904
        %v912 = vsub.f32 %v767, %v904
        %v913 = vsub.f32 %v772, %v904
        %v914 = vsub.f32 %v775, %v904
        %v915 = vsub.f32 %v780, %v904
        %v916 = vsub.f32 %v783, %v904
        %v917 = vsub.f32 %v788, %v904
        %v918 = vsub.f32 %v791, %v904
        %v919 = vsub.f32 %v796, %v904
        %v920 = vsub.f32 %v799, %v904
        %v921 = vsub.f32 %v804, %v904
        %v922 = vsub.f32 %v807, %v904
        %v923 = vsub.f32 %v812, %v904
        %v924 = vsub.f32 %v815, %v904
        %v925 = vsub.f32 %v820, %v904
        %v926 = vsub.f32 %v823, %v904
        %v927 = vsub.f32 %v828, %v904
        %v928 = vsub.f32 %v831, %v904
        %v929 = vsub.f32 %v836, %v904
        %v930 = vsub.f32 %v839, %v904
        %v931 = vsub.f32 %v844, %v904
        %v932 = vsub.f32 %v847, %v904
        %v933 = vsub.f32 %v852, %v904
        %v934 = vsub.f32 %v855, %v904
        %v935 = vsub.f32 %v860, %v904
        %v936 = vsub.f32 %v863, %v904
        %v937 = vmul.f32 %v905, %v905
        %v938 = vmul.f32 %v906, %v906
        %v939 = vmul.f32 %v907, %v907
        %v940 = vmul.f32 %v908, %v908
        %v941 = vmul.f32 %v909, %v909
        %v942 = vmul.f32 %v910, %v910
        %v943 = vmul.f32 %v911, %v911
        %v944 = vmul.f32 %v912, %v912
        %v945 = vmul.f32 %v913, %v913
        %v946 = vmul.f32 %v914, %v914
        %v947 = vmul.f32 %v915, %v915
        %v948 = vmul.f32 %v916, %v916
        %v949 = vmul.f32 %v917, %v917
        %v950 = vmul.f32 %v918, %v918
        %v951 = vmul.f32 %v919, %v919
        %v952 = vmul.f32 %v920, %v920
        %v953 = vmul.f32 %v921, %v921
        %v954 = vmul.f32 %v922, %v922
        %v955 = vmul.f32 %v923, %v923
        %v956 = vmul.f32 %v924, %v924
        %v957 = vmul.f32 %v925, %v925
        %v958 = vmul.f32 %v926, %v926
        %v959 = vmul.f32 %v927, %v927
        %v960 = vmul.f32 %v928, %v928
        %v961 = vmul.f32 %v929, %v929
        %v962 = vmul.f32 %v930, %v930
        %v963 = vmul.f32 %v931, %v931
        %v964 = vmul.f32 %v932, %v932
        %v965 = vmul.f32 %v933, %v933
        %v966 = vmul.f32 %v934, %v934
        %v967 = vmul.f32 %v935, %v935
        %v968 = vmul.f32 %v936, %v936
        %v969 = vadd.f32 %v937, %v938
        %v970 = vadd.f32 %v969, %v939
        %v971 = vadd.f32 %v970, %v940
        %v972 = vadd.f32 %v971, %v941
        %v973 = vadd.f32 %v972, %v942
        %v974 = vadd.f32 %v973, %v943
        %v975 = vadd.f32 %v974, %v944
        %v976 = vadd.f32 %v975, %v945
        %v977 = vadd.f32 %v976, %v946
        %v978 = vadd.f32 %v977, %v947
        %v979 = vadd.f32 %v978, %v948
        %v980 = vadd.f32 %v979, %v949
        %v981 = vadd.f32 %v980, %v950
        %v982 = vadd.f32 %v981, %v951
        %v983 = vadd.f32 %v982, %v952
        %v984 = vadd.f32 %v983, %v953
        %v985 = vadd.f32 %v984, %v954
        %v986 = vadd.f32 %v985, %v955
        %v987 = vadd.f32 %v986, %v956
        %v988 = vadd.f32 %v987, %v957
        %v989 = vadd.f32 %v988, %v958
        %v990 = vadd.f32 %v989, %v959
        %v991 = vadd.f32 %v990, %v960
        %v992 = vadd.f32 %v991, %v961
        %v993 = vadd.f32 %v992, %v962
        %v994 = vadd.f32 %v993, %v963
        %v995 = vadd.f32 %v994, %v964
        %v996 = vadd.f32 %v995, %v965
        %v997 = vadd.f32 %v996, %v966
        %v998 = vadd.f32 %v997, %v967
        %v999 = vadd.f32 %v998, %v968
        %v1000 = vrot.slane %v999, 4
        %v1001 = vadd.f32 %v999, %v1000
        %v1002 = vrot.slane %v1001, 2
        %v1003 = vadd.f32 %v1001, %v1002
        %v1004 = vrot.slane %v1003, 1
        %v1005 = vadd.f32 %v1003, %v1004
        %v1006 = vmul.f32 %v1005, %v903
        %v1007 = vadd.f32 %v1006, 1e-05
        %v1008 = vrsqrt.pop %v1007
        %v1009 = vmul.f32 %v905, %v1008
        %v1010 = vmul.f32 %v906, %v1008
        %v1011 = vmul.f32 %v907, %v1008
        %v1012 = vmul.f32 %v908, %v1008
        %v1013 = vmul.f32 %v909, %v1008
        %v1014 = vmul.f32 %v910, %v1008
        %v1015 = vmul.f32 %v911, %v1008
        %v1016 = vmul.f32 %v912, %v1008
        %v1017 = vmul.f32 %v913, %v1008
        %v1018 = vmul.f32 %v914, %v1008
        %v1019 = vmul.f32 %v915, %v1008
        %v1020 = vmul.f32 %v916, %v1008
        %v1021 = vmul.f32 %v917, %v1008
        %v1022 = vmul.f32 %v918, %v1008
        %v1023 = vmul.f32 %v919, %v1008
        %v1024 = vmul.f32 %v920, %v1008
        %v1025 = vmul.f32 %v921, %v1008
        %v1026 = vmul.f32 %v922, %v1008
        %v1027 = vmul.f32 %v923, %v1008
        %v1028 = vmul.f32 %v924, %v1008
        %v1029 = vmul.f32 %v925, %v1008
        %v1030 = vmul.f32 %v926, %v1008
        %v1031 = vmul.f32 %v927, %v1008
        %v1032 = vmul.f32 %v928, %v1008
        %v1033 = vmul.f32 %v929, %v1008
        %v1034 = vmul.f32 %v930, %v1008
        %v1035 = vmul.f32 %v931, %v1008
        %v1036 = vmul.f32 %v932, %v1008
        %v1037 = vmul.f32 %v933, %v1008
        %v1038 = vmul.f32 %v934, %v1008
        %v1039 = vmul.f32 %v935, %v1008
        %v1040 = vmul.f32 %v936, %v1008
        %v1041 = vlaneseq
        %v1042 = vshrl.u32 %v1041, 7
        %v1043 = vsub.s32 1, %v1042
        %v1044 = vrot.slane %v535, %v1043
        %v1045 = vmul.f32 %v1009, %v1044
        %v1046 = vmul.f32 %v1010, %v1044
        %v1047 = vmul.f32 %v1011, %v1044
        %v1048 = vmul.f32 %v1012, %v1044
        %v1049 = vmul.f32 %v1013, %v1044
        %v1050 = vmul.f32 %v1014, %v1044
        %v1051 = vmul.f32 %v1015, %v1044
        %v1052 = vmul.f32 %v1016, %v1044
        %v1053 = vmul.f32 %v1017, %v1044
        %v1054 = vmul.f32 %v1018, %v1044
        %v1055 = vmul.f32 %v1019, %v1044
        %v1056 = vmul.f32 %v1020, %v1044
        %v1057 = vmul.f32 %v1021, %v1044
        %v1058 = vmul.f32 %v1022, %v1044
        %v1059 = vmul.f32 %v1023, %v1044
        %v1060 = vmul.f32 %v1024, %v1044
        %v1061 = vmul.f32 %v1025, %v1044
        %v1062 = vmul.f32 %v1026, %v1044
        %v1063 = vmul.f32 %v1027, %v1044
        %v1064 = vmul.f32 %v1028, %v1044
        %v1065 = vmul.f32 %v1029, %v1044
        %v1066 = vmul.f32 %v1030, %v1044
        %v1067 = vmul.f32 %v1031, %v1044
        %v1068 = vmul.f32 %v1032, %v1044
        %v1069 = vmul.f32 %v1033, %v1044
        %v1070 = vmul.f32 %v1034, %v1044
        %v1071 = vmul.f32 %v1035, %v1044
        %v1072 = vmul.f32 %v1036, %v1044
        %v1073 = vmul.f32 %v1037, %v1044
        %v1074 = vmul.f32 %v1038, %v1044
        %v1075 = vmul.f32 %v1039, %v1044
        %v1076 = vmul.f32 %v1040, %v1044
        %v1077 = vlaneseq
        %v1078 = vshrl.u32 %v1077, 7
        %v1079 = vsub.s32 2, %v1078
        %v1080 = vrot.slane %v535, %v1079
        %v1081 = vadd.f32 %v1045, %v1080
        %v1082 = vadd.f32 %v1046, %v1080
        %v1083 = vadd.f32 %v1047, %v1080
        %v1084 = vadd.f32 %v1048, %v1080
        %v1085 = vadd.f32 %v1049, %v1080
        %v1086 = vadd.f32 %v1050, %v1080
        %v1087 = vadd.f32 %v1051, %v1080
        %v1088 = vadd.f32 %v1052, %v1080
        %v1089 = vadd.f32 %v1053, %v1080
        %v1090 = vadd.f32 %v1054, %v1080
        %v1091 = vadd.f32 %v1055, %v1080
        %v1092 = vadd.f32 %v1056, %v1080
        %v1093 = vadd.f32 %v1057, %v1080
        %v1094 = vadd.f32 %v1058, %v1080
        %v1095 = vadd.f32 %v1059, %v1080
        %v1096 = vadd.f32 %v1060, %v1080
        %v1097 = vadd.f32 %v1061, %v1080
        %v1098 = vadd.f32 %v1062, %v1080
        %v1099 = vadd.f32 %v1063, %v1080
        %v1100 = vadd.f32 %v1064, %v1080
        %v1101 = vadd.f32 %v1065, %v1080
        %v1102 = vadd.f32 %v1066, %v1080
        %v1103 = vadd.f32 %v1067, %v1080
        %v1104 = vadd.f32 %v1068, %v1080
        %v1105 = vadd.f32 %v1069, %v1080
        %v1106 = vadd.f32 %v1070, %v1080
        %v1107 = vadd.f32 %v1071, %v1080
        %v1108 = vadd.f32 %v1072, %v1080
        %v1109 = vadd.f32 %v1073, %v1080
        %v1110 = vadd.f32 %v1074, %v1080
        %v1111 = vadd.f32 %v1075, %v1080
        %v1112 = vadd.f32 %v1076, %v1080
        %v1113 = vmax.f32 %v1081, 0.0
        %v1114 = vmax.f32 %v1082, 0.0
        %v1115 = vmax.f32 %v1083, 0.0
        %v1116 = vmax.f32 %v1084, 0.0
        %v1117 = vmax.f32 %v1085, 0.0
        %v1118 = vmax.f32 %v1086, 0.0
        %v1119 = vmax.f32 %v1087, 0.0
        %v1120 = vmax.f32 %v1088, 0.0
        %v1121 = vmax.f32 %v1089, 0.0
        %v1122 = vmax.f32 %v1090, 0.0
        %v1123 = vmax.f32 %v1091, 0.0
        %v1124 = vmax.f32 %v1092, 0.0
        %v1125 = vmax.f32 %v1093, 0.0
        %v1126 = vmax.f32 %v1094, 0.0
        %v1127 = vmax.f32 %v1095, 0.0
        %v1128 = vmax.f32 %v1096, 0.0
        %v1129 = vmax.f32 %v1097, 0.0
        %v1130 = vmax.f32 %v1098, 0.0
        %v1131 = vmax.f32 %v1099, 0.0
        %v1132 = vmax.f32 %v1100, 0.0
        %v1133 = vmax.f32 %v1101, 0.0
        %v1134 = vmax.f32 %v1102, 0.0
        %v1135 = vmax.f32 %v1103, 0.0
        %v1136 = vmax.f32 %v1104, 0.0
        %v1137 = vmax.f32 %v1105, 0.0
        %v1138 = vmax.f32 %v1106, 0.0
        %v1139 = vmax.f32 %v1107, 0.0
        %v1140 = vmax.f32 %v1108, 0.0
        %v1141 = vmax.f32 %v1109, 0.0
        %v1142 = vmax.f32 %v1110, 0.0
        %v1143 = vmax.f32 %v1111, 0.0
        %v1144 = vmax.f32 %v1112, 0.0
        %v1145 = vpack.c.bf16 %v1114, %v1113
        %v1146 = vpack.c.bf16 %v1116, %v1115
        %v1147 = vpack.c.bf16 %v1118, %v1117
        %v1148 = vpack.c.bf16 %v1120, %v1119
        %v1149 = vpack.c.bf16 %v1122, %v1121
        %v1150 = vpack.c.bf16 %v1124, %v1123
        %v1151 = vpack.c.bf16 %v1126, %v1125
        %v1152 = vpack.c.bf16 %v1128, %v1127
        %v1153 = vpack.c.bf16 %v1130, %v1129
        %v1154 = vpack.c.bf16 %v1132, %v1131
        %v1155 = vpack.c.bf16 %v1134, %v1133
        %v1156 = vpack.c.bf16 %v1136, %v1135
        %v1157 = vpack.c.bf16 %v1138, %v1137
        %v1158 = vpack.c.bf16 %v1140, %v1139
        %v1159 = vpack.c.bf16 %v1142, %v1141
        %v1160 = vpack.c.bf16 %v1144, %v1143
        %s1161 = smul.addr %s538, 4
        %s1162 = scalar_lea.vmem %s4, %s1161
        %v1163 = vld [vmem:[%s1162] sm:$0xf]
        %v1164 = vld [vmem:[%s1162 + $0x4] sm:$0xf]
        %v1165 = vld [vmem:[%s1162 + $0x8] sm:$0xf]
        %v1166 = vld [vmem:[%s1162 + $0xc] sm:$0xf]
        %v1167 = vld [vmem:[%s1162 + $0x10] sm:$0xf]
        %v1168 = vld [vmem:[%s1162 + $0x14] sm:$0xf]
        %v1169 = vld [vmem:[%s1162 + $0x18] sm:$0xf]
        %v1170 = vld [vmem:[%s1162 + $0x1c] sm:$0xf]
        %v1171 = vld [vmem:[%s1162 + $0x20] sm:$0xf]
        %v1172 = vld [vmem:[%s1162 + $0x24] sm:$0xf]
        %v1173 = vld [vmem:[%s1162 + $0x28] sm:$0xf]
        %v1174 = vld [vmem:[%s1162 + $0x2c] sm:$0xf]
        %v1175 = vld [vmem:[%s1162 + $0x30] sm:$0xf]
        %v1176 = vld [vmem:[%s1162 + $0x34] sm:$0xf]
        %v1177 = vld [vmem:[%s1162 + $0x38] sm:$0xf]
        %v1178 = vld [vmem:[%s1162 + $0x3c] sm:$0xf]
        %v1179 = vlaneseq
        %v1180 = vshrl.u32 %v1179, 7
        %v1181 = vsub.s32 3, %v1180
        %v1182 = vrot.slane %v535, %v1181
        %v1199 = vunpack.c.l.b16 %v1163
        %v1200 = vunpack.c.l.b16 %v1164
        %v1201 = vunpack.c.l.b16 %v1165
        %v1202 = vunpack.c.l.b16 %v1166
        %v1203 = vunpack.c.l.b16 %v1167
        %v1204 = vunpack.c.l.b16 %v1168
        %v1205 = vunpack.c.l.b16 %v1169
        %v1206 = vunpack.c.l.b16 %v1170
        %v1207 = vunpack.c.l.b16 %v1171
        %v1208 = vunpack.c.l.b16 %v1172
        %v1209 = vunpack.c.l.b16 %v1173
        %v1210 = vunpack.c.l.b16 %v1174
        %v1211 = vunpack.c.l.b16 %v1175
        %v1212 = vunpack.c.l.b16 %v1176
        %v1213 = vunpack.c.l.b16 %v1177
        %v1214 = vunpack.c.l.b16 %v1178
        %v1215 = vpack.c.b16 %v1200, %v1199
        %v1216 = vpack.c.b16 %v1202, %v1201
        %v1217 = vpack.c.b16 %v1204, %v1203
        %v1218 = vpack.c.b16 %v1206, %v1205
        %v1219 = vpack.c.b16 %v1208, %v1207
        %v1220 = vpack.c.b16 %v1210, %v1209
        %v1221 = vpack.c.b16 %v1212, %v1211
        %v1222 = vpack.c.b16 %v1214, %v1213
        %1231 = vmatprep.subr.bf16.mxu0 0
        %1232 = vmatpush1.bf16.msra.mxu0 %v1215
        %1233 = vmatprep.subr.bf16.mxu0 0
        %1234 = vmatpush1.bf16.msra.mxu0 %v1216
        %1235 = vmatprep.subr.bf16.mxu0 0
        %1236 = vmatpush1.bf16.msra.mxu0 %v1217
        %1237 = vmatprep.subr.bf16.mxu0 0
        %1238 = vmatpush1.bf16.msra.mxu0 %v1218
        %1239 = vmatprep.subr.bf16.mxu0 0
        %1240 = vmatpush1.bf16.msra.mxu0 %v1219
        %1241 = vmatprep.subr.bf16.mxu0 0
        %1242 = vmatpush1.bf16.msra.mxu0 %v1220
        %1243 = vmatprep.subr.bf16.mxu0 0
        %1244 = vmatpush1.bf16.msra.mxu0 %v1221
        %1245 = vmatprep.subr.bf16.mxu0 0
        %1246 = vmatpush1.bf16.msra.mxu0 %v1222
        %1247 = vmatprep.subr.bf16.mxu0 0
        %1248 = vmatpush1.bf16.msra.mxu0 0
        %1249 = vmatprep.subr.bf16.mxu0 0
        %1250 = vmatpush1.bf16.msra.mxu0 0
        %1251 = vmatprep.subr.bf16.mxu0 0
        %1252 = vmatpush1.bf16.msra.mxu0 0
        %1253 = vmatprep.subr.bf16.mxu0 0
        %1254 = vmatpush1.bf16.msra.mxu0 0
        %1255 = vmatprep.subr.bf16.mxu0 0
        %1256 = vmatpush1.bf16.msra.mxu0 0
        %1257 = vmatprep.subr.bf16.mxu0 0
        %1258 = vmatpush1.bf16.msra.mxu0 0
        %1259 = vmatprep.subr.bf16.mxu0 0
        %1260 = vmatpush1.bf16.msra.mxu0 0
        %1261 = vmatprep.subr.bf16.mxu0 0
        %1262 = vmatpush1.bf16.msra.mxu0 0
        %1263 = vmatprep.mubr.bf16.mxu0 0
        %1264 = vmatmul.mubr.bf16.gmra.mrb[0].mxu0 %v1145
        %v1265 = vpop.f32.mrb[0].mxu0
        %v1266 = vadd.f32 %v1182, %v1265
        %v1267 = vpop.f32.mrb[0].mxu0
        %v1268 = vpop.f32.mrb[0].mxu0
        %v1269 = vadd.f32 %v1182, %v1268
        %v1270 = vpop.f32.mrb[0].mxu0
        %1271 = vmatprep.mubr.bf16.mxu0 0
        %1272 = vmatmul.mubr.bf16.gmra.mrb[0].mxu0 %v1146
        %v1273 = vpop.f32.mrb[0].mxu0
        %v1274 = vadd.f32 %v1182, %v1273
        %v1275 = vpop.f32.mrb[0].mxu0
        %v1276 = vpop.f32.mrb[0].mxu0
        %v1277 = vadd.f32 %v1182, %v1276
        %v1278 = vpop.f32.mrb[0].mxu0
        %1279 = vmatprep.mubr.bf16.mxu0 0
        %1280 = vmatmul.mubr.bf16.gmra.mrb[0].mxu0 %v1147
        %v1281 = vpop.f32.mrb[0].mxu0
        %v1282 = vadd.f32 %v1182, %v1281
        %v1283 = vpop.f32.mrb[0].mxu0
        %v1284 = vpop.f32.mrb[0].mxu0
        %v1285 = vadd.f32 %v1182, %v1284
        %v1286 = vpop.f32.mrb[0].mxu0
        %1287 = vmatprep.mubr.bf16.mxu0 0
        %1288 = vmatmul.mubr.bf16.gmra.mrb[0].mxu0 %v1148
        %v1289 = vpop.f32.mrb[0].mxu0
        %v1290 = vadd.f32 %v1182, %v1289
        %v1291 = vpop.f32.mrb[0].mxu0
        %v1292 = vpop.f32.mrb[0].mxu0
        %v1293 = vadd.f32 %v1182, %v1292
        %v1294 = vpop.f32.mrb[0].mxu0
        %1295 = vmatprep.mubr.bf16.mxu0 0
        %1296 = vmatmul.mubr.bf16.gmra.mrb[0].mxu0 %v1149
        %v1297 = vpop.f32.mrb[0].mxu0
        %v1298 = vadd.f32 %v1182, %v1297
        %v1299 = vpop.f32.mrb[0].mxu0
        %v1300 = vpop.f32.mrb[0].mxu0
        %v1301 = vadd.f32 %v1182, %v1300
        %v1302 = vpop.f32.mrb[0].mxu0
        %1303 = vmatprep.mubr.bf16.mxu0 0
        %1304 = vmatmul.mubr.bf16.gmra.mrb[0].mxu0 %v1150
        %v1305 = vpop.f32.mrb[0].mxu0
        %v1306 = vadd.f32 %v1182, %v1305
        %v1307 = vpop.f32.mrb[0].mxu0
        %v1308 = vpop.f32.mrb[0].mxu0
        %v1309 = vadd.f32 %v1182, %v1308
        %v1310 = vpop.f32.mrb[0].mxu0
        %1311 = vmatprep.mubr.bf16.mxu0 0
        %1312 = vmatmul.mubr.bf16.gmra.mrb[0].mxu0 %v1151
        %v1313 = vpop.f32.mrb[0].mxu0
        %v1314 = vadd.f32 %v1182, %v1313
        %v1315 = vpop.f32.mrb[0].mxu0
        %v1316 = vpop.f32.mrb[0].mxu0
        %v1317 = vadd.f32 %v1182, %v1316
        %v1318 = vpop.f32.mrb[0].mxu0
        %1319 = vmatprep.mubr.bf16.mxu0 0
        %1320 = vmatmul.mubr.bf16.gmra.mrb[0].mxu0 %v1152
        %v1321 = vpop.f32.mrb[0].mxu0
        %v1322 = vadd.f32 %v1182, %v1321
        %v1323 = vpop.f32.mrb[0].mxu0
        %v1324 = vpop.f32.mrb[0].mxu0
        %v1325 = vadd.f32 %v1182, %v1324
        %v1326 = vpop.f32.mrb[0].mxu0
        %1327 = vmatprep.mubr.bf16.mxu0 0
        %1328 = vmatmul.mubr.bf16.gmra.mrb[0].mxu0 %v1153
        %v1329 = vpop.f32.mrb[0].mxu0
        %v1330 = vadd.f32 %v1182, %v1329
        %v1331 = vpop.f32.mrb[0].mxu0
        %v1332 = vpop.f32.mrb[0].mxu0
        %v1333 = vadd.f32 %v1182, %v1332
        %v1334 = vpop.f32.mrb[0].mxu0
        %1335 = vmatprep.mubr.bf16.mxu0 0
        %1336 = vmatmul.mubr.bf16.gmra.mrb[0].mxu0 %v1154
        %v1337 = vpop.f32.mrb[0].mxu0
        %v1338 = vadd.f32 %v1182, %v1337
        %v1339 = vpop.f32.mrb[0].mxu0
        %v1340 = vpop.f32.mrb[0].mxu0
        %v1341 = vadd.f32 %v1182, %v1340
        %v1342 = vpop.f32.mrb[0].mxu0
        %1343 = vmatprep.mubr.bf16.mxu0 0
        %1344 = vmatmul.mubr.bf16.gmra.mrb[0].mxu0 %v1155
        %v1345 = vpop.f32.mrb[0].mxu0
        %v1346 = vadd.f32 %v1182, %v1345
        %v1347 = vpop.f32.mrb[0].mxu0
        %v1348 = vpop.f32.mrb[0].mxu0
        %v1349 = vadd.f32 %v1182, %v1348
        %v1350 = vpop.f32.mrb[0].mxu0
        %1351 = vmatprep.mubr.bf16.mxu0 0
        %1352 = vmatmul.mubr.bf16.gmra.mrb[0].mxu0 %v1156
        %v1353 = vpop.f32.mrb[0].mxu0
        %v1354 = vadd.f32 %v1182, %v1353
        %v1355 = vpop.f32.mrb[0].mxu0
        %v1356 = vpop.f32.mrb[0].mxu0
        %v1357 = vadd.f32 %v1182, %v1356
        %v1358 = vpop.f32.mrb[0].mxu0
        %1359 = vmatprep.mubr.bf16.mxu0 0
        %1360 = vmatmul.mubr.bf16.gmra.mrb[0].mxu0 %v1157
        %v1361 = vpop.f32.mrb[0].mxu0
        %v1362 = vadd.f32 %v1182, %v1361
        %v1363 = vpop.f32.mrb[0].mxu0
        %v1364 = vpop.f32.mrb[0].mxu0
        %v1365 = vadd.f32 %v1182, %v1364
        %v1366 = vpop.f32.mrb[0].mxu0
        %1367 = vmatprep.mubr.bf16.mxu0 0
        %1368 = vmatmul.mubr.bf16.gmra.mrb[0].mxu0 %v1158
        %v1369 = vpop.f32.mrb[0].mxu0
        %v1370 = vadd.f32 %v1182, %v1369
        %v1371 = vpop.f32.mrb[0].mxu0
        %v1372 = vpop.f32.mrb[0].mxu0
        %v1373 = vadd.f32 %v1182, %v1372
        %v1374 = vpop.f32.mrb[0].mxu0
        %1375 = vmatprep.mubr.bf16.mxu0 0
        %1376 = vmatmul.mubr.bf16.gmra.mrb[0].mxu0 %v1159
        %v1377 = vpop.f32.mrb[0].mxu0
        %v1378 = vadd.f32 %v1182, %v1377
        %v1379 = vpop.f32.mrb[0].mxu0
        %v1380 = vpop.f32.mrb[0].mxu0
        %v1381 = vadd.f32 %v1182, %v1380
        %v1382 = vpop.f32.mrb[0].mxu0
        %1383 = vmatprep.mubr.bf16.mxu0 0
        %1384 = vmatmul.mubr.bf16.gmra.mrb[0].mxu0 %v1160
        %v1385 = vpop.f32.mrb[0].mxu0
        %v1386 = vadd.f32 %v1182, %v1385
        %v1387 = vpop.f32.mrb[0].mxu0
        %v1388 = vpop.f32.mrb[0].mxu0
        %v1389 = vadd.f32 %v1182, %v1388
        %v1390 = vpop.f32.mrb[0].mxu0
        %1391 = vdwg.mxu0
        %v1392 = vadd.f32 %v1266, %v1269
        %v1393 = vadd.f32 %v1392, %v1274
        %v1394 = vadd.f32 %v1393, %v1277
        %v1395 = vadd.f32 %v1394, %v1282
        %v1396 = vadd.f32 %v1395, %v1285
        %v1397 = vadd.f32 %v1396, %v1290
        %v1398 = vadd.f32 %v1397, %v1293
        %v1399 = vadd.f32 %v1398, %v1298
        %v1400 = vadd.f32 %v1399, %v1301
        %v1401 = vadd.f32 %v1400, %v1306
        %v1402 = vadd.f32 %v1401, %v1309
        %v1403 = vadd.f32 %v1402, %v1314
        %v1404 = vadd.f32 %v1403, %v1317
        %v1405 = vadd.f32 %v1404, %v1322
        %v1406 = vadd.f32 %v1405, %v1325
        %v1407 = vadd.f32 %v1406, %v1330
        %v1408 = vadd.f32 %v1407, %v1333
        %v1409 = vadd.f32 %v1408, %v1338
        %v1410 = vadd.f32 %v1409, %v1341
        %v1411 = vadd.f32 %v1410, %v1346
        %v1412 = vadd.f32 %v1411, %v1349
        %v1413 = vadd.f32 %v1412, %v1354
        %v1414 = vadd.f32 %v1413, %v1357
        %v1415 = vadd.f32 %v1414, %v1362
        %v1416 = vadd.f32 %v1415, %v1365
        %v1417 = vadd.f32 %v1416, %v1370
        %v1418 = vadd.f32 %v1417, %v1373
        %v1419 = vadd.f32 %v1418, %v1378
        %v1420 = vadd.f32 %v1419, %v1381
        %v1421 = vadd.f32 %v1420, %v1386
        %v1422 = vadd.f32 %v1421, %v1389
        %v1423 = vrot.slane %v1422, 4
        %v1424 = vadd.f32 %v1422, %v1423
        %v1425 = vrot.slane %v1424, 2
        %v1426 = vadd.f32 %v1424, %v1425
        %v1427 = vrot.slane %v1426, 1
        %v1428 = vadd.f32 %v1426, %v1427
        %v1429 = vmul.f32 %v1428, %v903
        %v1430 = vsub.f32 %v1266, %v1429
        %v1431 = vsub.f32 %v1269, %v1429
        %v1432 = vsub.f32 %v1274, %v1429
        %v1433 = vsub.f32 %v1277, %v1429
        %v1434 = vsub.f32 %v1282, %v1429
        %v1435 = vsub.f32 %v1285, %v1429
        %v1436 = vsub.f32 %v1290, %v1429
        %v1437 = vsub.f32 %v1293, %v1429
        %v1438 = vsub.f32 %v1298, %v1429
        %v1439 = vsub.f32 %v1301, %v1429
        %v1440 = vsub.f32 %v1306, %v1429
        %v1441 = vsub.f32 %v1309, %v1429
        %v1442 = vsub.f32 %v1314, %v1429
        %v1443 = vsub.f32 %v1317, %v1429
        %v1444 = vsub.f32 %v1322, %v1429
        %v1445 = vsub.f32 %v1325, %v1429
        %v1446 = vsub.f32 %v1330, %v1429
        %v1447 = vsub.f32 %v1333, %v1429
        %v1448 = vsub.f32 %v1338, %v1429
        %v1449 = vsub.f32 %v1341, %v1429
        %v1450 = vsub.f32 %v1346, %v1429
        %v1451 = vsub.f32 %v1349, %v1429
        %v1452 = vsub.f32 %v1354, %v1429
        %v1453 = vsub.f32 %v1357, %v1429
        %v1454 = vsub.f32 %v1362, %v1429
        %v1455 = vsub.f32 %v1365, %v1429
        %v1456 = vsub.f32 %v1370, %v1429
        %v1457 = vsub.f32 %v1373, %v1429
        %v1458 = vsub.f32 %v1378, %v1429
        %v1459 = vsub.f32 %v1381, %v1429
        %v1460 = vsub.f32 %v1386, %v1429
        %v1461 = vsub.f32 %v1389, %v1429
        %v1462 = vmul.f32 %v1430, %v1430
        %v1463 = vmul.f32 %v1431, %v1431
        %v1464 = vmul.f32 %v1432, %v1432
        %v1465 = vmul.f32 %v1433, %v1433
        %v1466 = vmul.f32 %v1434, %v1434
        %v1467 = vmul.f32 %v1435, %v1435
        %v1468 = vmul.f32 %v1436, %v1436
        %v1469 = vmul.f32 %v1437, %v1437
        %v1470 = vmul.f32 %v1438, %v1438
        %v1471 = vmul.f32 %v1439, %v1439
        %v1472 = vmul.f32 %v1440, %v1440
        %v1473 = vmul.f32 %v1441, %v1441
        %v1474 = vmul.f32 %v1442, %v1442
        %v1475 = vmul.f32 %v1443, %v1443
        %v1476 = vmul.f32 %v1444, %v1444
        %v1477 = vmul.f32 %v1445, %v1445
        %v1478 = vmul.f32 %v1446, %v1446
        %v1479 = vmul.f32 %v1447, %v1447
        %v1480 = vmul.f32 %v1448, %v1448
        %v1481 = vmul.f32 %v1449, %v1449
        %v1482 = vmul.f32 %v1450, %v1450
        %v1483 = vmul.f32 %v1451, %v1451
        %v1484 = vmul.f32 %v1452, %v1452
        %v1485 = vmul.f32 %v1453, %v1453
        %v1486 = vmul.f32 %v1454, %v1454
        %v1487 = vmul.f32 %v1455, %v1455
        %v1488 = vmul.f32 %v1456, %v1456
        %v1489 = vmul.f32 %v1457, %v1457
        %v1490 = vmul.f32 %v1458, %v1458
        %v1491 = vmul.f32 %v1459, %v1459
        %v1492 = vmul.f32 %v1460, %v1460
        %v1493 = vmul.f32 %v1461, %v1461
        %v1494 = vadd.f32 %v1462, %v1463
        %v1495 = vadd.f32 %v1494, %v1464
        %v1496 = vadd.f32 %v1495, %v1465
        %v1497 = vadd.f32 %v1496, %v1466
        %v1498 = vadd.f32 %v1497, %v1467
        %v1499 = vadd.f32 %v1498, %v1468
        %v1500 = vadd.f32 %v1499, %v1469
        %v1501 = vadd.f32 %v1500, %v1470
        %v1502 = vadd.f32 %v1501, %v1471
        %v1503 = vadd.f32 %v1502, %v1472
        %v1504 = vadd.f32 %v1503, %v1473
        %v1505 = vadd.f32 %v1504, %v1474
        %v1506 = vadd.f32 %v1505, %v1475
        %v1507 = vadd.f32 %v1506, %v1476
        %v1508 = vadd.f32 %v1507, %v1477
        %v1509 = vadd.f32 %v1508, %v1478
        %v1510 = vadd.f32 %v1509, %v1479
        %v1511 = vadd.f32 %v1510, %v1480
        %v1512 = vadd.f32 %v1511, %v1481
        %v1513 = vadd.f32 %v1512, %v1482
        %v1514 = vadd.f32 %v1513, %v1483
        %v1515 = vadd.f32 %v1514, %v1484
        %v1516 = vadd.f32 %v1515, %v1485
        %v1517 = vadd.f32 %v1516, %v1486
        %v1518 = vadd.f32 %v1517, %v1487
        %v1519 = vadd.f32 %v1518, %v1488
        %v1520 = vadd.f32 %v1519, %v1489
        %v1521 = vadd.f32 %v1520, %v1490
        %v1522 = vadd.f32 %v1521, %v1491
        %v1523 = vadd.f32 %v1522, %v1492
        %v1524 = vadd.f32 %v1523, %v1493
        %v1525 = vrot.slane %v1524, 4
        %v1526 = vadd.f32 %v1524, %v1525
        %v1527 = vrot.slane %v1526, 2
        %v1528 = vadd.f32 %v1526, %v1527
        %v1529 = vrot.slane %v1528, 1
        %v1530 = vadd.f32 %v1528, %v1529
        %v1531 = vmul.f32 %v1530, %v903
        %v1532 = vadd.f32 %v1531, 1e-05
        %v1533 = vrsqrt.pop %v1532
        %v1534 = vmul.f32 %v1430, %v1533
        %v1535 = vmul.f32 %v1431, %v1533
        %v1536 = vmul.f32 %v1432, %v1533
        %v1537 = vmul.f32 %v1433, %v1533
        %v1538 = vmul.f32 %v1434, %v1533
        %v1539 = vmul.f32 %v1435, %v1533
        %v1540 = vmul.f32 %v1436, %v1533
        %v1541 = vmul.f32 %v1437, %v1533
        %v1542 = vmul.f32 %v1438, %v1533
        %v1543 = vmul.f32 %v1439, %v1533
        %v1544 = vmul.f32 %v1440, %v1533
        %v1545 = vmul.f32 %v1441, %v1533
        %v1546 = vmul.f32 %v1442, %v1533
        %v1547 = vmul.f32 %v1443, %v1533
        %v1548 = vmul.f32 %v1444, %v1533
        %v1549 = vmul.f32 %v1445, %v1533
        %v1550 = vmul.f32 %v1446, %v1533
        %v1551 = vmul.f32 %v1447, %v1533
        %v1552 = vmul.f32 %v1448, %v1533
        %v1553 = vmul.f32 %v1449, %v1533
        %v1554 = vmul.f32 %v1450, %v1533
        %v1555 = vmul.f32 %v1451, %v1533
        %v1556 = vmul.f32 %v1452, %v1533
        %v1557 = vmul.f32 %v1453, %v1533
        %v1558 = vmul.f32 %v1454, %v1533
        %v1559 = vmul.f32 %v1455, %v1533
        %v1560 = vmul.f32 %v1456, %v1533
        %v1561 = vmul.f32 %v1457, %v1533
        %v1562 = vmul.f32 %v1458, %v1533
        %v1563 = vmul.f32 %v1459, %v1533
        %v1564 = vmul.f32 %v1460, %v1533
        %v1565 = vmul.f32 %v1461, %v1533
        %v1566 = vlaneseq
        %v1567 = vshrl.u32 %v1566, 7
        %v1568 = vsub.s32 4, %v1567
        %v1569 = vrot.slane %v535, %v1568
        %v1570 = vmul.f32 %v1534, %v1569
        %v1571 = vmul.f32 %v1535, %v1569
        %v1572 = vmul.f32 %v1536, %v1569
        %v1573 = vmul.f32 %v1537, %v1569
        %v1574 = vmul.f32 %v1538, %v1569
        %v1575 = vmul.f32 %v1539, %v1569
        %v1576 = vmul.f32 %v1540, %v1569
        %v1577 = vmul.f32 %v1541, %v1569
        %v1578 = vmul.f32 %v1542, %v1569
        %v1579 = vmul.f32 %v1543, %v1569
        %v1580 = vmul.f32 %v1544, %v1569
        %v1581 = vmul.f32 %v1545, %v1569
        %v1582 = vmul.f32 %v1546, %v1569
        %v1583 = vmul.f32 %v1547, %v1569
        %v1584 = vmul.f32 %v1548, %v1569
        %v1585 = vmul.f32 %v1549, %v1569
        %v1586 = vmul.f32 %v1550, %v1569
        %v1587 = vmul.f32 %v1551, %v1569
        %v1588 = vmul.f32 %v1552, %v1569
        %v1589 = vmul.f32 %v1553, %v1569
        %v1590 = vmul.f32 %v1554, %v1569
        %v1591 = vmul.f32 %v1555, %v1569
        %v1592 = vmul.f32 %v1556, %v1569
        %v1593 = vmul.f32 %v1557, %v1569
        %v1594 = vmul.f32 %v1558, %v1569
        %v1595 = vmul.f32 %v1559, %v1569
        %v1596 = vmul.f32 %v1560, %v1569
        %v1597 = vmul.f32 %v1561, %v1569
        %v1598 = vmul.f32 %v1562, %v1569
        %v1599 = vmul.f32 %v1563, %v1569
        %v1600 = vmul.f32 %v1564, %v1569
        %v1601 = vmul.f32 %v1565, %v1569
        %v1602 = vlaneseq
        %v1603 = vshrl.u32 %v1602, 7
        %v1604 = vsub.s32 5, %v1603
        %v1605 = vrot.slane %v535, %v1604
        %v1606 = vadd.f32 %v1570, %v1605
        %v1607 = vadd.f32 %v1571, %v1605
        %v1608 = vadd.f32 %v1572, %v1605
        %v1609 = vadd.f32 %v1573, %v1605
        %v1610 = vadd.f32 %v1574, %v1605
        %v1611 = vadd.f32 %v1575, %v1605
        %v1612 = vadd.f32 %v1576, %v1605
        %v1613 = vadd.f32 %v1577, %v1605
        %v1614 = vadd.f32 %v1578, %v1605
        %v1615 = vadd.f32 %v1579, %v1605
        %v1616 = vadd.f32 %v1580, %v1605
        %v1617 = vadd.f32 %v1581, %v1605
        %v1618 = vadd.f32 %v1582, %v1605
        %v1619 = vadd.f32 %v1583, %v1605
        %v1620 = vadd.f32 %v1584, %v1605
        %v1621 = vadd.f32 %v1585, %v1605
        %v1622 = vadd.f32 %v1586, %v1605
        %v1623 = vadd.f32 %v1587, %v1605
        %v1624 = vadd.f32 %v1588, %v1605
        %v1625 = vadd.f32 %v1589, %v1605
        %v1626 = vadd.f32 %v1590, %v1605
        %v1627 = vadd.f32 %v1591, %v1605
        %v1628 = vadd.f32 %v1592, %v1605
        %v1629 = vadd.f32 %v1593, %v1605
        %v1630 = vadd.f32 %v1594, %v1605
        %v1631 = vadd.f32 %v1595, %v1605
        %v1632 = vadd.f32 %v1596, %v1605
        %v1633 = vadd.f32 %v1597, %v1605
        %v1634 = vadd.f32 %v1598, %v1605
        %v1635 = vadd.f32 %v1599, %v1605
        %v1636 = vadd.f32 %v1600, %v1605
        %v1637 = vadd.f32 %v1601, %v1605
        %v1638 = vmax.f32 %v1606, 0.0
        %v1639 = vmax.f32 %v1607, 0.0
        %v1640 = vmax.f32 %v1608, 0.0
        %v1641 = vmax.f32 %v1609, 0.0
        %v1642 = vmax.f32 %v1610, 0.0
        %v1643 = vmax.f32 %v1611, 0.0
        %v1644 = vmax.f32 %v1612, 0.0
        %v1645 = vmax.f32 %v1613, 0.0
        %v1646 = vmax.f32 %v1614, 0.0
        %v1647 = vmax.f32 %v1615, 0.0
        %v1648 = vmax.f32 %v1616, 0.0
        %v1649 = vmax.f32 %v1617, 0.0
        %v1650 = vmax.f32 %v1618, 0.0
        %v1651 = vmax.f32 %v1619, 0.0
        %v1652 = vmax.f32 %v1620, 0.0
        %v1653 = vmax.f32 %v1621, 0.0
        %v1654 = vmax.f32 %v1622, 0.0
        %v1655 = vmax.f32 %v1623, 0.0
        %v1656 = vmax.f32 %v1624, 0.0
        %v1657 = vmax.f32 %v1625, 0.0
        %v1658 = vmax.f32 %v1626, 0.0
        %v1659 = vmax.f32 %v1627, 0.0
        %v1660 = vmax.f32 %v1628, 0.0
        %v1661 = vmax.f32 %v1629, 0.0
        %v1662 = vmax.f32 %v1630, 0.0
        %v1663 = vmax.f32 %v1631, 0.0
        %v1664 = vmax.f32 %v1632, 0.0
        %v1665 = vmax.f32 %v1633, 0.0
        %v1666 = vmax.f32 %v1634, 0.0
        %v1667 = vmax.f32 %v1635, 0.0
        %v1668 = vmax.f32 %v1636, 0.0
        %v1669 = vmax.f32 %v1637, 0.0
        %v1670 = vpack.c.bf16 %v1639, %v1638
        %v1671 = vpack.c.bf16 %v1641, %v1640
        %v1672 = vpack.c.bf16 %v1643, %v1642
        %v1673 = vpack.c.bf16 %v1645, %v1644
        %v1674 = vpack.c.bf16 %v1647, %v1646
        %v1675 = vpack.c.bf16 %v1649, %v1648
        %v1676 = vpack.c.bf16 %v1651, %v1650
        %v1677 = vpack.c.bf16 %v1653, %v1652
        %v1678 = vpack.c.bf16 %v1655, %v1654
        %v1679 = vpack.c.bf16 %v1657, %v1656
        %v1680 = vpack.c.bf16 %v1659, %v1658
        %v1681 = vpack.c.bf16 %v1661, %v1660
        %v1682 = vpack.c.bf16 %v1663, %v1662
        %v1683 = vpack.c.bf16 %v1665, %v1664
        %v1684 = vpack.c.bf16 %v1667, %v1666
        %v1685 = vpack.c.bf16 %v1669, %v1668
        %s1686 = smul.addr %s538, 4
        %s1687 = scalar_lea.vmem [#allocation8], %s1686
        %v1688 = vld [vmem:[%s1687] sm:$0xf]
        %v1689 = vld [vmem:[%s1687 + $0x4] sm:$0xf]
        %v1690 = vld [vmem:[%s1687 + $0x8] sm:$0xf]
        %v1691 = vld [vmem:[%s1687 + $0xc] sm:$0xf]
        %v1692 = vld [vmem:[%s1687 + $0x10] sm:$0xf]
        %v1693 = vld [vmem:[%s1687 + $0x14] sm:$0xf]
        %v1694 = vld [vmem:[%s1687 + $0x18] sm:$0xf]
        %v1695 = vld [vmem:[%s1687 + $0x1c] sm:$0xf]
        %v1696 = vld [vmem:[%s1687 + $0x20] sm:$0xf]
        %v1697 = vld [vmem:[%s1687 + $0x24] sm:$0xf]
        %v1698 = vld [vmem:[%s1687 + $0x28] sm:$0xf]
        %v1699 = vld [vmem:[%s1687 + $0x2c] sm:$0xf]
        %v1700 = vld [vmem:[%s1687 + $0x30] sm:$0xf]
        %v1701 = vld [vmem:[%s1687 + $0x34] sm:$0xf]
        %v1702 = vld [vmem:[%s1687 + $0x38] sm:$0xf]
        %v1703 = vld [vmem:[%s1687 + $0x3c] sm:$0xf]
        %v1704 = vlaneseq
        %v1705 = vshrl.u32 %v1704, 7
        %v1706 = vsub.s32 6, %v1705
        %v1707 = vrot.slane %v535, %v1706
        %v1724 = vunpack.c.l.b16 %v1688
        %v1725 = vunpack.c.l.b16 %v1689
        %v1726 = vunpack.c.l.b16 %v1690
        %v1727 = vunpack.c.l.b16 %v1691
        %v1728 = vunpack.c.l.b16 %v1692
        %v1729 = vunpack.c.l.b16 %v1693
        %v1730 = vunpack.c.l.b16 %v1694
        %v1731 = vunpack.c.l.b16 %v1695
        %v1732 = vunpack.c.l.b16 %v1696
        %v1733 = vunpack.c.l.b16 %v1697
        %v1734 = vunpack.c.l.b16 %v1698
        %v1735 = vunpack.c.l.b16 %v1699
        %v1736 = vunpack.c.l.b16 %v1700
        %v1737 = vunpack.c.l.b16 %v1701
        %v1738 = vunpack.c.l.b16 %v1702
        %v1739 = vunpack.c.l.b16 %v1703
        %v1740 = vpack.c.b16 %v1725, %v1724
        %v1741 = vpack.c.b16 %v1727, %v1726
        %v1742 = vpack.c.b16 %v1729, %v1728
        %v1743 = vpack.c.b16 %v1731, %v1730
        %v1744 = vpack.c.b16 %v1733, %v1732
        %v1745 = vpack.c.b16 %v1735, %v1734
        %v1746 = vpack.c.b16 %v1737, %v1736
        %v1747 = vpack.c.b16 %v1739, %v1738
        %1756 = vmatprep.subr.bf16.mxu0 0
        %1757 = vmatpush1.bf16.msra.mxu0 %v1740
        %1758 = vmatprep.subr.bf16.mxu0 0
        %1759 = vmatpush1.bf16.msra.mxu0 %v1741
        %1760 = vmatprep.subr.bf16.mxu0 0
        %1761 = vmatpush1.bf16.msra.mxu0 %v1742
        %1762 = vmatprep.subr.bf16.mxu0 0
        %1763 = vmatpush1.bf16.msra.mxu0 %v1743
        %1764 = vmatprep.subr.bf16.mxu0 0
        %1765 = vmatpush1.bf16.msra.mxu0 %v1744
        %1766 = vmatprep.subr.bf16.mxu0 0
        %1767 = vmatpush1.bf16.msra.mxu0 %v1745
        %1768 = vmatprep.subr.bf16.mxu0 0
        %1769 = vmatpush1.bf16.msra.mxu0 %v1746
        %1770 = vmatprep.subr.bf16.mxu0 0
        %1771 = vmatpush1.bf16.msra.mxu0 %v1747
        %1772 = vmatprep.subr.bf16.mxu0 0
        %1773 = vmatpush1.bf16.msra.mxu0 0
        %1774 = vmatprep.subr.bf16.mxu0 0
        %1775 = vmatpush1.bf16.msra.mxu0 0
        %1776 = vmatprep.subr.bf16.mxu0 0
        %1777 = vmatpush1.bf16.msra.mxu0 0
        %1778 = vmatprep.subr.bf16.mxu0 0
        %1779 = vmatpush1.bf16.msra.mxu0 0
        %1780 = vmatprep.subr.bf16.mxu0 0
        %1781 = vmatpush1.bf16.msra.mxu0 0
        %1782 = vmatprep.subr.bf16.mxu0 0
        %1783 = vmatpush1.bf16.msra.mxu0 0
        %1784 = vmatprep.subr.bf16.mxu0 0
        %1785 = vmatpush1.bf16.msra.mxu0 0
        %1786 = vmatprep.subr.bf16.mxu0 0
        %1787 = vmatpush1.bf16.msra.mxu0 0
        %1788 = vmatprep.mubr.bf16.mxu0 0
        %1789 = vmatmul.mubr.bf16.gmra.mrb[0].mxu0 %v1670
        %v1790 = vpop.f32.mrb[0].mxu0
        %v1791 = vadd.f32 %v1707, %v1790
        %v1792 = vpop.f32.mrb[0].mxu0
        %v1793 = vpop.f32.mrb[0].mxu0
        %v1794 = vadd.f32 %v1707, %v1793
        %v1795 = vpop.f32.mrb[0].mxu0
        %1796 = vmatprep.mubr.bf16.mxu0 0
        %1797 = vmatmul.mubr.bf16.gmra.mrb[0].mxu0 %v1671
        %v1798 = vpop.f32.mrb[0].mxu0
        %v1799 = vadd.f32 %v1707, %v1798
        %v1800 = vpop.f32.mrb[0].mxu0
        %v1801 = vpop.f32.mrb[0].mxu0
        %v1802 = vadd.f32 %v1707, %v1801
        %v1803 = vpop.f32.mrb[0].mxu0
        %1804 = vmatprep.mubr.bf16.mxu0 0
        %1805 = vmatmul.mubr.bf16.gmra.mrb[0].mxu0 %v1672
        %v1806 = vpop.f32.mrb[0].mxu0
        %v1807 = vadd.f32 %v1707, %v1806
        %v1808 = vpop.f32.mrb[0].mxu0
        %v1809 = vpop.f32.mrb[0].mxu0
        %v1810 = vadd.f32 %v1707, %v1809
        %v1811 = vpop.f32.mrb[0].mxu0
        %1812 = vmatprep.mubr.bf16.mxu0 0
        %1813 = vmatmul.mubr.bf16.gmra.mrb[0].mxu0 %v1673
        %v1814 = vpop.f32.mrb[0].mxu0
        %v1815 = vadd.f32 %v1707, %v1814
        %v1816 = vpop.f32.mrb[0].mxu0
        %v1817 = vpop.f32.mrb[0].mxu0
        %v1818 = vadd.f32 %v1707, %v1817
        %v1819 = vpop.f32.mrb[0].mxu0
        %1820 = vmatprep.mubr.bf16.mxu0 0
        %1821 = vmatmul.mubr.bf16.gmra.mrb[0].mxu0 %v1674
        %v1822 = vpop.f32.mrb[0].mxu0
        %v1823 = vadd.f32 %v1707, %v1822
        %v1824 = vpop.f32.mrb[0].mxu0
        %v1825 = vpop.f32.mrb[0].mxu0
        %v1826 = vadd.f32 %v1707, %v1825
        %v1827 = vpop.f32.mrb[0].mxu0
        %1828 = vmatprep.mubr.bf16.mxu0 0
        %1829 = vmatmul.mubr.bf16.gmra.mrb[0].mxu0 %v1675
        %v1830 = vpop.f32.mrb[0].mxu0
        %v1831 = vadd.f32 %v1707, %v1830
        %v1832 = vpop.f32.mrb[0].mxu0
        %v1833 = vpop.f32.mrb[0].mxu0
        %v1834 = vadd.f32 %v1707, %v1833
        %v1835 = vpop.f32.mrb[0].mxu0
        %1836 = vmatprep.mubr.bf16.mxu0 0
        %1837 = vmatmul.mubr.bf16.gmra.mrb[0].mxu0 %v1676
        %v1838 = vpop.f32.mrb[0].mxu0
        %v1839 = vadd.f32 %v1707, %v1838
        %v1840 = vpop.f32.mrb[0].mxu0
        %v1841 = vpop.f32.mrb[0].mxu0
        %v1842 = vadd.f32 %v1707, %v1841
        %v1843 = vpop.f32.mrb[0].mxu0
        %1844 = vmatprep.mubr.bf16.mxu0 0
        %1845 = vmatmul.mubr.bf16.gmra.mrb[0].mxu0 %v1677
        %v1846 = vpop.f32.mrb[0].mxu0
        %v1847 = vadd.f32 %v1707, %v1846
        %v1848 = vpop.f32.mrb[0].mxu0
        %v1849 = vpop.f32.mrb[0].mxu0
        %v1850 = vadd.f32 %v1707, %v1849
        %v1851 = vpop.f32.mrb[0].mxu0
        %1852 = vmatprep.mubr.bf16.mxu0 0
        %1853 = vmatmul.mubr.bf16.gmra.mrb[0].mxu0 %v1678
        %v1854 = vpop.f32.mrb[0].mxu0
        %v1855 = vadd.f32 %v1707, %v1854
        %v1856 = vpop.f32.mrb[0].mxu0
        %v1857 = vpop.f32.mrb[0].mxu0
        %v1858 = vadd.f32 %v1707, %v1857
        %v1859 = vpop.f32.mrb[0].mxu0
        %1860 = vmatprep.mubr.bf16.mxu0 0
        %1861 = vmatmul.mubr.bf16.gmra.mrb[0].mxu0 %v1679
        %v1862 = vpop.f32.mrb[0].mxu0
        %v1863 = vadd.f32 %v1707, %v1862
        %v1864 = vpop.f32.mrb[0].mxu0
        %v1865 = vpop.f32.mrb[0].mxu0
        %v1866 = vadd.f32 %v1707, %v1865
        %v1867 = vpop.f32.mrb[0].mxu0
        %1868 = vmatprep.mubr.bf16.mxu0 0
        %1869 = vmatmul.mubr.bf16.gmra.mrb[0].mxu0 %v1680
        %v1870 = vpop.f32.mrb[0].mxu0
        %v1871 = vadd.f32 %v1707, %v1870
        %v1872 = vpop.f32.mrb[0].mxu0
        %v1873 = vpop.f32.mrb[0].mxu0
        %v1874 = vadd.f32 %v1707, %v1873
        %v1875 = vpop.f32.mrb[0].mxu0
        %1876 = vmatprep.mubr.bf16.mxu0 0
        %1877 = vmatmul.mubr.bf16.gmra.mrb[0].mxu0 %v1681
        %v1878 = vpop.f32.mrb[0].mxu0
        %v1879 = vadd.f32 %v1707, %v1878
        %v1880 = vpop.f32.mrb[0].mxu0
        %v1881 = vpop.f32.mrb[0].mxu0
        %v1882 = vadd.f32 %v1707, %v1881
        %v1883 = vpop.f32.mrb[0].mxu0
        %1884 = vmatprep.mubr.bf16.mxu0 0
        %1885 = vmatmul.mubr.bf16.gmra.mrb[0].mxu0 %v1682
        %v1886 = vpop.f32.mrb[0].mxu0
        %v1887 = vadd.f32 %v1707, %v1886
        %v1888 = vpop.f32.mrb[0].mxu0
        %v1889 = vpop.f32.mrb[0].mxu0
        %v1890 = vadd.f32 %v1707, %v1889
        %v1891 = vpop.f32.mrb[0].mxu0
        %1892 = vmatprep.mubr.bf16.mxu0 0
        %1893 = vmatmul.mubr.bf16.gmra.mrb[0].mxu0 %v1683
        %v1894 = vpop.f32.mrb[0].mxu0
        %v1895 = vadd.f32 %v1707, %v1894
        %v1896 = vpop.f32.mrb[0].mxu0
        %v1897 = vpop.f32.mrb[0].mxu0
        %v1898 = vadd.f32 %v1707, %v1897
        %v1899 = vpop.f32.mrb[0].mxu0
        %1900 = vmatprep.mubr.bf16.mxu0 0
        %1901 = vmatmul.mubr.bf16.gmra.mrb[0].mxu0 %v1684
        %v1902 = vpop.f32.mrb[0].mxu0
        %v1903 = vadd.f32 %v1707, %v1902
        %v1904 = vpop.f32.mrb[0].mxu0
        %v1905 = vpop.f32.mrb[0].mxu0
        %v1906 = vadd.f32 %v1707, %v1905
        %v1907 = vpop.f32.mrb[0].mxu0
        %1908 = vmatprep.mubr.bf16.mxu0 0
        %1909 = vmatmul.mubr.bf16.gmra.mrb[0].mxu0 %v1685
        %v1910 = vpop.f32.mrb[0].mxu0
        %v1911 = vadd.f32 %v1707, %v1910
        %v1912 = vpop.f32.mrb[0].mxu0
        %v1913 = vpop.f32.mrb[0].mxu0
        %v1914 = vadd.f32 %v1707, %v1913
        %v1915 = vpop.f32.mrb[0].mxu0
        %1916 = vdwg.mxu0
        %v1917 = vtanh.pop %v1791
        %v1918 = vtanh.pop %v1794
        %v1919 = vtanh.pop %v1799
        %v1920 = vtanh.pop %v1802
        %v1921 = vtanh.pop %v1807
        %v1922 = vtanh.pop %v1810
        %v1923 = vtanh.pop %v1815
        %v1924 = vtanh.pop %v1818
        %v1925 = vtanh.pop %v1823
        %v1926 = vtanh.pop %v1826
        %v1927 = vtanh.pop %v1831
        %v1928 = vtanh.pop %v1834
        %v1929 = vtanh.pop %v1839
        %v1930 = vtanh.pop %v1842
        %v1931 = vtanh.pop %v1847
        %v1932 = vtanh.pop %v1850
        %v1933 = vtanh.pop %v1855
        %v1934 = vtanh.pop %v1858
        %v1935 = vtanh.pop %v1863
        %v1936 = vtanh.pop %v1866
        %v1937 = vtanh.pop %v1871
        %v1938 = vtanh.pop %v1874
        %v1939 = vtanh.pop %v1879
        %v1940 = vtanh.pop %v1882
        %v1941 = vtanh.pop %v1887
        %v1942 = vtanh.pop %v1890
        %v1943 = vtanh.pop %v1895
        %v1944 = vtanh.pop %v1898
        %v1945 = vtanh.pop %v1903
        %v1946 = vtanh.pop %v1906
        %v1947 = vtanh.pop %v1911
        %v1948 = vtanh.pop %v1914
        %1949 = vst [vmem:[%s491] sm:$0xff] %v1917
        %1950 = vst [vmem:[%s491 + $0x8] sm:$0xff] %v1918
        %1951 = vst [vmem:[%s491 + $0x10] sm:$0xff] %v1919
        %1952 = vst [vmem:[%s491 + $0x18] sm:$0xff] %v1920
        %1953 = vst [vmem:[%s491 + $0x20] sm:$0xff] %v1921
        %1954 = vst [vmem:[%s491 + $0x28] sm:$0xff] %v1922
        %1955 = vst [vmem:[%s491 + $0x30] sm:$0xff] %v1923
        %1956 = vst [vmem:[%s491 + $0x38] sm:$0xff] %v1924
        %1957 = vst [vmem:[%s491 + $0x40] sm:$0xff] %v1925
        %1958 = vst [vmem:[%s491 + $0x48] sm:$0xff] %v1926
        %1959 = vst [vmem:[%s491 + $0x50] sm:$0xff] %v1927
        %1960 = vst [vmem:[%s491 + $0x58] sm:$0xff] %v1928
        %1961 = vst [vmem:[%s491 + $0x60] sm:$0xff] %v1929
        %1962 = vst [vmem:[%s491 + $0x68] sm:$0xff] %v1930
        %1963 = vst [vmem:[%s491 + $0x70] sm:$0xff] %v1931
        %1964 = vst [vmem:[%s491 + $0x78] sm:$0xff] %v1932
        %v1965 = vpack.c.bf16 %v1918, %v1917
        %v1966 = vpack.c.bf16 %v1920, %v1919
        %v1967 = vpack.c.bf16 %v1922, %v1921
        %v1968 = vpack.c.bf16 %v1924, %v1923
        %v1969 = vpack.c.bf16 %v1926, %v1925
        %v1970 = vpack.c.bf16 %v1928, %v1927
        %v1971 = vpack.c.bf16 %v1930, %v1929
        %v1972 = vpack.c.bf16 %v1932, %v1931
        %v1973 = vpack.c.bf16 %v1934, %v1933
        %v1974 = vpack.c.bf16 %v1936, %v1935
        %v1975 = vpack.c.bf16 %v1938, %v1937
        %v1976 = vpack.c.bf16 %v1940, %v1939
        %v1977 = vpack.c.bf16 %v1942, %v1941
        %v1978 = vpack.c.bf16 %v1944, %v1943
        %v1979 = vpack.c.bf16 %v1946, %v1945
        %v1980 = vpack.c.bf16 %v1948, %v1947
        %s1981 = smul.addr %s538, 4
        %s1982 = scalar_lea.vmem %s6, %s1981
        %v1983 = vld [vmem:[%s1982] sm:$0xf]
        %v1984 = vld [vmem:[%s1982 + $0x4] sm:$0xf]
        %v1985 = vld [vmem:[%s1982 + $0x8] sm:$0xf]
        %v1986 = vld [vmem:[%s1982 + $0xc] sm:$0xf]
        %v1987 = vld [vmem:[%s1982 + $0x10] sm:$0xf]
        %v1988 = vld [vmem:[%s1982 + $0x14] sm:$0xf]
        %v1989 = vld [vmem:[%s1982 + $0x18] sm:$0xf]
        %v1990 = vld [vmem:[%s1982 + $0x1c] sm:$0xf]
        %v1991 = vld [vmem:[%s1982 + $0x20] sm:$0xf]
        %v1992 = vld [vmem:[%s1982 + $0x24] sm:$0xf]
        %v1993 = vld [vmem:[%s1982 + $0x28] sm:$0xf]
        %v1994 = vld [vmem:[%s1982 + $0x2c] sm:$0xf]
        %v1995 = vld [vmem:[%s1982 + $0x30] sm:$0xf]
        %v1996 = vld [vmem:[%s1982 + $0x34] sm:$0xf]
        %v1997 = vld [vmem:[%s1982 + $0x38] sm:$0xf]
        %v1998 = vld [vmem:[%s1982 + $0x3c] sm:$0xf]
        %v2015 = vunpack.c.l.b16 %v1983
        %v2016 = vunpack.c.l.b16 %v1984
        %v2017 = vunpack.c.l.b16 %v1985
        %v2018 = vunpack.c.l.b16 %v1986
        %v2019 = vunpack.c.l.b16 %v1987
        %v2020 = vunpack.c.l.b16 %v1988
        %v2021 = vunpack.c.l.b16 %v1989
        %v2022 = vunpack.c.l.b16 %v1990
        %v2023 = vunpack.c.l.b16 %v1991
        %v2024 = vunpack.c.l.b16 %v1992
        %v2025 = vunpack.c.l.b16 %v1993
        %v2026 = vunpack.c.l.b16 %v1994
        %v2027 = vunpack.c.l.b16 %v1995
        %v2028 = vunpack.c.l.b16 %v1996
        %v2029 = vunpack.c.l.b16 %v1997
        %v2030 = vunpack.c.l.b16 %v1998
        %v2031 = vpack.c.b16 %v2016, %v2015
        %v2032 = vpack.c.b16 %v2018, %v2017
        %v2033 = vpack.c.b16 %v2020, %v2019
        %v2034 = vpack.c.b16 %v2022, %v2021
        %v2035 = vpack.c.b16 %v2024, %v2023
        %v2036 = vpack.c.b16 %v2026, %v2025
        %v2037 = vpack.c.b16 %v2028, %v2027
        %v2038 = vpack.c.b16 %v2030, %v2029
        %2047 = vmatprep.subr.bf16.mxu0 0
        %2048 = vmatpush1.bf16.msra.mxu0 %v2031
        %2049 = vmatprep.subr.bf16.mxu0 0
        %2050 = vmatpush1.bf16.msra.mxu0 %v2032
        %2051 = vmatprep.subr.bf16.mxu0 0
        %2052 = vmatpush1.bf16.msra.mxu0 %v2033
        %2053 = vmatprep.subr.bf16.mxu0 0
        %2054 = vmatpush1.bf16.msra.mxu0 %v2034
        %2055 = vmatprep.subr.bf16.mxu0 0
        %2056 = vmatpush1.bf16.msra.mxu0 %v2035
        %2057 = vmatprep.subr.bf16.mxu0 0
        %2058 = vmatpush1.bf16.msra.mxu0 %v2036
        %2059 = vmatprep.subr.bf16.mxu0 0
        %2060 = vmatpush1.bf16.msra.mxu0 %v2037
        %2061 = vmatprep.subr.bf16.mxu0 0
        %2062 = vmatpush1.bf16.msra.mxu0 %v2038
        %2063 = vmatprep.subr.bf16.mxu0 0
        %2064 = vmatpush1.bf16.msra.mxu0 0
        %2065 = vmatprep.subr.bf16.mxu0 0
        %2066 = vmatpush1.bf16.msra.mxu0 0
        %2067 = vmatprep.subr.bf16.mxu0 0
        %2068 = vmatpush1.bf16.msra.mxu0 0
        %2069 = vmatprep.subr.bf16.mxu0 0
        %2070 = vmatpush1.bf16.msra.mxu0 0
        %2071 = vmatprep.subr.bf16.mxu0 0
        %2072 = vmatpush1.bf16.msra.mxu0 0
        %2073 = vmatprep.subr.bf16.mxu0 0
        %2074 = vmatpush1.bf16.msra.mxu0 0
        %2075 = vmatprep.subr.bf16.mxu0 0
        %2076 = vmatpush1.bf16.msra.mxu0 0
        %2077 = vmatprep.subr.bf16.mxu0 0
        %2078 = vmatpush1.bf16.msra.mxu0 0
        %2079 = vmatprep.mubr.bf16.mxu0 0
        %2080 = vmatmul.mubr.bf16.gmra.mrb[0].mxu0 %v1965
        %v2081 = vpop.f32.mrb[0].mxu0
        %v2082 = vadd.f32 0.0, %v2081
        %v2083 = vpop.f32.mrb[0].mxu0
        %v2084 = vpop.f32.mrb[0].mxu0
        %v2085 = vadd.f32 0.0, %v2084
        %v2086 = vpop.f32.mrb[0].mxu0
        %2087 = vmatprep.mubr.bf16.mxu0 0
        %2088 = vmatmul.mubr.bf16.gmra.mrb[0].mxu0 %v1966
        %v2089 = vpop.f32.mrb[0].mxu0
        %v2090 = vadd.f32 0.0, %v2089
        %v2091 = vpop.f32.mrb[0].mxu0
        %v2092 = vpop.f32.mrb[0].mxu0
        %v2093 = vadd.f32 0.0, %v2092
        %v2094 = vpop.f32.mrb[0].mxu0
        %2095 = vmatprep.mubr.bf16.mxu0 0
        %2096 = vmatmul.mubr.bf16.gmra.mrb[0].mxu0 %v1967
        %v2097 = vpop.f32.mrb[0].mxu0
        %v2098 = vadd.f32 0.0, %v2097
        %v2099 = vpop.f32.mrb[0].mxu0
        %v2100 = vpop.f32.mrb[0].mxu0
        %v2101 = vadd.f32 0.0, %v2100
        %v2102 = vpop.f32.mrb[0].mxu0
        %2103 = vmatprep.mubr.bf16.mxu0 0
        %2104 = vmatmul.mubr.bf16.gmra.mrb[0].mxu0 %v1968
        %v2105 = vpop.f32.mrb[0].mxu0
        %v2106 = vadd.f32 0.0, %v2105
        %v2107 = vpop.f32.mrb[0].mxu0
        %v2108 = vpop.f32.mrb[0].mxu0
        %v2109 = vadd.f32 0.0, %v2108
        %v2110 = vpop.f32.mrb[0].mxu0
        %2111 = vmatprep.mubr.bf16.mxu0 0
        %2112 = vmatmul.mubr.bf16.gmra.mrb[0].mxu0 %v1969
        %v2113 = vpop.f32.mrb[0].mxu0
        %v2114 = vadd.f32 0.0, %v2113
        %v2115 = vpop.f32.mrb[0].mxu0
        %v2116 = vpop.f32.mrb[0].mxu0
        %v2117 = vadd.f32 0.0, %v2116
        %v2118 = vpop.f32.mrb[0].mxu0
        %2119 = vmatprep.mubr.bf16.mxu0 0
        %2120 = vmatmul.mubr.bf16.gmra.mrb[0].mxu0 %v1970
        %v2121 = vpop.f32.mrb[0].mxu0
        %v2122 = vadd.f32 0.0, %v2121
        %v2123 = vpop.f32.mrb[0].mxu0
        %v2124 = vpop.f32.mrb[0].mxu0
        %v2125 = vadd.f32 0.0, %v2124
        %v2126 = vpop.f32.mrb[0].mxu0
        %2127 = vmatprep.mubr.bf16.mxu0 0
        %2128 = vmatmul.mubr.bf16.gmra.mrb[0].mxu0 %v1971
        %v2129 = vpop.f32.mrb[0].mxu0
        %v2130 = vadd.f32 0.0, %v2129
        %v2131 = vpop.f32.mrb[0].mxu0
        %v2132 = vpop.f32.mrb[0].mxu0
        %v2133 = vadd.f32 0.0, %v2132
        %v2134 = vpop.f32.mrb[0].mxu0
        %2135 = vmatprep.mubr.bf16.mxu0 0
        %2136 = vmatmul.mubr.bf16.gmra.mrb[0].mxu0 %v1972
        %v2137 = vpop.f32.mrb[0].mxu0
        %v2138 = vadd.f32 0.0, %v2137
        %v2139 = vpop.f32.mrb[0].mxu0
        %v2140 = vpop.f32.mrb[0].mxu0
        %v2141 = vadd.f32 0.0, %v2140
        %v2142 = vpop.f32.mrb[0].mxu0
        %2143 = vmatprep.mubr.bf16.mxu0 0
        %2144 = vmatmul.mubr.bf16.gmra.mrb[0].mxu0 %v1973
        %v2145 = vpop.f32.mrb[0].mxu0
        %v2146 = vadd.f32 0.0, %v2145
        %v2147 = vpop.f32.mrb[0].mxu0
        %v2148 = vpop.f32.mrb[0].mxu0
        %v2149 = vadd.f32 0.0, %v2148
        %v2150 = vpop.f32.mrb[0].mxu0
        %2151 = vmatprep.mubr.bf16.mxu0 0
        %2152 = vmatmul.mubr.bf16.gmra.mrb[0].mxu0 %v1974
        %v2153 = vpop.f32.mrb[0].mxu0
        %v2154 = vadd.f32 0.0, %v2153
        %v2155 = vpop.f32.mrb[0].mxu0
        %v2156 = vpop.f32.mrb[0].mxu0
        %v2157 = vadd.f32 0.0, %v2156
        %v2158 = vpop.f32.mrb[0].mxu0
        %2159 = vmatprep.mubr.bf16.mxu0 0
        %2160 = vmatmul.mubr.bf16.gmra.mrb[0].mxu0 %v1975
        %v2161 = vpop.f32.mrb[0].mxu0
        %v2162 = vadd.f32 0.0, %v2161
        %v2163 = vpop.f32.mrb[0].mxu0
        %v2164 = vpop.f32.mrb[0].mxu0
        %v2165 = vadd.f32 0.0, %v2164
        %v2166 = vpop.f32.mrb[0].mxu0
        %2167 = vmatprep.mubr.bf16.mxu0 0
        %2168 = vmatmul.mubr.bf16.gmra.mrb[0].mxu0 %v1976
        %v2169 = vpop.f32.mrb[0].mxu0
        %v2170 = vadd.f32 0.0, %v2169
        %v2171 = vpop.f32.mrb[0].mxu0
        %v2172 = vpop.f32.mrb[0].mxu0
        %v2173 = vadd.f32 0.0, %v2172
        %v2174 = vpop.f32.mrb[0].mxu0
        %2175 = vmatprep.mubr.bf16.mxu0 0
        %2176 = vmatmul.mubr.bf16.gmra.mrb[0].mxu0 %v1977
        %v2177 = vpop.f32.mrb[0].mxu0
        %v2178 = vadd.f32 0.0, %v2177
        %v2179 = vpop.f32.mrb[0].mxu0
        %v2180 = vpop.f32.mrb[0].mxu0
        %v2181 = vadd.f32 0.0, %v2180
        %v2182 = vpop.f32.mrb[0].mxu0
        %2183 = vmatprep.mubr.bf16.mxu0 0
        %2184 = vmatmul.mubr.bf16.gmra.mrb[0].mxu0 %v1978
        %v2185 = vpop.f32.mrb[0].mxu0
        %v2186 = vadd.f32 0.0, %v2185
        %v2187 = vpop.f32.mrb[0].mxu0
        %v2188 = vpop.f32.mrb[0].mxu0
        %v2189 = vadd.f32 0.0, %v2188
        %v2190 = vpop.f32.mrb[0].mxu0
        %2191 = vmatprep.mubr.bf16.mxu0 0
        %2192 = vmatmul.mubr.bf16.gmra.mrb[0].mxu0 %v1979
        %v2193 = vpop.f32.mrb[0].mxu0
        %v2194 = vadd.f32 0.0, %v2193
        %v2195 = vpop.f32.mrb[0].mxu0
        %v2196 = vpop.f32.mrb[0].mxu0
        %v2197 = vadd.f32 0.0, %v2196
        %v2198 = vpop.f32.mrb[0].mxu0
        %2199 = vmatprep.mubr.bf16.mxu0 0
        %2200 = vmatmul.mubr.bf16.gmra.mrb[0].mxu0 %v1980
        %v2201 = vpop.f32.mrb[0].mxu0
        %v2202 = vadd.f32 0.0, %v2201
        %v2203 = vpop.f32.mrb[0].mxu0
        %v2204 = vpop.f32.mrb[0].mxu0
        %v2205 = vadd.f32 0.0, %v2204
        %v2206 = vpop.f32.mrb[0].mxu0
        %2207 = vdwg.mxu0
        %v2208 = vpack.c.bf16 %v532, %v532
        %s2209 = smul.u32 %s35, 4
        %s2210 = smul.addr %s2209, 4
        %s2211 = scalar_lea.vmem [#allocation10], %s2210
        %v2212 = vld [vmem:[%s2211] sm:$0xf]
        %v2213 = vld [vmem:[%s2211 + $0x4] sm:$0xf]
        %v2214 = vld [vmem:[%s2211 + $0x8] sm:$0xf]
        %v2215 = vld [vmem:[%s2211 + $0xc] sm:$0xf]
        %v2220 = vunpack.c.l.b16 %v2212
        %v2221 = vunpack.c.l.b16 %v2213
        %v2222 = vunpack.c.l.b16 %v2214
        %v2223 = vunpack.c.l.b16 %v2215
        %v2224 = vpack.c.b16 %v2221, %v2220
        %v2225 = vpack.c.b16 %v2223, %v2222
        %vm2228 = vcmask 261120
        %v2230 = vsel %vm2228, %v2208, 0
        %2232 = vmatprep.subr.bf16.mxu0 0
        %2233 = vmatpush1.bf16.msra.mxu0 %v2224
        %2234 = vmatprep.subr.bf16.mxu0 0
        %2235 = vmatpush1.bf16.msra.mxu0 %v2225
        %2236 = vmatprep.subr.bf16.mxu0 0
        %2237 = vmatpush1.bf16.msra.mxu0 0
        %2238 = vmatprep.subr.bf16.mxu0 0
        %2239 = vmatpush1.bf16.msra.mxu0 0
        %2240 = vmatprep.subr.bf16.mxu0 0
        %2241 = vmatpush1.bf16.msra.mxu0 0
        %2242 = vmatprep.subr.bf16.mxu0 0
        %2243 = vmatpush1.bf16.msra.mxu0 0
        %2244 = vmatprep.subr.bf16.mxu0 0
        %2245 = vmatpush1.bf16.msra.mxu0 0
        %2246 = vmatprep.subr.bf16.mxu0 0
        %2247 = vmatpush1.bf16.msra.mxu0 0
        %2248 = vmatprep.subr.bf16.mxu0 0
        %2249 = vmatpush1.bf16.msra.mxu0 0
        %2250 = vmatprep.subr.bf16.mxu0 0
        %2251 = vmatpush1.bf16.msra.mxu0 0
        %2252 = vmatprep.subr.bf16.mxu0 0
        %2253 = vmatpush1.bf16.msra.mxu0 0
        %2254 = vmatprep.subr.bf16.mxu0 0
        %2255 = vmatpush1.bf16.msra.mxu0 0
        %2256 = vmatprep.subr.bf16.mxu0 0
        %2257 = vmatpush1.bf16.msra.mxu0 0
        %2258 = vmatprep.subr.bf16.mxu0 0
        %2259 = vmatpush1.bf16.msra.mxu0 0
        %2260 = vmatprep.subr.bf16.mxu0 0
        %2261 = vmatpush1.bf16.msra.mxu0 0
        %2262 = vmatprep.subr.bf16.mxu0 0
        %2263 = vmatpush1.bf16.msra.mxu0 0
        %2264 = vmatprep.mubr.bf16.mxu0 0
        %2265 = vmatmul.mubr.bf16.gmra.mrb[0].mxu0 %v2230
        %v2266 = vpop.f32.mrb[0].mxu0
        %v2267 = vadd.f32 0.0, %v2266
        %v2268 = vpop.f32.mrb[0].mxu0
        %v2269 = vpop.f32.mrb[0].mxu0
        %v2270 = vpop.f32.mrb[0].mxu0
        %2271 = vdwg.mxu0
        %v2274 = vunpack.c.l.s4 1966171168
        %v2275 = vunpack.c.0.s8 %v2274
        %v2276 = vlaneseq
        %v2277 = vshrl.u32 %v2276, 7
        %v2278 = vsub.s32 %v2275, %v2277
        %v2279 = vrot.slane %v2267, %v2278
        %v2280 = vcombine.high %v2279, %v2279
        %v2282 = vunpack.c.l.s4 1966171168
        %v2283 = vunpack.c.0.s8 %v2282
        %v2284 = vlaneseq
        %v2285 = vshrl.u32 %v2284, 7
        %v2286 = vsub.s32 %v2283, %v2285
        %v2287 = vrot.slane %v2279, %v2286
        %v2289 = vunpack.c.l.s4 1966171168
        %v2290 = vunpack.c.0.s8 %v2289
        %v2291 = vlaneseq
        %v2292 = vshrl.u32 %v2291, 7
        %v2293 = vsub.s32 %v2290, %v2292
        %v2294 = vrot.slane %v2280, %v2293
        %v2295 = vlaneseq
        %v2296 = vshrl.u32 %v2295, 7
        %v2297 = vsub.s32 0, %v2296
        %v2298 = vrot.slane %v2287, %v2297
        %v2299 = vlaneseq
        %v2300 = vshrl.u32 %v2299, 7
        %v2301 = vsub.s32 0, %v2300
        %v2302 = vrot.slane %v2294, %v2301
        %v2305 = vadd.f32 %v2082, %v2298
        %v2306 = vadd.f32 %v2085, %v2298
        %v2307 = vadd.f32 %v2090, %v2298
        %v2308 = vadd.f32 %v2093, %v2298
        %v2309 = vadd.f32 %v2098, %v2298
        %v2310 = vadd.f32 %v2101, %v2298
        %v2311 = vadd.f32 %v2106, %v2298
        %v2312 = vadd.f32 %v2109, %v2298
        %v2313 = vadd.f32 %v2114, %v2298
        %v2314 = vadd.f32 %v2117, %v2298
        %v2315 = vadd.f32 %v2122, %v2298
        %v2316 = vadd.f32 %v2125, %v2298
        %v2317 = vadd.f32 %v2130, %v2298
        %v2318 = vadd.f32 %v2133, %v2298
        %v2319 = vadd.f32 %v2138, %v2298
        %v2320 = vadd.f32 %v2141, %v2298
        %v2321 = vadd.f32 %v2146, %v2302
        %v2322 = vadd.f32 %v2149, %v2302
        %v2323 = vadd.f32 %v2154, %v2302
        %v2324 = vadd.f32 %v2157, %v2302
        %v2325 = vadd.f32 %v2162, %v2302
        %v2326 = vadd.f32 %v2165, %v2302
        %v2327 = vadd.f32 %v2170, %v2302
        %v2328 = vadd.f32 %v2173, %v2302
        %v2329 = vadd.f32 %v2178, %v2302
        %v2330 = vadd.f32 %v2181, %v2302
        %v2331 = vadd.f32 %v2186, %v2302
        %v2332 = vadd.f32 %v2189, %v2302
        %v2333 = vadd.f32 %v2194, %v2302
        %v2334 = vadd.f32 %v2197, %v2302
        %v2335 = vadd.f32 %v2202, %v2302
        %v2336 = vadd.f32 %v2205, %v2302
        %v2337 = vlaneseq
        %v2338 = vshrl.u32 %v2337, 7
        %v2339 = vsub.s32 7, %v2338
        %v2340 = vrot.slane %v535, %v2339
        %v2341 = vadd.f32 %v2305, %v2340
        %v2342 = vadd.f32 %v2306, %v2340
        %v2343 = vadd.f32 %v2307, %v2340
        %v2344 = vadd.f32 %v2308, %v2340
        %v2345 = vadd.f32 %v2309, %v2340
        %v2346 = vadd.f32 %v2310, %v2340
        %v2347 = vadd.f32 %v2311, %v2340
        %v2348 = vadd.f32 %v2312, %v2340
        %v2349 = vadd.f32 %v2313, %v2340
        %v2350 = vadd.f32 %v2314, %v2340
        %v2351 = vadd.f32 %v2315, %v2340
        %v2352 = vadd.f32 %v2316, %v2340
        %v2353 = vadd.f32 %v2317, %v2340
        %v2354 = vadd.f32 %v2318, %v2340
        %v2355 = vadd.f32 %v2319, %v2340
        %v2356 = vadd.f32 %v2320, %v2340
        %v2357 = vadd.f32 %v2321, %v2340
        %v2358 = vadd.f32 %v2322, %v2340
        %v2359 = vadd.f32 %v2323, %v2340
        %v2360 = vadd.f32 %v2324, %v2340
        %v2361 = vadd.f32 %v2325, %v2340
        %v2362 = vadd.f32 %v2326, %v2340
        %v2363 = vadd.f32 %v2327, %v2340
        %v2364 = vadd.f32 %v2328, %v2340
        %v2365 = vadd.f32 %v2329, %v2340
        %v2366 = vadd.f32 %v2330, %v2340
        %v2367 = vadd.f32 %v2331, %v2340
        %v2368 = vadd.f32 %v2332, %v2340
        %v2369 = vadd.f32 %v2333, %v2340
        %v2370 = vadd.f32 %v2334, %v2340
        %v2371 = vadd.f32 %v2335, %v2340
        %v2372 = vadd.f32 %v2336, %v2340
        %vm2373 = vcmask 285696
        %v2374 = vsel %vm2373, %v2341, 0.0
        %v2375 = vsel %vm2373, %v2342, 0.0
        %v2376 = vadd.f32 %v2374, %v2375
        %v2377 = vsel %vm2373, %v2343, 0.0
        %v2378 = vadd.f32 %v2376, %v2377
        %v2379 = vsel %vm2373, %v2344, 0.0
        %v2380 = vadd.f32 %v2378, %v2379
        %v2381 = vsel %vm2373, %v2345, 0.0
        %v2382 = vadd.f32 %v2380, %v2381
        %v2383 = vsel %vm2373, %v2346, 0.0
        %v2384 = vadd.f32 %v2382, %v2383
        %v2385 = vsel %vm2373, %v2347, 0.0
        %v2386 = vadd.f32 %v2384, %v2385
        %v2387 = vsel %vm2373, %v2348, 0.0
        %v2388 = vadd.f32 %v2386, %v2387
        %v2389 = vsel %vm2373, %v2349, 0.0
        %v2390 = vadd.f32 %v2388, %v2389
        %v2391 = vsel %vm2373, %v2350, 0.0
        %v2392 = vadd.f32 %v2390, %v2391
        %v2393 = vsel %vm2373, %v2351, 0.0
        %v2394 = vadd.f32 %v2392, %v2393
        %v2395 = vsel %vm2373, %v2352, 0.0
        %v2396 = vadd.f32 %v2394, %v2395
        %v2397 = vsel %vm2373, %v2353, 0.0
        %v2398 = vadd.f32 %v2396, %v2397
        %v2399 = vsel %vm2373, %v2354, 0.0
        %v2400 = vadd.f32 %v2398, %v2399
        %v2401 = vsel %vm2373, %v2355, 0.0
        %v2402 = vadd.f32 %v2400, %v2401
        %v2403 = vsel %vm2373, %v2356, 0.0
        %v2404 = vadd.f32 %v2402, %v2403
        %v2405 = vsel %vm2373, %v2357, 0.0
        %v2406 = vadd.f32 %v2404, %v2405
        %v2407 = vsel %vm2373, %v2358, 0.0
        %v2408 = vadd.f32 %v2406, %v2407
        %v2409 = vsel %vm2373, %v2359, 0.0
        %v2410 = vadd.f32 %v2408, %v2409
        %v2411 = vsel %vm2373, %v2360, 0.0
        %v2412 = vadd.f32 %v2410, %v2411
        %v2413 = vsel %vm2373, %v2361, 0.0
        %v2414 = vadd.f32 %v2412, %v2413
        %v2415 = vsel %vm2373, %v2362, 0.0
        %v2416 = vadd.f32 %v2414, %v2415
        %v2417 = vsel %vm2373, %v2363, 0.0
        %v2418 = vadd.f32 %v2416, %v2417
        %v2419 = vsel %vm2373, %v2364, 0.0
        %v2420 = vadd.f32 %v2418, %v2419
        %v2421 = vsel %vm2373, %v2365, 0.0
        %v2422 = vadd.f32 %v2420, %v2421
        %v2423 = vsel %vm2373, %v2366, 0.0
        %v2424 = vadd.f32 %v2422, %v2423
        %v2425 = vsel %vm2373, %v2367, 0.0
        %v2426 = vadd.f32 %v2424, %v2425
        %v2427 = vsel %vm2373, %v2368, 0.0
        %v2428 = vadd.f32 %v2426, %v2427
        %v2429 = vsel %vm2373, %v2369, 0.0
        %v2430 = vadd.f32 %v2428, %v2429
        %v2431 = vsel %vm2373, %v2370, 0.0
        %v2432 = vadd.f32 %v2430, %v2431
        %v2433 = vsel %vm2373, %v2371, 0.0
        %v2434 = vadd.f32 %v2432, %v2433
        %v2435 = vsel %vm2373, %v2372, 0.0
        %v2436 = vadd.f32 %v2434, %v2435
        %v2437 = vrot.slane %v2436, 4
        %v2438 = vadd.f32 %v2436, %v2437
        %v2439 = vrot.slane %v2438, 2
        %v2440 = vadd.f32 %v2438, %v2439
        %v2441 = vrot.slane %v2440, 1
        %v2442 = vadd.f32 %v2440, %v2441
        %v2443 = vmul.f32 %v2442, %v903
        %v2444 = vsub.f32 %v2341, %v2443
        %v2445 = vsub.f32 %v2342, %v2443
        %v2446 = vsub.f32 %v2343, %v2443
        %v2447 = vsub.f32 %v2344, %v2443
        %v2448 = vsub.f32 %v2345, %v2443
        %v2449 = vsub.f32 %v2346, %v2443
        %v2450 = vsub.f32 %v2347, %v2443
        %v2451 = vsub.f32 %v2348, %v2443
        %v2452 = vsub.f32 %v2349, %v2443
        %v2453 = vsub.f32 %v2350, %v2443
        %v2454 = vsub.f32 %v2351, %v2443
        %v2455 = vsub.f32 %v2352, %v2443
        %v2456 = vsub.f32 %v2353, %v2443
        %v2457 = vsub.f32 %v2354, %v2443
        %v2458 = vsub.f32 %v2355, %v2443
        %v2459 = vsub.f32 %v2356, %v2443
        %v2460 = vsub.f32 %v2357, %v2443
        %v2461 = vsub.f32 %v2358, %v2443
        %v2462 = vsub.f32 %v2359, %v2443
        %v2463 = vsub.f32 %v2360, %v2443
        %v2464 = vsub.f32 %v2361, %v2443
        %v2465 = vsub.f32 %v2362, %v2443
        %v2466 = vsub.f32 %v2363, %v2443
        %v2467 = vsub.f32 %v2364, %v2443
        %v2468 = vsub.f32 %v2365, %v2443
        %v2469 = vsub.f32 %v2366, %v2443
        %v2470 = vsub.f32 %v2367, %v2443
        %v2471 = vsub.f32 %v2368, %v2443
        %v2472 = vsub.f32 %v2369, %v2443
        %v2473 = vsub.f32 %v2370, %v2443
        %v2474 = vsub.f32 %v2371, %v2443
        %v2475 = vsub.f32 %v2372, %v2443
        %v2476 = vmul.f32 %v2444, %v2444
        %v2477 = vmul.f32 %v2445, %v2445
        %v2478 = vmul.f32 %v2446, %v2446
        %v2479 = vmul.f32 %v2447, %v2447
        %v2480 = vmul.f32 %v2448, %v2448
        %v2481 = vmul.f32 %v2449, %v2449
        %v2482 = vmul.f32 %v2450, %v2450
        %v2483 = vmul.f32 %v2451, %v2451
        %v2484 = vmul.f32 %v2452, %v2452
        %v2485 = vmul.f32 %v2453, %v2453
        %v2486 = vmul.f32 %v2454, %v2454
        %v2487 = vmul.f32 %v2455, %v2455
        %v2488 = vmul.f32 %v2456, %v2456
        %v2489 = vmul.f32 %v2457, %v2457
        %v2490 = vmul.f32 %v2458, %v2458
        %v2491 = vmul.f32 %v2459, %v2459
        %v2492 = vmul.f32 %v2460, %v2460
        %v2493 = vmul.f32 %v2461, %v2461
        %v2494 = vmul.f32 %v2462, %v2462
        %v2495 = vmul.f32 %v2463, %v2463
        %v2496 = vmul.f32 %v2464, %v2464
        %v2497 = vmul.f32 %v2465, %v2465
        %v2498 = vmul.f32 %v2466, %v2466
        %v2499 = vmul.f32 %v2467, %v2467
        %v2500 = vmul.f32 %v2468, %v2468
        %v2501 = vmul.f32 %v2469, %v2469
        %v2502 = vmul.f32 %v2470, %v2470
        %v2503 = vmul.f32 %v2471, %v2471
        %v2504 = vmul.f32 %v2472, %v2472
        %v2505 = vmul.f32 %v2473, %v2473
        %v2506 = vmul.f32 %v2474, %v2474
        %v2507 = vmul.f32 %v2475, %v2475
        %v2508 = vsel %vm2373, %v2476, 0.0
        %v2509 = vsel %vm2373, %v2477, 0.0
        %v2510 = vadd.f32 %v2508, %v2509
        %v2511 = vsel %vm2373, %v2478, 0.0
        %v2512 = vadd.f32 %v2510, %v2511
        %v2513 = vsel %vm2373, %v2479, 0.0
        %v2514 = vadd.f32 %v2512, %v2513
        %v2515 = vsel %vm2373, %v2480, 0.0
        %v2516 = vadd.f32 %v2514, %v2515
        %v2517 = vsel %vm2373, %v2481, 0.0
        %v2518 = vadd.f32 %v2516, %v2517
        %v2519 = vsel %vm2373, %v2482, 0.0
        %v2520 = vadd.f32 %v2518, %v2519
        %v2521 = vsel %vm2373, %v2483, 0.0
        %v2522 = vadd.f32 %v2520, %v2521
        %v2523 = vsel %vm2373, %v2484, 0.0
        %v2524 = vadd.f32 %v2522, %v2523
        %v2525 = vsel %vm2373, %v2485, 0.0
        %v2526 = vadd.f32 %v2524, %v2525
        %v2527 = vsel %vm2373, %v2486, 0.0
        %v2528 = vadd.f32 %v2526, %v2527
        %v2529 = vsel %vm2373, %v2487, 0.0
        %v2530 = vadd.f32 %v2528, %v2529
        %v2531 = vsel %vm2373, %v2488, 0.0
        %v2532 = vadd.f32 %v2530, %v2531
        %v2533 = vsel %vm2373, %v2489, 0.0
        %v2534 = vadd.f32 %v2532, %v2533
        %v2535 = vsel %vm2373, %v2490, 0.0
        %v2536 = vadd.f32 %v2534, %v2535
        %v2537 = vsel %vm2373, %v2491, 0.0
        %v2538 = vadd.f32 %v2536, %v2537
        %v2539 = vsel %vm2373, %v2492, 0.0
        %v2540 = vadd.f32 %v2538, %v2539
        %v2541 = vsel %vm2373, %v2493, 0.0
        %v2542 = vadd.f32 %v2540, %v2541
        %v2543 = vsel %vm2373, %v2494, 0.0
        %v2544 = vadd.f32 %v2542, %v2543
        %v2545 = vsel %vm2373, %v2495, 0.0
        %v2546 = vadd.f32 %v2544, %v2545
        %v2547 = vsel %vm2373, %v2496, 0.0
        %v2548 = vadd.f32 %v2546, %v2547
        %v2549 = vsel %vm2373, %v2497, 0.0
        %v2550 = vadd.f32 %v2548, %v2549
        %v2551 = vsel %vm2373, %v2498, 0.0
        %v2552 = vadd.f32 %v2550, %v2551
        %v2553 = vsel %vm2373, %v2499, 0.0
        %v2554 = vadd.f32 %v2552, %v2553
        %v2555 = vsel %vm2373, %v2500, 0.0
        %v2556 = vadd.f32 %v2554, %v2555
        %v2557 = vsel %vm2373, %v2501, 0.0
        %v2558 = vadd.f32 %v2556, %v2557
        %v2559 = vsel %vm2373, %v2502, 0.0
        %v2560 = vadd.f32 %v2558, %v2559
        %v2561 = vsel %vm2373, %v2503, 0.0
        %v2562 = vadd.f32 %v2560, %v2561
        %v2563 = vsel %vm2373, %v2504, 0.0
        %v2564 = vadd.f32 %v2562, %v2563
        %v2565 = vsel %vm2373, %v2505, 0.0
        %v2566 = vadd.f32 %v2564, %v2565
        %v2567 = vsel %vm2373, %v2506, 0.0
        %v2568 = vadd.f32 %v2566, %v2567
        %v2569 = vsel %vm2373, %v2507, 0.0
        %v2570 = vadd.f32 %v2568, %v2569
        %v2571 = vrot.slane %v2570, 4
        %v2572 = vadd.f32 %v2570, %v2571
        %v2573 = vrot.slane %v2572, 2
        %v2574 = vadd.f32 %v2572, %v2573
        %v2575 = vrot.slane %v2574, 1
        %v2576 = vadd.f32 %v2574, %v2575
        %v2577 = vmul.f32 %v2576, %v903
        %v2578 = vadd.f32 %v2577, 1e-05
        %v2579 = vrsqrt.pop %v2578
        %v2580 = vmul.f32 %v2444, %v2579
        %v2581 = vmul.f32 %v2445, %v2579
        %v2582 = vmul.f32 %v2446, %v2579
        %v2583 = vmul.f32 %v2447, %v2579
        %v2584 = vmul.f32 %v2448, %v2579
        %v2585 = vmul.f32 %v2449, %v2579
        %v2586 = vmul.f32 %v2450, %v2579
        %v2587 = vmul.f32 %v2451, %v2579
        %v2588 = vmul.f32 %v2452, %v2579
        %v2589 = vmul.f32 %v2453, %v2579
        %v2590 = vmul.f32 %v2454, %v2579
        %v2591 = vmul.f32 %v2455, %v2579
        %v2592 = vmul.f32 %v2456, %v2579
        %v2593 = vmul.f32 %v2457, %v2579
        %v2594 = vmul.f32 %v2458, %v2579
        %v2595 = vmul.f32 %v2459, %v2579
        %v2596 = vmul.f32 %v2460, %v2579
        %v2597 = vmul.f32 %v2461, %v2579
        %v2598 = vmul.f32 %v2462, %v2579
        %v2599 = vmul.f32 %v2463, %v2579
        %v2600 = vmul.f32 %v2464, %v2579
        %v2601 = vmul.f32 %v2465, %v2579
        %v2602 = vmul.f32 %v2466, %v2579
        %v2603 = vmul.f32 %v2467, %v2579
        %v2604 = vmul.f32 %v2468, %v2579
        %v2605 = vmul.f32 %v2469, %v2579
        %v2606 = vmul.f32 %v2470, %v2579
        %v2607 = vmul.f32 %v2471, %v2579
        %v2608 = vmul.f32 %v2472, %v2579
        %v2609 = vmul.f32 %v2473, %v2579
        %v2610 = vmul.f32 %v2474, %v2579
        %v2611 = vmul.f32 %v2475, %v2579
        %v2612 = vlaneseq
        %v2613 = vshrl.u32 %v2612, 7
        %v2614 = vsub.s32 0, %v2613
        %v2615 = vrot.slane %v536, %v2614
        %v2616 = vmul.f32 %v2580, %v2615
        %v2617 = vmul.f32 %v2581, %v2615
        %v2618 = vmul.f32 %v2582, %v2615
        %v2619 = vmul.f32 %v2583, %v2615
        %v2620 = vmul.f32 %v2584, %v2615
        %v2621 = vmul.f32 %v2585, %v2615
        %v2622 = vmul.f32 %v2586, %v2615
        %v2623 = vmul.f32 %v2587, %v2615
        %v2624 = vmul.f32 %v2588, %v2615
        %v2625 = vmul.f32 %v2589, %v2615
        %v2626 = vmul.f32 %v2590, %v2615
        %v2627 = vmul.f32 %v2591, %v2615
        %v2628 = vmul.f32 %v2592, %v2615
        %v2629 = vmul.f32 %v2593, %v2615
        %v2630 = vmul.f32 %v2594, %v2615
        %v2631 = vmul.f32 %v2595, %v2615
        %v2632 = vmul.f32 %v2596, %v2615
        %v2633 = vmul.f32 %v2597, %v2615
        %v2634 = vmul.f32 %v2598, %v2615
        %v2635 = vmul.f32 %v2599, %v2615
        %v2636 = vmul.f32 %v2600, %v2615
        %v2637 = vmul.f32 %v2601, %v2615
        %v2638 = vmul.f32 %v2602, %v2615
        %v2639 = vmul.f32 %v2603, %v2615
        %v2640 = vmul.f32 %v2604, %v2615
        %v2641 = vmul.f32 %v2605, %v2615
        %v2642 = vmul.f32 %v2606, %v2615
        %v2643 = vmul.f32 %v2607, %v2615
        %v2644 = vmul.f32 %v2608, %v2615
        %v2645 = vmul.f32 %v2609, %v2615
        %v2646 = vmul.f32 %v2610, %v2615
        %v2647 = vmul.f32 %v2611, %v2615
        %v2648 = vlaneseq
        %v2649 = vshrl.u32 %v2648, 7
        %v2650 = vsub.s32 1, %v2649
        %v2651 = vrot.slane %v536, %v2650
        %v2652 = vadd.f32 %v2616, %v2651
        %v2653 = vadd.f32 %v2617, %v2651
        %v2654 = vadd.f32 %v2618, %v2651
        %v2655 = vadd.f32 %v2619, %v2651
        %v2656 = vadd.f32 %v2620, %v2651
        %v2657 = vadd.f32 %v2621, %v2651
        %v2658 = vadd.f32 %v2622, %v2651
        %v2659 = vadd.f32 %v2623, %v2651
        %v2660 = vadd.f32 %v2624, %v2651
        %v2661 = vadd.f32 %v2625, %v2651
        %v2662 = vadd.f32 %v2626, %v2651
        %v2663 = vadd.f32 %v2627, %v2651
        %v2664 = vadd.f32 %v2628, %v2651
        %v2665 = vadd.f32 %v2629, %v2651
        %v2666 = vadd.f32 %v2630, %v2651
        %v2667 = vadd.f32 %v2631, %v2651
        %v2668 = vadd.f32 %v2632, %v2651
        %v2669 = vadd.f32 %v2633, %v2651
        %v2670 = vadd.f32 %v2634, %v2651
        %v2671 = vadd.f32 %v2635, %v2651
        %v2672 = vadd.f32 %v2636, %v2651
        %v2673 = vadd.f32 %v2637, %v2651
        %v2674 = vadd.f32 %v2638, %v2651
        %v2675 = vadd.f32 %v2639, %v2651
        %v2676 = vadd.f32 %v2640, %v2651
        %v2677 = vadd.f32 %v2641, %v2651
        %v2678 = vadd.f32 %v2642, %v2651
        %v2679 = vadd.f32 %v2643, %v2651
        %v2680 = vadd.f32 %v2644, %v2651
        %v2681 = vadd.f32 %v2645, %v2651
        %v2682 = vadd.f32 %v2646, %v2651
        %v2683 = vadd.f32 %v2647, %v2651
        %v2684 = vmax.f32 %v2652, 0.0
        %v2685 = vmax.f32 %v2653, 0.0
        %v2686 = vmax.f32 %v2654, 0.0
        %v2687 = vmax.f32 %v2655, 0.0
        %v2688 = vmax.f32 %v2656, 0.0
        %v2689 = vmax.f32 %v2657, 0.0
        %v2690 = vmax.f32 %v2658, 0.0
        %v2691 = vmax.f32 %v2659, 0.0
        %v2692 = vmax.f32 %v2660, 0.0
        %v2693 = vmax.f32 %v2661, 0.0
        %v2694 = vmax.f32 %v2662, 0.0
        %v2695 = vmax.f32 %v2663, 0.0
        %v2696 = vmax.f32 %v2664, 0.0
        %v2697 = vmax.f32 %v2665, 0.0
        %v2698 = vmax.f32 %v2666, 0.0
        %v2699 = vmax.f32 %v2667, 0.0
        %v2700 = vmax.f32 %v2668, 0.0
        %v2701 = vmax.f32 %v2669, 0.0
        %v2702 = vmax.f32 %v2670, 0.0
        %v2703 = vmax.f32 %v2671, 0.0
        %v2704 = vmax.f32 %v2672, 0.0
        %v2705 = vmax.f32 %v2673, 0.0
        %v2706 = vmax.f32 %v2674, 0.0
        %v2707 = vmax.f32 %v2675, 0.0
        %v2708 = vmax.f32 %v2676, 0.0
        %v2709 = vmax.f32 %v2677, 0.0
        %v2710 = vmax.f32 %v2678, 0.0
        %v2711 = vmax.f32 %v2679, 0.0
        %v2712 = vmax.f32 %v2680, 0.0
        %v2713 = vmax.f32 %v2681, 0.0
        %v2714 = vmax.f32 %v2682, 0.0
        %v2715 = vmax.f32 %v2683, 0.0
        %v2716 = vpack.c.bf16 %v2685, %v2684
        %v2717 = vpack.c.bf16 %v2687, %v2686
        %v2718 = vpack.c.bf16 %v2689, %v2688
        %v2719 = vpack.c.bf16 %v2691, %v2690
        %v2720 = vpack.c.bf16 %v2693, %v2692
        %v2721 = vpack.c.bf16 %v2695, %v2694
        %v2722 = vpack.c.bf16 %v2697, %v2696
        %v2723 = vpack.c.bf16 %v2699, %v2698
        %v2724 = vpack.c.bf16 %v2701, %v2700
        %v2725 = vpack.c.bf16 %v2703, %v2702
        %v2726 = vpack.c.bf16 %v2705, %v2704
        %v2727 = vpack.c.bf16 %v2707, %v2706
        %v2728 = vpack.c.bf16 %v2709, %v2708
        %v2729 = vpack.c.bf16 %v2711, %v2710
        %v2730 = vpack.c.bf16 %v2713, %v2712
        %v2731 = vpack.c.bf16 %v2715, %v2714
        %s2732 = smul.u32 %s35, 5
        %s2733 = smul.addr %s2732, 4
        %s2734 = scalar_lea.vmem %s8, %s2733
        %v2735 = vld [vmem:[%s2734] sm:$0xf]
        %v2736 = vld [vmem:[%s2734 + $0x4] sm:$0xf]
        %v2737 = vld [vmem:[%s2734 + $0x8] sm:$0xf]
        %v2738 = vld [vmem:[%s2734 + $0xc] sm:$0xf]
        %v2739 = vld [vmem:[%s2734 + $0x10] sm:$0x3]
        %v2740 = vlaneseq
        %v2741 = vshrl.u32 %v2740, 7
        %v2742 = vsub.s32 2, %v2741
        %v2743 = vrot.slane %v536, %v2742
        %v2749 = vunpack.c.l.b16 %v2735
        %v2750 = vunpack.c.l.b16 %v2736
        %v2751 = vunpack.c.l.b16 %v2737
        %v2752 = vunpack.c.l.b16 %v2738
        %v2753 = vunpack.c.l.b16 %v2739
        %v2754 = vpack.c.b16 %v2750, %v2749
        %v2755 = vpack.c.b16 %v2752, %v2751
        %v2756 = vpack.c.b16 %v2753, %v2753
        %v2760 = vsel %vm2373, %v2716, 0
        %v2763 = vsel %vm2373, %v2717, 0
        %v2766 = vsel %vm2373, %v2718, 0
        %v2769 = vsel %vm2373, %v2719, 0
        %v2772 = vsel %vm2373, %v2720, 0
        %v2775 = vsel %vm2373, %v2721, 0
        %v2778 = vsel %vm2373, %v2722, 0
        %v2781 = vsel %vm2373, %v2723, 0
        %v2784 = vsel %vm2373, %v2724, 0
        %v2787 = vsel %vm2373, %v2725, 0
        %v2790 = vsel %vm2373, %v2726, 0
        %v2793 = vsel %vm2373, %v2727, 0
        %v2796 = vsel %vm2373, %v2728, 0
        %v2799 = vsel %vm2373, %v2729, 0
        %v2802 = vsel %vm2373, %v2730, 0
        %v2805 = vsel %vm2373, %v2731, 0
        %vm2807 = vcmask 1040384
        %vm2808 = vcmask 1041408
        %v2809 = vsel %vm2807, 4294967295, 65535
        %v2810 = vsel %vm2808, %v2809, 0
        %v2812 = vand.u32 %v2756, %v2810
        %2814 = vmatprep.subr.bf16.mxu0 0
        %2815 = vmatpush1.bf16.msra.mxu0 %v2754
        %2816 = vmatprep.subr.bf16.mxu0 0
        %2817 = vmatpush1.bf16.msra.mxu0 %v2755
        %2818 = vmatprep.subr.bf16.mxu0 0
        %2819 = vmatpush1.bf16.msra.mxu0 %v2812
        %2820 = vmatprep.subr.bf16.mxu0 0
        %2821 = vmatpush1.bf16.msra.mxu0 0
        %2822 = vmatprep.subr.bf16.mxu0 0
        %2823 = vmatpush1.bf16.msra.mxu0 0
        %2824 = vmatprep.subr.bf16.mxu0 0
        %2825 = vmatpush1.bf16.msra.mxu0 0
        %2826 = vmatprep.subr.bf16.mxu0 0
        %2827 = vmatpush1.bf16.msra.mxu0 0
        %2828 = vmatprep.subr.bf16.mxu0 0
        %2829 = vmatpush1.bf16.msra.mxu0 0
        %2830 = vmatprep.subr.bf16.mxu0 0
        %2831 = vmatpush1.bf16.msra.mxu0 0
        %2832 = vmatprep.subr.bf16.mxu0 0
        %2833 = vmatpush1.bf16.msra.mxu0 0
        %2834 = vmatprep.subr.bf16.mxu0 0
        %2835 = vmatpush1.bf16.msra.mxu0 0
        %2836 = vmatprep.subr.bf16.mxu0 0
        %2837 = vmatpush1.bf16.msra.mxu0 0
        %2838 = vmatprep.subr.bf16.mxu0 0
        %2839 = vmatpush1.bf16.msra.mxu0 0
        %2840 = vmatprep.subr.bf16.mxu0 0
        %2841 = vmatpush1.bf16.msra.mxu0 0
        %2842 = vmatprep.subr.bf16.mxu0 0
        %2843 = vmatpush1.bf16.msra.mxu0 0
        %2844 = vmatprep.subr.bf16.mxu0 0
        %2845 = vmatpush1.bf16.msra.mxu0 0
        %2846 = vmatprep.mubr.bf16.mxu0 0
        %2847 = vmatmul.mubr.bf16.gmra.mrb[0].mxu0 %v2760
        %v2848 = vpop.f32.mrb[0].mxu0
        %v2849 = vadd.f32 %v2743, %v2848
        %v2850 = vpop.f32.mrb[0].mxu0
        %v2851 = vpop.f32.mrb[0].mxu0
        %v2852 = vadd.f32 %v2743, %v2851
        %v2853 = vpop.f32.mrb[0].mxu0
        %2854 = vmatprep.mubr.bf16.mxu0 0
        %2855 = vmatmul.mubr.bf16.gmra.mrb[0].mxu0 %v2763
        %v2856 = vpop.f32.mrb[0].mxu0
        %v2857 = vadd.f32 %v2743, %v2856
        %v2858 = vpop.f32.mrb[0].mxu0
        %v2859 = vpop.f32.mrb[0].mxu0
        %v2860 = vadd.f32 %v2743, %v2859
        %v2861 = vpop.f32.mrb[0].mxu0
        %2862 = vmatprep.mubr.bf16.mxu0 0
        %2863 = vmatmul.mubr.bf16.gmra.mrb[0].mxu0 %v2766
        %v2864 = vpop.f32.mrb[0].mxu0
        %v2865 = vadd.f32 %v2743, %v2864
        %v2866 = vpop.f32.mrb[0].mxu0
        %v2867 = vpop.f32.mrb[0].mxu0
        %v2868 = vadd.f32 %v2743, %v2867
        %v2869 = vpop.f32.mrb[0].mxu0
        %2870 = vmatprep.mubr.bf16.mxu0 0
        %2871 = vmatmul.mubr.bf16.gmra.mrb[0].mxu0 %v2769
        %v2872 = vpop.f32.mrb[0].mxu0
        %v2873 = vadd.f32 %v2743, %v2872
        %v2874 = vpop.f32.mrb[0].mxu0
        %v2875 = vpop.f32.mrb[0].mxu0
        %v2876 = vadd.f32 %v2743, %v2875
        %v2877 = vpop.f32.mrb[0].mxu0
        %2878 = vmatprep.mubr.bf16.mxu0 0
        %2879 = vmatmul.mubr.bf16.gmra.mrb[0].mxu0 %v2772
        %v2880 = vpop.f32.mrb[0].mxu0
        %v2881 = vadd.f32 %v2743, %v2880
        %v2882 = vpop.f32.mrb[0].mxu0
        %v2883 = vpop.f32.mrb[0].mxu0
        %v2884 = vadd.f32 %v2743, %v2883
        %v2885 = vpop.f32.mrb[0].mxu0
        %2886 = vmatprep.mubr.bf16.mxu0 0
        %2887 = vmatmul.mubr.bf16.gmra.mrb[0].mxu0 %v2775
        %v2888 = vpop.f32.mrb[0].mxu0
        %v2889 = vadd.f32 %v2743, %v2888
        %v2890 = vpop.f32.mrb[0].mxu0
        %v2891 = vpop.f32.mrb[0].mxu0
        %v2892 = vadd.f32 %v2743, %v2891
        %v2893 = vpop.f32.mrb[0].mxu0
        %2894 = vmatprep.mubr.bf16.mxu0 0
        %2895 = vmatmul.mubr.bf16.gmra.mrb[0].mxu0 %v2778
        %v2896 = vpop.f32.mrb[0].mxu0
        %v2897 = vadd.f32 %v2743, %v2896
        %v2898 = vpop.f32.mrb[0].mxu0
        %v2899 = vpop.f32.mrb[0].mxu0
        %v2900 = vadd.f32 %v2743, %v2899
        %v2901 = vpop.f32.mrb[0].mxu0
        %2902 = vmatprep.mubr.bf16.mxu0 0
        %2903 = vmatmul.mubr.bf16.gmra.mrb[0].mxu0 %v2781
        %v2904 = vpop.f32.mrb[0].mxu0
        %v2905 = vadd.f32 %v2743, %v2904
        %v2906 = vpop.f32.mrb[0].mxu0
        %v2907 = vpop.f32.mrb[0].mxu0
        %v2908 = vadd.f32 %v2743, %v2907
        %v2909 = vpop.f32.mrb[0].mxu0
        %2910 = vmatprep.mubr.bf16.mxu0 0
        %2911 = vmatmul.mubr.bf16.gmra.mrb[0].mxu0 %v2784
        %v2912 = vpop.f32.mrb[0].mxu0
        %v2913 = vadd.f32 %v2743, %v2912
        %v2914 = vpop.f32.mrb[0].mxu0
        %v2915 = vpop.f32.mrb[0].mxu0
        %v2916 = vadd.f32 %v2743, %v2915
        %v2917 = vpop.f32.mrb[0].mxu0
        %2918 = vmatprep.mubr.bf16.mxu0 0
        %2919 = vmatmul.mubr.bf16.gmra.mrb[0].mxu0 %v2787
        %v2920 = vpop.f32.mrb[0].mxu0
        %v2921 = vadd.f32 %v2743, %v2920
        %v2922 = vpop.f32.mrb[0].mxu0
        %v2923 = vpop.f32.mrb[0].mxu0
        %v2924 = vadd.f32 %v2743, %v2923
        %v2925 = vpop.f32.mrb[0].mxu0
        %2926 = vmatprep.mubr.bf16.mxu0 0
        %2927 = vmatmul.mubr.bf16.gmra.mrb[0].mxu0 %v2790
        %v2928 = vpop.f32.mrb[0].mxu0
        %v2929 = vadd.f32 %v2743, %v2928
        %v2930 = vpop.f32.mrb[0].mxu0
        %v2931 = vpop.f32.mrb[0].mxu0
        %v2932 = vadd.f32 %v2743, %v2931
        %v2933 = vpop.f32.mrb[0].mxu0
        %2934 = vmatprep.mubr.bf16.mxu0 0
        %2935 = vmatmul.mubr.bf16.gmra.mrb[0].mxu0 %v2793
        %v2936 = vpop.f32.mrb[0].mxu0
        %v2937 = vadd.f32 %v2743, %v2936
        %v2938 = vpop.f32.mrb[0].mxu0
        %v2939 = vpop.f32.mrb[0].mxu0
        %v2940 = vadd.f32 %v2743, %v2939
        %v2941 = vpop.f32.mrb[0].mxu0
        %2942 = vmatprep.mubr.bf16.mxu0 0
        %2943 = vmatmul.mubr.bf16.gmra.mrb[0].mxu0 %v2796
        %v2944 = vpop.f32.mrb[0].mxu0
        %v2945 = vadd.f32 %v2743, %v2944
        %v2946 = vpop.f32.mrb[0].mxu0
        %v2947 = vpop.f32.mrb[0].mxu0
        %v2948 = vadd.f32 %v2743, %v2947
        %v2949 = vpop.f32.mrb[0].mxu0
        %2950 = vmatprep.mubr.bf16.mxu0 0
        %2951 = vmatmul.mubr.bf16.gmra.mrb[0].mxu0 %v2799
        %v2952 = vpop.f32.mrb[0].mxu0
        %v2953 = vadd.f32 %v2743, %v2952
        %v2954 = vpop.f32.mrb[0].mxu0
        %v2955 = vpop.f32.mrb[0].mxu0
        %v2956 = vadd.f32 %v2743, %v2955
        %v2957 = vpop.f32.mrb[0].mxu0
        %2958 = vmatprep.mubr.bf16.mxu0 0
        %2959 = vmatmul.mubr.bf16.gmra.mrb[0].mxu0 %v2802
        %v2960 = vpop.f32.mrb[0].mxu0
        %v2961 = vadd.f32 %v2743, %v2960
        %v2962 = vpop.f32.mrb[0].mxu0
        %v2963 = vpop.f32.mrb[0].mxu0
        %v2964 = vadd.f32 %v2743, %v2963
        %v2965 = vpop.f32.mrb[0].mxu0
        %2966 = vmatprep.mubr.bf16.mxu0 0
        %2967 = vmatmul.mubr.bf16.gmra.mrb[0].mxu0 %v2805
        %v2968 = vpop.f32.mrb[0].mxu0
        %v2969 = vadd.f32 %v2743, %v2968
        %v2970 = vpop.f32.mrb[0].mxu0
        %v2971 = vpop.f32.mrb[0].mxu0
        %v2972 = vadd.f32 %v2743, %v2971
        %v2973 = vpop.f32.mrb[0].mxu0
        %2974 = vdwg.mxu0
        %vm2975 = vcmask 138240
        %v2976 = vsel %vm2975, %v2849, 0.0
        %v2977 = vsel %vm2975, %v2852, 0.0
        %v2978 = vadd.f32 %v2976, %v2977
        %v2979 = vsel %vm2975, %v2857, 0.0
        %v2980 = vadd.f32 %v2978, %v2979
        %v2981 = vsel %vm2975, %v2860, 0.0
        %v2982 = vadd.f32 %v2980, %v2981
        %v2983 = vsel %vm2975, %v2865, 0.0
        %v2984 = vadd.f32 %v2982, %v2983
        %v2985 = vsel %vm2975, %v2868, 0.0
        %v2986 = vadd.f32 %v2984, %v2985
        %v2987 = vsel %vm2975, %v2873, 0.0
        %v2988 = vadd.f32 %v2986, %v2987
        %v2989 = vsel %vm2975, %v2876, 0.0
        %v2990 = vadd.f32 %v2988, %v2989
        %v2991 = vsel %vm2975, %v2881, 0.0
        %v2992 = vadd.f32 %v2990, %v2991
        %v2993 = vsel %vm2975, %v2884, 0.0
        %v2994 = vadd.f32 %v2992, %v2993
        %v2995 = vsel %vm2975, %v2889, 0.0
        %v2996 = vadd.f32 %v2994, %v2995
        %v2997 = vsel %vm2975, %v2892, 0.0
        %v2998 = vadd.f32 %v2996, %v2997
        %v2999 = vsel %vm2975, %v2897, 0.0
        %v3000 = vadd.f32 %v2998, %v2999
        %v3001 = vsel %vm2975, %v2900, 0.0
        %v3002 = vadd.f32 %v3000, %v3001
        %v3003 = vsel %vm2975, %v2905, 0.0
        %v3004 = vadd.f32 %v3002, %v3003
        %v3005 = vsel %vm2975, %v2908, 0.0
        %v3006 = vadd.f32 %v3004, %v3005
        %v3007 = vsel %vm2975, %v2913, 0.0
        %v3008 = vadd.f32 %v3006, %v3007
        %v3009 = vsel %vm2975, %v2916, 0.0
        %v3010 = vadd.f32 %v3008, %v3009
        %v3011 = vsel %vm2975, %v2921, 0.0
        %v3012 = vadd.f32 %v3010, %v3011
        %v3013 = vsel %vm2975, %v2924, 0.0
        %v3014 = vadd.f32 %v3012, %v3013
        %v3015 = vsel %vm2975, %v2929, 0.0
        %v3016 = vadd.f32 %v3014, %v3015
        %v3017 = vsel %vm2975, %v2932, 0.0
        %v3018 = vadd.f32 %v3016, %v3017
        %v3019 = vsel %vm2975, %v2937, 0.0
        %v3020 = vadd.f32 %v3018, %v3019
        %v3021 = vsel %vm2975, %v2940, 0.0
        %v3022 = vadd.f32 %v3020, %v3021
        %v3023 = vsel %vm2975, %v2945, 0.0
        %v3024 = vadd.f32 %v3022, %v3023
        %v3025 = vsel %vm2975, %v2948, 0.0
        %v3026 = vadd.f32 %v3024, %v3025
        %v3027 = vsel %vm2975, %v2953, 0.0
        %v3028 = vadd.f32 %v3026, %v3027
        %v3029 = vsel %vm2975, %v2956, 0.0
        %v3030 = vadd.f32 %v3028, %v3029
        %v3031 = vsel %vm2975, %v2961, 0.0
        %v3032 = vadd.f32 %v3030, %v3031
        %v3033 = vsel %vm2975, %v2964, 0.0
        %v3034 = vadd.f32 %v3032, %v3033
        %v3035 = vsel %vm2975, %v2969, 0.0
        %v3036 = vadd.f32 %v3034, %v3035
        %v3037 = vsel %vm2975, %v2972, 0.0
        %v3038 = vadd.f32 %v3036, %v3037
        %v3039 = vrot.slane %v3038, 4
        %v3040 = vadd.f32 %v3038, %v3039
        %v3041 = vrot.slane %v3040, 2
        %v3042 = vadd.f32 %v3040, %v3041
        %v3043 = vrot.slane %v3042, 1
        %v3044 = vadd.f32 %v3042, %v3043
        %v3045 = vmul.f32 %v3044, %v903
        %v3046 = vsub.f32 %v2849, %v3045
        %v3047 = vsub.f32 %v2852, %v3045
        %v3048 = vsub.f32 %v2857, %v3045
        %v3049 = vsub.f32 %v2860, %v3045
        %v3050 = vsub.f32 %v2865, %v3045
        %v3051 = vsub.f32 %v2868, %v3045
        %v3052 = vsub.f32 %v2873, %v3045
        %v3053 = vsub.f32 %v2876, %v3045
        %v3054 = vsub.f32 %v2881, %v3045
        %v3055 = vsub.f32 %v2884, %v3045
        %v3056 = vsub.f32 %v2889, %v3045
        %v3057 = vsub.f32 %v2892, %v3045
        %v3058 = vsub.f32 %v2897, %v3045
        %v3059 = vsub.f32 %v2900, %v3045
        %v3060 = vsub.f32 %v2905, %v3045
        %v3061 = vsub.f32 %v2908, %v3045
        %v3062 = vsub.f32 %v2913, %v3045
        %v3063 = vsub.f32 %v2916, %v3045
        %v3064 = vsub.f32 %v2921, %v3045
        %v3065 = vsub.f32 %v2924, %v3045
        %v3066 = vsub.f32 %v2929, %v3045
        %v3067 = vsub.f32 %v2932, %v3045
        %v3068 = vsub.f32 %v2937, %v3045
        %v3069 = vsub.f32 %v2940, %v3045
        %v3070 = vsub.f32 %v2945, %v3045
        %v3071 = vsub.f32 %v2948, %v3045
        %v3072 = vsub.f32 %v2953, %v3045
        %v3073 = vsub.f32 %v2956, %v3045
        %v3074 = vsub.f32 %v2961, %v3045
        %v3075 = vsub.f32 %v2964, %v3045
        %v3076 = vsub.f32 %v2969, %v3045
        %v3077 = vsub.f32 %v2972, %v3045
        %v3078 = vmul.f32 %v3046, %v3046
        %v3079 = vmul.f32 %v3047, %v3047
        %v3080 = vmul.f32 %v3048, %v3048
        %v3081 = vmul.f32 %v3049, %v3049
        %v3082 = vmul.f32 %v3050, %v3050
        %v3083 = vmul.f32 %v3051, %v3051
        %v3084 = vmul.f32 %v3052, %v3052
        %v3085 = vmul.f32 %v3053, %v3053
        %v3086 = vmul.f32 %v3054, %v3054
        %v3087 = vmul.f32 %v3055, %v3055
        %v3088 = vmul.f32 %v3056, %v3056
        %v3089 = vmul.f32 %v3057, %v3057
        %v3090 = vmul.f32 %v3058, %v3058
        %v3091 = vmul.f32 %v3059, %v3059
        %v3092 = vmul.f32 %v3060, %v3060
        %v3093 = vmul.f32 %v3061, %v3061
        %v3094 = vmul.f32 %v3062, %v3062
        %v3095 = vmul.f32 %v3063, %v3063
        %v3096 = vmul.f32 %v3064, %v3064
        %v3097 = vmul.f32 %v3065, %v3065
        %v3098 = vmul.f32 %v3066, %v3066
        %v3099 = vmul.f32 %v3067, %v3067
        %v3100 = vmul.f32 %v3068, %v3068
        %v3101 = vmul.f32 %v3069, %v3069
        %v3102 = vmul.f32 %v3070, %v3070
        %v3103 = vmul.f32 %v3071, %v3071
        %v3104 = vmul.f32 %v3072, %v3072
        %v3105 = vmul.f32 %v3073, %v3073
        %v3106 = vmul.f32 %v3074, %v3074
        %v3107 = vmul.f32 %v3075, %v3075
        %v3108 = vmul.f32 %v3076, %v3076
        %v3109 = vmul.f32 %v3077, %v3077
        %v3110 = vsel %vm2975, %v3078, 0.0
        %v3111 = vsel %vm2975, %v3079, 0.0
        %v3112 = vadd.f32 %v3110, %v3111
        %v3113 = vsel %vm2975, %v3080, 0.0
        %v3114 = vadd.f32 %v3112, %v3113
        %v3115 = vsel %vm2975, %v3081, 0.0
        %v3116 = vadd.f32 %v3114, %v3115
        %v3117 = vsel %vm2975, %v3082, 0.0
        %v3118 = vadd.f32 %v3116, %v3117
        %v3119 = vsel %vm2975, %v3083, 0.0
        %v3120 = vadd.f32 %v3118, %v3119
        %v3121 = vsel %vm2975, %v3084, 0.0
        %v3122 = vadd.f32 %v3120, %v3121
        %v3123 = vsel %vm2975, %v3085, 0.0
        %v3124 = vadd.f32 %v3122, %v3123
        %v3125 = vsel %vm2975, %v3086, 0.0
        %v3126 = vadd.f32 %v3124, %v3125
        %v3127 = vsel %vm2975, %v3087, 0.0
        %v3128 = vadd.f32 %v3126, %v3127
        %v3129 = vsel %vm2975, %v3088, 0.0
        %v3130 = vadd.f32 %v3128, %v3129
        %v3131 = vsel %vm2975, %v3089, 0.0
        %v3132 = vadd.f32 %v3130, %v3131
        %v3133 = vsel %vm2975, %v3090, 0.0
        %v3134 = vadd.f32 %v3132, %v3133
        %v3135 = vsel %vm2975, %v3091, 0.0
        %v3136 = vadd.f32 %v3134, %v3135
        %v3137 = vsel %vm2975, %v3092, 0.0
        %v3138 = vadd.f32 %v3136, %v3137
        %v3139 = vsel %vm2975, %v3093, 0.0
        %v3140 = vadd.f32 %v3138, %v3139
        %v3141 = vsel %vm2975, %v3094, 0.0
        %v3142 = vadd.f32 %v3140, %v3141
        %v3143 = vsel %vm2975, %v3095, 0.0
        %v3144 = vadd.f32 %v3142, %v3143
        %v3145 = vsel %vm2975, %v3096, 0.0
        %v3146 = vadd.f32 %v3144, %v3145
        %v3147 = vsel %vm2975, %v3097, 0.0
        %v3148 = vadd.f32 %v3146, %v3147
        %v3149 = vsel %vm2975, %v3098, 0.0
        %v3150 = vadd.f32 %v3148, %v3149
        %v3151 = vsel %vm2975, %v3099, 0.0
        %v3152 = vadd.f32 %v3150, %v3151
        %v3153 = vsel %vm2975, %v3100, 0.0
        %v3154 = vadd.f32 %v3152, %v3153
        %v3155 = vsel %vm2975, %v3101, 0.0
        %v3156 = vadd.f32 %v3154, %v3155
        %v3157 = vsel %vm2975, %v3102, 0.0
        %v3158 = vadd.f32 %v3156, %v3157
        %v3159 = vsel %vm2975, %v3103, 0.0
        %v3160 = vadd.f32 %v3158, %v3159
        %v3161 = vsel %vm2975, %v3104, 0.0
        %v3162 = vadd.f32 %v3160, %v3161
        %v3163 = vsel %vm2975, %v3105, 0.0
        %v3164 = vadd.f32 %v3162, %v3163
        %v3165 = vsel %vm2975, %v3106, 0.0
        %v3166 = vadd.f32 %v3164, %v3165
        %v3167 = vsel %vm2975, %v3107, 0.0
        %v3168 = vadd.f32 %v3166, %v3167
        %v3169 = vsel %vm2975, %v3108, 0.0
        %v3170 = vadd.f32 %v3168, %v3169
        %v3171 = vsel %vm2975, %v3109, 0.0
        %v3172 = vadd.f32 %v3170, %v3171
        %v3173 = vrot.slane %v3172, 4
        %v3174 = vadd.f32 %v3172, %v3173
        %v3175 = vrot.slane %v3174, 2
        %v3176 = vadd.f32 %v3174, %v3175
        %v3177 = vrot.slane %v3176, 1
        %v3178 = vadd.f32 %v3176, %v3177
        %v3179 = vmul.f32 %v3178, %v903
        %v3180 = vadd.f32 %v3179, 1e-05
        %v3181 = vrsqrt.pop %v3180
        %v3182 = vmul.f32 %v3046, %v3181
        %v3183 = vmul.f32 %v3047, %v3181
        %v3184 = vmul.f32 %v3048, %v3181
        %v3185 = vmul.f32 %v3049, %v3181
        %v3186 = vmul.f32 %v3050, %v3181
        %v3187 = vmul.f32 %v3051, %v3181
        %v3188 = vmul.f32 %v3052, %v3181
        %v3189 = vmul.f32 %v3053, %v3181
        %v3190 = vmul.f32 %v3054, %v3181
        %v3191 = vmul.f32 %v3055, %v3181
        %v3192 = vmul.f32 %v3056, %v3181
        %v3193 = vmul.f32 %v3057, %v3181
        %v3194 = vmul.f32 %v3058, %v3181
        %v3195 = vmul.f32 %v3059, %v3181
        %v3196 = vmul.f32 %v3060, %v3181
        %v3197 = vmul.f32 %v3061, %v3181
        %v3198 = vmul.f32 %v3062, %v3181
        %v3199 = vmul.f32 %v3063, %v3181
        %v3200 = vmul.f32 %v3064, %v3181
        %v3201 = vmul.f32 %v3065, %v3181
        %v3202 = vmul.f32 %v3066, %v3181
        %v3203 = vmul.f32 %v3067, %v3181
        %v3204 = vmul.f32 %v3068, %v3181
        %v3205 = vmul.f32 %v3069, %v3181
        %v3206 = vmul.f32 %v3070, %v3181
        %v3207 = vmul.f32 %v3071, %v3181
        %v3208 = vmul.f32 %v3072, %v3181
        %v3209 = vmul.f32 %v3073, %v3181
        %v3210 = vmul.f32 %v3074, %v3181
        %v3211 = vmul.f32 %v3075, %v3181
        %v3212 = vmul.f32 %v3076, %v3181
        %v3213 = vmul.f32 %v3077, %v3181
        %v3214 = vlaneseq
        %v3215 = vshrl.u32 %v3214, 7
        %v3216 = vsub.s32 3, %v3215
        %v3217 = vrot.slane %v536, %v3216
        %v3218 = vmul.f32 %v3182, %v3217
        %v3219 = vmul.f32 %v3183, %v3217
        %v3220 = vmul.f32 %v3184, %v3217
        %v3221 = vmul.f32 %v3185, %v3217
        %v3222 = vmul.f32 %v3186, %v3217
        %v3223 = vmul.f32 %v3187, %v3217
        %v3224 = vmul.f32 %v3188, %v3217
        %v3225 = vmul.f32 %v3189, %v3217
        %v3226 = vmul.f32 %v3190, %v3217
        %v3227 = vmul.f32 %v3191, %v3217
        %v3228 = vmul.f32 %v3192, %v3217
        %v3229 = vmul.f32 %v3193, %v3217
        %v3230 = vmul.f32 %v3194, %v3217
        %v3231 = vmul.f32 %v3195, %v3217
        %v3232 = vmul.f32 %v3196, %v3217
        %v3233 = vmul.f32 %v3197, %v3217
        %v3234 = vmul.f32 %v3198, %v3217
        %v3235 = vmul.f32 %v3199, %v3217
        %v3236 = vmul.f32 %v3200, %v3217
        %v3237 = vmul.f32 %v3201, %v3217
        %v3238 = vmul.f32 %v3202, %v3217
        %v3239 = vmul.f32 %v3203, %v3217
        %v3240 = vmul.f32 %v3204, %v3217
        %v3241 = vmul.f32 %v3205, %v3217
        %v3242 = vmul.f32 %v3206, %v3217
        %v3243 = vmul.f32 %v3207, %v3217
        %v3244 = vmul.f32 %v3208, %v3217
        %v3245 = vmul.f32 %v3209, %v3217
        %v3246 = vmul.f32 %v3210, %v3217
        %v3247 = vmul.f32 %v3211, %v3217
        %v3248 = vmul.f32 %v3212, %v3217
        %v3249 = vmul.f32 %v3213, %v3217
        %v3250 = vlaneseq
        %v3251 = vshrl.u32 %v3250, 7
        %v3252 = vsub.s32 4, %v3251
        %v3253 = vrot.slane %v536, %v3252
        %v3254 = vadd.f32 %v3218, %v3253
        %v3255 = vadd.f32 %v3219, %v3253
        %v3256 = vadd.f32 %v3220, %v3253
        %v3257 = vadd.f32 %v3221, %v3253
        %v3258 = vadd.f32 %v3222, %v3253
        %v3259 = vadd.f32 %v3223, %v3253
        %v3260 = vadd.f32 %v3224, %v3253
        %v3261 = vadd.f32 %v3225, %v3253
        %v3262 = vadd.f32 %v3226, %v3253
        %v3263 = vadd.f32 %v3227, %v3253
        %v3264 = vadd.f32 %v3228, %v3253
        %v3265 = vadd.f32 %v3229, %v3253
        %v3266 = vadd.f32 %v3230, %v3253
        %v3267 = vadd.f32 %v3231, %v3253
        %v3268 = vadd.f32 %v3232, %v3253
        %v3269 = vadd.f32 %v3233, %v3253
        %v3270 = vadd.f32 %v3234, %v3253
        %v3271 = vadd.f32 %v3235, %v3253
        %v3272 = vadd.f32 %v3236, %v3253
        %v3273 = vadd.f32 %v3237, %v3253
        %v3274 = vadd.f32 %v3238, %v3253
        %v3275 = vadd.f32 %v3239, %v3253
        %v3276 = vadd.f32 %v3240, %v3253
        %v3277 = vadd.f32 %v3241, %v3253
        %v3278 = vadd.f32 %v3242, %v3253
        %v3279 = vadd.f32 %v3243, %v3253
        %v3280 = vadd.f32 %v3244, %v3253
        %v3281 = vadd.f32 %v3245, %v3253
        %v3282 = vadd.f32 %v3246, %v3253
        %v3283 = vadd.f32 %v3247, %v3253
        %v3284 = vadd.f32 %v3248, %v3253
        %v3285 = vadd.f32 %v3249, %v3253
        %v3286 = vmax.f32 %v3254, 0.0
        %v3287 = vmax.f32 %v3255, 0.0
        %v3288 = vmax.f32 %v3256, 0.0
        %v3289 = vmax.f32 %v3257, 0.0
        %v3290 = vmax.f32 %v3258, 0.0
        %v3291 = vmax.f32 %v3259, 0.0
        %v3292 = vmax.f32 %v3260, 0.0
        %v3293 = vmax.f32 %v3261, 0.0
        %v3294 = vmax.f32 %v3262, 0.0
        %v3295 = vmax.f32 %v3263, 0.0
        %v3296 = vmax.f32 %v3264, 0.0
        %v3297 = vmax.f32 %v3265, 0.0
        %v3298 = vmax.f32 %v3266, 0.0
        %v3299 = vmax.f32 %v3267, 0.0
        %v3300 = vmax.f32 %v3268, 0.0
        %v3301 = vmax.f32 %v3269, 0.0
        %v3302 = vmax.f32 %v3270, 0.0
        %v3303 = vmax.f32 %v3271, 0.0
        %v3304 = vmax.f32 %v3272, 0.0
        %v3305 = vmax.f32 %v3273, 0.0
        %v3306 = vmax.f32 %v3274, 0.0
        %v3307 = vmax.f32 %v3275, 0.0
        %v3308 = vmax.f32 %v3276, 0.0
        %v3309 = vmax.f32 %v3277, 0.0
        %v3310 = vmax.f32 %v3278, 0.0
        %v3311 = vmax.f32 %v3279, 0.0
        %v3312 = vmax.f32 %v3280, 0.0
        %v3313 = vmax.f32 %v3281, 0.0
        %v3314 = vmax.f32 %v3282, 0.0
        %v3315 = vmax.f32 %v3283, 0.0
        %v3316 = vmax.f32 %v3284, 0.0
        %v3317 = vmax.f32 %v3285, 0.0
        %v3318 = vpack.c.bf16 %v3287, %v3286
        %v3319 = vpack.c.bf16 %v3289, %v3288
        %v3320 = vpack.c.bf16 %v3291, %v3290
        %v3321 = vpack.c.bf16 %v3293, %v3292
        %v3322 = vpack.c.bf16 %v3295, %v3294
        %v3323 = vpack.c.bf16 %v3297, %v3296
        %v3324 = vpack.c.bf16 %v3299, %v3298
        %v3325 = vpack.c.bf16 %v3301, %v3300
        %v3326 = vpack.c.bf16 %v3303, %v3302
        %v3327 = vpack.c.bf16 %v3305, %v3304
        %v3328 = vpack.c.bf16 %v3307, %v3306
        %v3329 = vpack.c.bf16 %v3309, %v3308
        %v3330 = vpack.c.bf16 %v3311, %v3310
        %v3331 = vpack.c.bf16 %v3313, %v3312
        %v3332 = vpack.c.bf16 %v3315, %v3314
        %v3333 = vpack.c.bf16 %v3317, %v3316
        %s3334 = smul.u32 %s35, 3
        %s3335 = smul.addr %s3334, 4
        %s3336 = scalar_lea.vmem %s9, %s3335
        %v3337 = vld [vmem:[%s3336] sm:$0xf]
        %v3338 = vld [vmem:[%s3336 + $0x4] sm:$0xf]
        %v3339 = vld [vmem:[%s3336 + $0x8] sm:$0x1]
        %v3340 = vlaneseq
        %v3341 = vshrl.u32 %v3340, 7
        %v3342 = vsub.s32 5, %v3341
        %v3343 = vrot.slane %v536, %v3342
        %v3347 = vunpack.c.l.b16 %v3337
        %v3348 = vunpack.c.l.b16 %v3338
        %v3349 = vunpack.c.l.b16 %v3339
        %v3350 = vpack.c.b16 %v3348, %v3347
        %v3351 = vpack.c.b16 %v3349, %v3349
        %v3354 = vsel %vm2975, %v3318, 0
        %v3357 = vsel %vm2975, %v3319, 0
        %v3360 = vsel %vm2975, %v3320, 0
        %v3363 = vsel %vm2975, %v3321, 0
        %v3366 = vsel %vm2975, %v3322, 0
        %v3369 = vsel %vm2975, %v3323, 0
        %v3372 = vsel %vm2975, %v3324, 0
        %v3375 = vsel %vm2975, %v3325, 0
        %v3378 = vsel %vm2975, %v3326, 0
        %v3381 = vsel %vm2975, %v3327, 0
        %v3384 = vsel %vm2975, %v3328, 0
        %v3387 = vsel %vm2975, %v3329, 0
        %v3390 = vsel %vm2975, %v3330, 0
        %v3393 = vsel %vm2975, %v3331, 0
        %v3396 = vsel %vm2975, %v3332, 0
        %v3399 = vsel %vm2975, %v3333, 0
        %v3401 = vsel 0, 4294967295, 65535
        %v3402 = vsel %vm2807, %v3401, 0
        %v3404 = vand.u32 %v3351, %v3402
        %3406 = vmatprep.subr.bf16.mxu0 0
        %3407 = vmatpush1.bf16.msra.mxu0 %v3350
        %3408 = vmatprep.subr.bf16.mxu0 0
        %3409 = vmatpush1.bf16.msra.mxu0 %v3404
        %3410 = vmatprep.subr.bf16.mxu0 0
        %3411 = vmatpush1.bf16.msra.mxu0 0
        %3412 = vmatprep.subr.bf16.mxu0 0
        %3413 = vmatpush1.bf16.msra.mxu0 0
        %3414 = vmatprep.subr.bf16.mxu0 0
        %3415 = vmatpush1.bf16.msra.mxu0 0
        %3416 = vmatprep.subr.bf16.mxu0 0
        %3417 = vmatpush1.bf16.msra.mxu0 0
        %3418 = vmatprep.subr.bf16.mxu0 0
        %3419 = vmatpush1.bf16.msra.mxu0 0
        %3420 = vmatprep.subr.bf16.mxu0 0
        %3421 = vmatpush1.bf16.msra.mxu0 0
        %3422 = vmatprep.subr.bf16.mxu0 0
        %3423 = vmatpush1.bf16.msra.mxu0 0
        %3424 = vmatprep.subr.bf16.mxu0 0
        %3425 = vmatpush1.bf16.msra.mxu0 0
        %3426 = vmatprep.subr.bf16.mxu0 0
        %3427 = vmatpush1.bf16.msra.mxu0 0
        %3428 = vmatprep.subr.bf16.mxu0 0
        %3429 = vmatpush1.bf16.msra.mxu0 0
        %3430 = vmatprep.subr.bf16.mxu0 0
        %3431 = vmatpush1.bf16.msra.mxu0 0
        %3432 = vmatprep.subr.bf16.mxu0 0
        %3433 = vmatpush1.bf16.msra.mxu0 0
        %3434 = vmatprep.subr.bf16.mxu0 0
        %3435 = vmatpush1.bf16.msra.mxu0 0
        %3436 = vmatprep.subr.bf16.mxu0 0
        %3437 = vmatpush1.bf16.msra.mxu0 0
        %3438 = vmatprep.mubr.bf16.mxu0 0
        %3439 = vmatmul.mubr.bf16.gmra.mrb[0].mxu0 %v3354
        %v3440 = vpop.f32.mrb[0].mxu0
        %v3441 = vadd.f32 %v3343, %v3440
        %v3442 = vpop.f32.mrb[0].mxu0
        %v3443 = vpop.f32.mrb[0].mxu0
        %v3444 = vadd.f32 %v3343, %v3443
        %v3445 = vpop.f32.mrb[0].mxu0
        %3446 = vmatprep.mubr.bf16.mxu0 0
        %3447 = vmatmul.mubr.bf16.gmra.mrb[0].mxu0 %v3357
        %v3448 = vpop.f32.mrb[0].mxu0
        %v3449 = vadd.f32 %v3343, %v3448
        %v3450 = vpop.f32.mrb[0].mxu0
        %v3451 = vpop.f32.mrb[0].mxu0
        %v3452 = vadd.f32 %v3343, %v3451
        %v3453 = vpop.f32.mrb[0].mxu0
        %3454 = vmatprep.mubr.bf16.mxu0 0
        %3455 = vmatmul.mubr.bf16.gmra.mrb[0].mxu0 %v3360
        %v3456 = vpop.f32.mrb[0].mxu0
        %v3457 = vadd.f32 %v3343, %v3456
        %v3458 = vpop.f32.mrb[0].mxu0
        %v3459 = vpop.f32.mrb[0].mxu0
        %v3460 = vadd.f32 %v3343, %v3459
        %v3461 = vpop.f32.mrb[0].mxu0
        %3462 = vmatprep.mubr.bf16.mxu0 0
        %3463 = vmatmul.mubr.bf16.gmra.mrb[0].mxu0 %v3363
        %v3464 = vpop.f32.mrb[0].mxu0
        %v3465 = vadd.f32 %v3343, %v3464
        %v3466 = vpop.f32.mrb[0].mxu0
        %v3467 = vpop.f32.mrb[0].mxu0
        %v3468 = vadd.f32 %v3343, %v3467
        %v3469 = vpop.f32.mrb[0].mxu0
        %3470 = vmatprep.mubr.bf16.mxu0 0
        %3471 = vmatmul.mubr.bf16.gmra.mrb[0].mxu0 %v3366
        %v3472 = vpop.f32.mrb[0].mxu0
        %v3473 = vadd.f32 %v3343, %v3472
        %v3474 = vpop.f32.mrb[0].mxu0
        %v3475 = vpop.f32.mrb[0].mxu0
        %v3476 = vadd.f32 %v3343, %v3475
        %v3477 = vpop.f32.mrb[0].mxu0
        %3478 = vmatprep.mubr.bf16.mxu0 0
        %3479 = vmatmul.mubr.bf16.gmra.mrb[0].mxu0 %v3369
        %v3480 = vpop.f32.mrb[0].mxu0
        %v3481 = vadd.f32 %v3343, %v3480
        %v3482 = vpop.f32.mrb[0].mxu0
        %v3483 = vpop.f32.mrb[0].mxu0
        %v3484 = vadd.f32 %v3343, %v3483
        %v3485 = vpop.f32.mrb[0].mxu0
        %3486 = vmatprep.mubr.bf16.mxu0 0
        %3487 = vmatmul.mubr.bf16.gmra.mrb[0].mxu0 %v3372
        %v3488 = vpop.f32.mrb[0].mxu0
        %v3489 = vadd.f32 %v3343, %v3488
        %v3490 = vpop.f32.mrb[0].mxu0
        %v3491 = vpop.f32.mrb[0].mxu0
        %v3492 = vadd.f32 %v3343, %v3491
        %v3493 = vpop.f32.mrb[0].mxu0
        %3494 = vmatprep.mubr.bf16.mxu0 0
        %3495 = vmatmul.mubr.bf16.gmra.mrb[0].mxu0 %v3375
        %v3496 = vpop.f32.mrb[0].mxu0
        %v3497 = vadd.f32 %v3343, %v3496
        %v3498 = vpop.f32.mrb[0].mxu0
        %v3499 = vpop.f32.mrb[0].mxu0
        %v3500 = vadd.f32 %v3343, %v3499
        %v3501 = vpop.f32.mrb[0].mxu0
        %3502 = vmatprep.mubr.bf16.mxu0 0
        %3503 = vmatmul.mubr.bf16.gmra.mrb[0].mxu0 %v3378
        %v3504 = vpop.f32.mrb[0].mxu0
        %v3505 = vadd.f32 %v3343, %v3504
        %v3506 = vpop.f32.mrb[0].mxu0
        %v3507 = vpop.f32.mrb[0].mxu0
        %v3508 = vadd.f32 %v3343, %v3507
        %v3509 = vpop.f32.mrb[0].mxu0
        %3510 = vmatprep.mubr.bf16.mxu0 0
        %3511 = vmatmul.mubr.bf16.gmra.mrb[0].mxu0 %v3381
        %v3512 = vpop.f32.mrb[0].mxu0
        %v3513 = vadd.f32 %v3343, %v3512
        %v3514 = vpop.f32.mrb[0].mxu0
        %v3515 = vpop.f32.mrb[0].mxu0
        %v3516 = vadd.f32 %v3343, %v3515
        %v3517 = vpop.f32.mrb[0].mxu0
        %3518 = vmatprep.mubr.bf16.mxu0 0
        %3519 = vmatmul.mubr.bf16.gmra.mrb[0].mxu0 %v3384
        %v3520 = vpop.f32.mrb[0].mxu0
        %v3521 = vadd.f32 %v3343, %v3520
        %v3522 = vpop.f32.mrb[0].mxu0
        %v3523 = vpop.f32.mrb[0].mxu0
        %v3524 = vadd.f32 %v3343, %v3523
        %v3525 = vpop.f32.mrb[0].mxu0
        %3526 = vmatprep.mubr.bf16.mxu0 0
        %3527 = vmatmul.mubr.bf16.gmra.mrb[0].mxu0 %v3387
        %v3528 = vpop.f32.mrb[0].mxu0
        %v3529 = vadd.f32 %v3343, %v3528
        %v3530 = vpop.f32.mrb[0].mxu0
        %v3531 = vpop.f32.mrb[0].mxu0
        %v3532 = vadd.f32 %v3343, %v3531
        %v3533 = vpop.f32.mrb[0].mxu0
        %3534 = vmatprep.mubr.bf16.mxu0 0
        %3535 = vmatmul.mubr.bf16.gmra.mrb[0].mxu0 %v3390
        %v3536 = vpop.f32.mrb[0].mxu0
        %v3537 = vadd.f32 %v3343, %v3536
        %v3538 = vpop.f32.mrb[0].mxu0
        %v3539 = vpop.f32.mrb[0].mxu0
        %v3540 = vadd.f32 %v3343, %v3539
        %v3541 = vpop.f32.mrb[0].mxu0
        %3542 = vmatprep.mubr.bf16.mxu0 0
        %3543 = vmatmul.mubr.bf16.gmra.mrb[0].mxu0 %v3393
        %v3544 = vpop.f32.mrb[0].mxu0
        %v3545 = vadd.f32 %v3343, %v3544
        %v3546 = vpop.f32.mrb[0].mxu0
        %v3547 = vpop.f32.mrb[0].mxu0
        %v3548 = vadd.f32 %v3343, %v3547
        %v3549 = vpop.f32.mrb[0].mxu0
        %3550 = vmatprep.mubr.bf16.mxu0 0
        %3551 = vmatmul.mubr.bf16.gmra.mrb[0].mxu0 %v3396
        %v3552 = vpop.f32.mrb[0].mxu0
        %v3553 = vadd.f32 %v3343, %v3552
        %v3554 = vpop.f32.mrb[0].mxu0
        %v3555 = vpop.f32.mrb[0].mxu0
        %v3556 = vadd.f32 %v3343, %v3555
        %v3557 = vpop.f32.mrb[0].mxu0
        %3558 = vmatprep.mubr.bf16.mxu0 0
        %3559 = vmatmul.mubr.bf16.gmra.mrb[0].mxu0 %v3399
        %v3560 = vpop.f32.mrb[0].mxu0
        %v3561 = vadd.f32 %v3343, %v3560
        %v3562 = vpop.f32.mrb[0].mxu0
        %v3563 = vpop.f32.mrb[0].mxu0
        %v3564 = vadd.f32 %v3343, %v3563
        %v3565 = vpop.f32.mrb[0].mxu0
        %3566 = vdwg.mxu0
        %vm3567 = vcmask 64512
        %v3568 = vsel %vm3567, %v3441, 0.0
        %v3569 = vsel %vm3567, %v3444, 0.0
        %v3570 = vadd.f32 %v3568, %v3569
        %v3571 = vsel %vm3567, %v3449, 0.0
        %v3572 = vadd.f32 %v3570, %v3571
        %v3573 = vsel %vm3567, %v3452, 0.0
        %v3574 = vadd.f32 %v3572, %v3573
        %v3575 = vsel %vm3567, %v3457, 0.0
        %v3576 = vadd.f32 %v3574, %v3575
        %v3577 = vsel %vm3567, %v3460, 0.0
        %v3578 = vadd.f32 %v3576, %v3577
        %v3579 = vsel %vm3567, %v3465, 0.0
        %v3580 = vadd.f32 %v3578, %v3579
        %v3581 = vsel %vm3567, %v3468, 0.0
        %v3582 = vadd.f32 %v3580, %v3581
        %v3583 = vsel %vm3567, %v3473, 0.0
        %v3584 = vadd.f32 %v3582, %v3583
        %v3585 = vsel %vm3567, %v3476, 0.0
        %v3586 = vadd.f32 %v3584, %v3585
        %v3587 = vsel %vm3567, %v3481, 0.0
        %v3588 = vadd.f32 %v3586, %v3587
        %v3589 = vsel %vm3567, %v3484, 0.0
        %v3590 = vadd.f32 %v3588, %v3589
        %v3591 = vsel %vm3567, %v3489, 0.0
        %v3592 = vadd.f32 %v3590, %v3591
        %v3593 = vsel %vm3567, %v3492, 0.0
        %v3594 = vadd.f32 %v3592, %v3593
        %v3595 = vsel %vm3567, %v3497, 0.0
        %v3596 = vadd.f32 %v3594, %v3595
        %v3597 = vsel %vm3567, %v3500, 0.0
        %v3598 = vadd.f32 %v3596, %v3597
        %v3599 = vsel %vm3567, %v3505, 0.0
        %v3600 = vadd.f32 %v3598, %v3599
        %v3601 = vsel %vm3567, %v3508, 0.0
        %v3602 = vadd.f32 %v3600, %v3601
        %v3603 = vsel %vm3567, %v3513, 0.0
        %v3604 = vadd.f32 %v3602, %v3603
        %v3605 = vsel %vm3567, %v3516, 0.0
        %v3606 = vadd.f32 %v3604, %v3605
        %v3607 = vsel %vm3567, %v3521, 0.0
        %v3608 = vadd.f32 %v3606, %v3607
        %v3609 = vsel %vm3567, %v3524, 0.0
        %v3610 = vadd.f32 %v3608, %v3609
        %v3611 = vsel %vm3567, %v3529, 0.0
        %v3612 = vadd.f32 %v3610, %v3611
        %v3613 = vsel %vm3567, %v3532, 0.0
        %v3614 = vadd.f32 %v3612, %v3613
        %v3615 = vsel %vm3567, %v3537, 0.0
        %v3616 = vadd.f32 %v3614, %v3615
        %v3617 = vsel %vm3567, %v3540, 0.0
        %v3618 = vadd.f32 %v3616, %v3617
        %v3619 = vsel %vm3567, %v3545, 0.0
        %v3620 = vadd.f32 %v3618, %v3619
        %v3621 = vsel %vm3567, %v3548, 0.0
        %v3622 = vadd.f32 %v3620, %v3621
        %v3623 = vsel %vm3567, %v3553, 0.0
        %v3624 = vadd.f32 %v3622, %v3623
        %v3625 = vsel %vm3567, %v3556, 0.0
        %v3626 = vadd.f32 %v3624, %v3625
        %v3627 = vsel %vm3567, %v3561, 0.0
        %v3628 = vadd.f32 %v3626, %v3627
        %v3629 = vsel %vm3567, %v3564, 0.0
        %v3630 = vadd.f32 %v3628, %v3629
        %v3631 = vrot.slane %v3630, 4
        %v3632 = vadd.f32 %v3630, %v3631
        %v3633 = vrot.slane %v3632, 2
        %v3634 = vadd.f32 %v3632, %v3633
        %v3635 = vrot.slane %v3634, 1
        %v3636 = vadd.f32 %v3634, %v3635
        %v3637 = vmul.f32 %v3636, %v903
        %v3638 = vsub.f32 %v3441, %v3637
        %v3639 = vsub.f32 %v3444, %v3637
        %v3640 = vsub.f32 %v3449, %v3637
        %v3641 = vsub.f32 %v3452, %v3637
        %v3642 = vsub.f32 %v3457, %v3637
        %v3643 = vsub.f32 %v3460, %v3637
        %v3644 = vsub.f32 %v3465, %v3637
        %v3645 = vsub.f32 %v3468, %v3637
        %v3646 = vsub.f32 %v3473, %v3637
        %v3647 = vsub.f32 %v3476, %v3637
        %v3648 = vsub.f32 %v3481, %v3637
        %v3649 = vsub.f32 %v3484, %v3637
        %v3650 = vsub.f32 %v3489, %v3637
        %v3651 = vsub.f32 %v3492, %v3637
        %v3652 = vsub.f32 %v3497, %v3637
        %v3653 = vsub.f32 %v3500, %v3637
        %v3654 = vsub.f32 %v3505, %v3637
        %v3655 = vsub.f32 %v3508, %v3637
        %v3656 = vsub.f32 %v3513, %v3637
        %v3657 = vsub.f32 %v3516, %v3637
        %v3658 = vsub.f32 %v3521, %v3637
        %v3659 = vsub.f32 %v3524, %v3637
        %v3660 = vsub.f32 %v3529, %v3637
        %v3661 = vsub.f32 %v3532, %v3637
        %v3662 = vsub.f32 %v3537, %v3637
        %v3663 = vsub.f32 %v3540, %v3637
        %v3664 = vsub.f32 %v3545, %v3637
        %v3665 = vsub.f32 %v3548, %v3637
        %v3666 = vsub.f32 %v3553, %v3637
        %v3667 = vsub.f32 %v3556, %v3637
        %v3668 = vsub.f32 %v3561, %v3637
        %v3669 = vsub.f32 %v3564, %v3637
        %v3670 = vmul.f32 %v3638, %v3638
        %v3671 = vmul.f32 %v3639, %v3639
        %v3672 = vmul.f32 %v3640, %v3640
        %v3673 = vmul.f32 %v3641, %v3641
        %v3674 = vmul.f32 %v3642, %v3642
        %v3675 = vmul.f32 %v3643, %v3643
        %v3676 = vmul.f32 %v3644, %v3644
        %v3677 = vmul.f32 %v3645, %v3645
        %v3678 = vmul.f32 %v3646, %v3646
        %v3679 = vmul.f32 %v3647, %v3647
        %v3680 = vmul.f32 %v3648, %v3648
        %v3681 = vmul.f32 %v3649, %v3649
        %v3682 = vmul.f32 %v3650, %v3650
        %v3683 = vmul.f32 %v3651, %v3651
        %v3684 = vmul.f32 %v3652, %v3652
        %v3685 = vmul.f32 %v3653, %v3653
        %v3686 = vmul.f32 %v3654, %v3654
        %v3687 = vmul.f32 %v3655, %v3655
        %v3688 = vmul.f32 %v3656, %v3656
        %v3689 = vmul.f32 %v3657, %v3657
        %v3690 = vmul.f32 %v3658, %v3658
        %v3691 = vmul.f32 %v3659, %v3659
        %v3692 = vmul.f32 %v3660, %v3660
        %v3693 = vmul.f32 %v3661, %v3661
        %v3694 = vmul.f32 %v3662, %v3662
        %v3695 = vmul.f32 %v3663, %v3663
        %v3696 = vmul.f32 %v3664, %v3664
        %v3697 = vmul.f32 %v3665, %v3665
        %v3698 = vmul.f32 %v3666, %v3666
        %v3699 = vmul.f32 %v3667, %v3667
        %v3700 = vmul.f32 %v3668, %v3668
        %v3701 = vmul.f32 %v3669, %v3669
        %v3702 = vsel %vm3567, %v3670, 0.0
        %v3703 = vsel %vm3567, %v3671, 0.0
        %v3704 = vadd.f32 %v3702, %v3703
        %v3705 = vsel %vm3567, %v3672, 0.0
        %v3706 = vadd.f32 %v3704, %v3705
        %v3707 = vsel %vm3567, %v3673, 0.0
        %v3708 = vadd.f32 %v3706, %v3707
        %v3709 = vsel %vm3567, %v3674, 0.0
        %v3710 = vadd.f32 %v3708, %v3709
        %v3711 = vsel %vm3567, %v3675, 0.0
        %v3712 = vadd.f32 %v3710, %v3711
        %v3713 = vsel %vm3567, %v3676, 0.0
        %v3714 = vadd.f32 %v3712, %v3713
        %v3715 = vsel %vm3567, %v3677, 0.0
        %v3716 = vadd.f32 %v3714, %v3715
        %v3717 = vsel %vm3567, %v3678, 0.0
        %v3718 = vadd.f32 %v3716, %v3717
        %v3719 = vsel %vm3567, %v3679, 0.0
        %v3720 = vadd.f32 %v3718, %v3719
        %v3721 = vsel %vm3567, %v3680, 0.0
        %v3722 = vadd.f32 %v3720, %v3721
        %v3723 = vsel %vm3567, %v3681, 0.0
        %v3724 = vadd.f32 %v3722, %v3723
        %v3725 = vsel %vm3567, %v3682, 0.0
        %v3726 = vadd.f32 %v3724, %v3725
        %v3727 = vsel %vm3567, %v3683, 0.0
        %v3728 = vadd.f32 %v3726, %v3727
        %v3729 = vsel %vm3567, %v3684, 0.0
        %v3730 = vadd.f32 %v3728, %v3729
        %v3731 = vsel %vm3567, %v3685, 0.0
        %v3732 = vadd.f32 %v3730, %v3731
        %v3733 = vsel %vm3567, %v3686, 0.0
        %v3734 = vadd.f32 %v3732, %v3733
        %v3735 = vsel %vm3567, %v3687, 0.0
        %v3736 = vadd.f32 %v3734, %v3735
        %v3737 = vsel %vm3567, %v3688, 0.0
        %v3738 = vadd.f32 %v3736, %v3737
        %v3739 = vsel %vm3567, %v3689, 0.0
        %v3740 = vadd.f32 %v3738, %v3739
        %v3741 = vsel %vm3567, %v3690, 0.0
        %v3742 = vadd.f32 %v3740, %v3741
        %v3743 = vsel %vm3567, %v3691, 0.0
        %v3744 = vadd.f32 %v3742, %v3743
        %v3745 = vsel %vm3567, %v3692, 0.0
        %v3746 = vadd.f32 %v3744, %v3745
        %v3747 = vsel %vm3567, %v3693, 0.0
        %v3748 = vadd.f32 %v3746, %v3747
        %v3749 = vsel %vm3567, %v3694, 0.0
        %v3750 = vadd.f32 %v3748, %v3749
        %v3751 = vsel %vm3567, %v3695, 0.0
        %v3752 = vadd.f32 %v3750, %v3751
        %v3753 = vsel %vm3567, %v3696, 0.0
        %v3754 = vadd.f32 %v3752, %v3753
        %v3755 = vsel %vm3567, %v3697, 0.0
        %v3756 = vadd.f32 %v3754, %v3755
        %v3757 = vsel %vm3567, %v3698, 0.0
        %v3758 = vadd.f32 %v3756, %v3757
        %v3759 = vsel %vm3567, %v3699, 0.0
        %v3760 = vadd.f32 %v3758, %v3759
        %v3761 = vsel %vm3567, %v3700, 0.0
        %v3762 = vadd.f32 %v3760, %v3761
        %v3763 = vsel %vm3567, %v3701, 0.0
        %v3764 = vadd.f32 %v3762, %v3763
        %v3765 = vrot.slane %v3764, 4
        %v3766 = vadd.f32 %v3764, %v3765
        %v3767 = vrot.slane %v3766, 2
        %v3768 = vadd.f32 %v3766, %v3767
        %v3769 = vrot.slane %v3768, 1
        %v3770 = vadd.f32 %v3768, %v3769
        %v3771 = vmul.f32 %v3770, %v903
        %v3772 = vadd.f32 %v3771, 1e-05
        %v3773 = vrsqrt.pop %v3772
        %v3774 = vmul.f32 %v3638, %v3773
        %v3775 = vmul.f32 %v3639, %v3773
        %v3776 = vmul.f32 %v3640, %v3773
        %v3777 = vmul.f32 %v3641, %v3773
        %v3778 = vmul.f32 %v3642, %v3773
        %v3779 = vmul.f32 %v3643, %v3773
        %v3780 = vmul.f32 %v3644, %v3773
        %v3781 = vmul.f32 %v3645, %v3773
        %v3782 = vmul.f32 %v3646, %v3773
        %v3783 = vmul.f32 %v3647, %v3773
        %v3784 = vmul.f32 %v3648, %v3773
        %v3785 = vmul.f32 %v3649, %v3773
        %v3786 = vmul.f32 %v3650, %v3773
        %v3787 = vmul.f32 %v3651, %v3773
        %v3788 = vmul.f32 %v3652, %v3773
        %v3789 = vmul.f32 %v3653, %v3773
        %v3790 = vmul.f32 %v3654, %v3773
        %v3791 = vmul.f32 %v3655, %v3773
        %v3792 = vmul.f32 %v3656, %v3773
        %v3793 = vmul.f32 %v3657, %v3773
        %v3794 = vmul.f32 %v3658, %v3773
        %v3795 = vmul.f32 %v3659, %v3773
        %v3796 = vmul.f32 %v3660, %v3773
        %v3797 = vmul.f32 %v3661, %v3773
        %v3798 = vmul.f32 %v3662, %v3773
        %v3799 = vmul.f32 %v3663, %v3773
        %v3800 = vmul.f32 %v3664, %v3773
        %v3801 = vmul.f32 %v3665, %v3773
        %v3802 = vmul.f32 %v3666, %v3773
        %v3803 = vmul.f32 %v3667, %v3773
        %v3804 = vmul.f32 %v3668, %v3773
        %v3805 = vmul.f32 %v3669, %v3773
        %v3806 = vlaneseq
        %v3807 = vshrl.u32 %v3806, 7
        %v3808 = vsub.s32 6, %v3807
        %v3809 = vrot.slane %v536, %v3808
        %v3810 = vmul.f32 %v3774, %v3809
        %v3811 = vmul.f32 %v3775, %v3809
        %v3812 = vmul.f32 %v3776, %v3809
        %v3813 = vmul.f32 %v3777, %v3809
        %v3814 = vmul.f32 %v3778, %v3809
        %v3815 = vmul.f32 %v3779, %v3809
        %v3816 = vmul.f32 %v3780, %v3809
        %v3817 = vmul.f32 %v3781, %v3809
        %v3818 = vmul.f32 %v3782, %v3809
        %v3819 = vmul.f32 %v3783, %v3809
        %v3820 = vmul.f32 %v3784, %v3809
        %v3821 = vmul.f32 %v3785, %v3809
        %v3822 = vmul.f32 %v3786, %v3809
        %v3823 = vmul.f32 %v3787, %v3809
        %v3824 = vmul.f32 %v3788, %v3809
        %v3825 = vmul.f32 %v3789, %v3809
        %v3826 = vmul.f32 %v3790, %v3809
        %v3827 = vmul.f32 %v3791, %v3809
        %v3828 = vmul.f32 %v3792, %v3809
        %v3829 = vmul.f32 %v3793, %v3809
        %v3830 = vmul.f32 %v3794, %v3809
        %v3831 = vmul.f32 %v3795, %v3809
        %v3832 = vmul.f32 %v3796, %v3809
        %v3833 = vmul.f32 %v3797, %v3809
        %v3834 = vmul.f32 %v3798, %v3809
        %v3835 = vmul.f32 %v3799, %v3809
        %v3836 = vmul.f32 %v3800, %v3809
        %v3837 = vmul.f32 %v3801, %v3809
        %v3838 = vmul.f32 %v3802, %v3809
        %v3839 = vmul.f32 %v3803, %v3809
        %v3840 = vmul.f32 %v3804, %v3809
        %v3841 = vmul.f32 %v3805, %v3809
        %v3842 = vlaneseq
        %v3843 = vshrl.u32 %v3842, 7
        %v3844 = vsub.s32 7, %v3843
        %v3845 = vrot.slane %v536, %v3844
        %v3846 = vadd.f32 %v3810, %v3845
        %v3847 = vadd.f32 %v3811, %v3845
        %v3848 = vadd.f32 %v3812, %v3845
        %v3849 = vadd.f32 %v3813, %v3845
        %v3850 = vadd.f32 %v3814, %v3845
        %v3851 = vadd.f32 %v3815, %v3845
        %v3852 = vadd.f32 %v3816, %v3845
        %v3853 = vadd.f32 %v3817, %v3845
        %v3854 = vadd.f32 %v3818, %v3845
        %v3855 = vadd.f32 %v3819, %v3845
        %v3856 = vadd.f32 %v3820, %v3845
        %v3857 = vadd.f32 %v3821, %v3845
        %v3858 = vadd.f32 %v3822, %v3845
        %v3859 = vadd.f32 %v3823, %v3845
        %v3860 = vadd.f32 %v3824, %v3845
        %v3861 = vadd.f32 %v3825, %v3845
        %v3862 = vadd.f32 %v3826, %v3845
        %v3863 = vadd.f32 %v3827, %v3845
        %v3864 = vadd.f32 %v3828, %v3845
        %v3865 = vadd.f32 %v3829, %v3845
        %v3866 = vadd.f32 %v3830, %v3845
        %v3867 = vadd.f32 %v3831, %v3845
        %v3868 = vadd.f32 %v3832, %v3845
        %v3869 = vadd.f32 %v3833, %v3845
        %v3870 = vadd.f32 %v3834, %v3845
        %v3871 = vadd.f32 %v3835, %v3845
        %v3872 = vadd.f32 %v3836, %v3845
        %v3873 = vadd.f32 %v3837, %v3845
        %v3874 = vadd.f32 %v3838, %v3845
        %v3875 = vadd.f32 %v3839, %v3845
        %v3876 = vadd.f32 %v3840, %v3845
        %v3877 = vadd.f32 %v3841, %v3845
        %v3878 = vmax.f32 %v3846, 0.0
        %v3879 = vmax.f32 %v3847, 0.0
        %v3880 = vmax.f32 %v3848, 0.0
        %v3881 = vmax.f32 %v3849, 0.0
        %v3882 = vmax.f32 %v3850, 0.0
        %v3883 = vmax.f32 %v3851, 0.0
        %v3884 = vmax.f32 %v3852, 0.0
        %v3885 = vmax.f32 %v3853, 0.0
        %v3886 = vmax.f32 %v3854, 0.0
        %v3887 = vmax.f32 %v3855, 0.0
        %v3888 = vmax.f32 %v3856, 0.0
        %v3889 = vmax.f32 %v3857, 0.0
        %v3890 = vmax.f32 %v3858, 0.0
        %v3891 = vmax.f32 %v3859, 0.0
        %v3892 = vmax.f32 %v3860, 0.0
        %v3893 = vmax.f32 %v3861, 0.0
        %v3894 = vmax.f32 %v3862, 0.0
        %v3895 = vmax.f32 %v3863, 0.0
        %v3896 = vmax.f32 %v3864, 0.0
        %v3897 = vmax.f32 %v3865, 0.0
        %v3898 = vmax.f32 %v3866, 0.0
        %v3899 = vmax.f32 %v3867, 0.0
        %v3900 = vmax.f32 %v3868, 0.0
        %v3901 = vmax.f32 %v3869, 0.0
        %v3902 = vmax.f32 %v3870, 0.0
        %v3903 = vmax.f32 %v3871, 0.0
        %v3904 = vmax.f32 %v3872, 0.0
        %v3905 = vmax.f32 %v3873, 0.0
        %v3906 = vmax.f32 %v3874, 0.0
        %v3907 = vmax.f32 %v3875, 0.0
        %v3908 = vmax.f32 %v3876, 0.0
        %v3909 = vmax.f32 %v3877, 0.0
        %v3910 = vpack.c.bf16 %v3879, %v3878
        %v3911 = vpack.c.bf16 %v3881, %v3880
        %v3912 = vpack.c.bf16 %v3883, %v3882
        %v3913 = vpack.c.bf16 %v3885, %v3884
        %v3914 = vpack.c.bf16 %v3887, %v3886
        %v3915 = vpack.c.bf16 %v3889, %v3888
        %v3916 = vpack.c.bf16 %v3891, %v3890
        %v3917 = vpack.c.bf16 %v3893, %v3892
        %v3918 = vpack.c.bf16 %v3895, %v3894
        %v3919 = vpack.c.bf16 %v3897, %v3896
        %v3920 = vpack.c.bf16 %v3899, %v3898
        %v3921 = vpack.c.bf16 %v3901, %v3900
        %v3922 = vpack.c.bf16 %v3903, %v3902
        %v3923 = vpack.c.bf16 %v3905, %v3904
        %v3924 = vpack.c.bf16 %v3907, %v3906
        %v3925 = vpack.c.bf16 %v3909, %v3908
        %s3926 = smul.addr %s35, 4
        %s3927 = scalar_lea.vmem %s10, %s3926
        %v3928 = vld [vmem:[%s3927] sm:$0xf]
        %v3929 = vlaneseq
        %v3930 = vshrl.u32 %v3929, 7
        %v3931 = vsub.s32 0, %v3930
        %v3932 = vrot.slane %v537, %v3931
        %v3934 = vsel %vm3567, %v3910, 0
        %v3937 = vsel %vm3567, %v3911, 0
        %v3940 = vsel %vm3567, %v3912, 0
        %v3943 = vsel %vm3567, %v3913, 0
        %v3946 = vsel %vm3567, %v3914, 0
        %v3949 = vsel %vm3567, %v3915, 0
        %v3952 = vsel %vm3567, %v3916, 0
        %v3955 = vsel %vm3567, %v3917, 0
        %v3958 = vsel %vm3567, %v3918, 0
        %v3961 = vsel %vm3567, %v3919, 0
        %v3964 = vsel %vm3567, %v3920, 0
        %v3967 = vsel %vm3567, %v3921, 0
        %v3970 = vsel %vm3567, %v3922, 0
        %v3973 = vsel %vm3567, %v3923, 0
        %v3976 = vsel %vm3567, %v3924, 0
        %v3979 = vsel %vm3567, %v3925, 0
        %vm3981 = vcmask 1043456
        %v3983 = vsel %vm3981, %v3928, 0
        %3985 = vmatprep.subr.bf16.mxu0 0
        %3986 = vmatpush1.bf16.msra.mxu0 %v3983
        %3987 = vmatprep.subr.bf16.mxu0 0
        %3988 = vmatpush1.bf16.msra.mxu0 0
        %3989 = vmatprep.subr.bf16.mxu0 0
        %3990 = vmatpush1.bf16.msra.mxu0 0
        %3991 = vmatprep.subr.bf16.mxu0 0
        %3992 = vmatpush1.bf16.msra.mxu0 0
        %3993 = vmatprep.subr.bf16.mxu0 0
        %3994 = vmatpush1.bf16.msra.mxu0 0
        %3995 = vmatprep.subr.bf16.mxu0 0
        %3996 = vmatpush1.bf16.msra.mxu0 0
        %3997 = vmatprep.subr.bf16.mxu0 0
        %3998 = vmatpush1.bf16.msra.mxu0 0
        %3999 = vmatprep.subr.bf16.mxu0 0
        %4000 = vmatpush1.bf16.msra.mxu0 0
        %4001 = vmatprep.subr.bf16.mxu0 0
        %4002 = vmatpush1.bf16.msra.mxu0 0
        %4003 = vmatprep.subr.bf16.mxu0 0
        %4004 = vmatpush1.bf16.msra.mxu0 0
        %4005 = vmatprep.subr.bf16.mxu0 0
        %4006 = vmatpush1.bf16.msra.mxu0 0
        %4007 = vmatprep.subr.bf16.mxu0 0
        %4008 = vmatpush1.bf16.msra.mxu0 0
        %4009 = vmatprep.subr.bf16.mxu0 0
        %4010 = vmatpush1.bf16.msra.mxu0 0
        %4011 = vmatprep.subr.bf16.mxu0 0
        %4012 = vmatpush1.bf16.msra.mxu0 0
        %4013 = vmatprep.subr.bf16.mxu0 0
        %4014 = vmatpush1.bf16.msra.mxu0 0
        %4015 = vmatprep.subr.bf16.mxu0 0
        %4016 = vmatpush1.bf16.msra.mxu0 0
        %4017 = vmatprep.mubr.bf16.mxu0 0
        %4018 = vmatmul.mubr.bf16.gmra.mrb[0].mxu0 %v3934
        %v4019 = vpop.f32.mrb[0].mxu0
        %v4020 = vadd.f32 %v3932, %v4019
        %v4021 = vpop.f32.mrb[0].mxu0
        %v4022 = vpop.f32.mrb[0].mxu0
        %v4023 = vadd.f32 %v3932, %v4022
        %v4024 = vpop.f32.mrb[0].mxu0
        %4025 = vmatprep.mubr.bf16.mxu0 0
        %4026 = vmatmul.mubr.bf16.gmra.mrb[0].mxu0 %v3937
        %v4027 = vpop.f32.mrb[0].mxu0
        %v4028 = vadd.f32 %v3932, %v4027
        %v4029 = vpop.f32.mrb[0].mxu0
        %v4030 = vpop.f32.mrb[0].mxu0
        %v4031 = vadd.f32 %v3932, %v4030
        %v4032 = vpop.f32.mrb[0].mxu0
        %4033 = vmatprep.mubr.bf16.mxu0 0
        %4034 = vmatmul.mubr.bf16.gmra.mrb[0].mxu0 %v3940
        %v4035 = vpop.f32.mrb[0].mxu0
        %v4036 = vadd.f32 %v3932, %v4035
        %v4037 = vpop.f32.mrb[0].mxu0
        %v4038 = vpop.f32.mrb[0].mxu0
        %v4039 = vadd.f32 %v3932, %v4038
        %v4040 = vpop.f32.mrb[0].mxu0
        %4041 = vmatprep.mubr.bf16.mxu0 0
        %4042 = vmatmul.mubr.bf16.gmra.mrb[0].mxu0 %v3943
        %v4043 = vpop.f32.mrb[0].mxu0
        %v4044 = vadd.f32 %v3932, %v4043
        %v4045 = vpop.f32.mrb[0].mxu0
        %v4046 = vpop.f32.mrb[0].mxu0
        %v4047 = vadd.f32 %v3932, %v4046
        %v4048 = vpop.f32.mrb[0].mxu0
        %4049 = vmatprep.mubr.bf16.mxu0 0
        %4050 = vmatmul.mubr.bf16.gmra.mrb[0].mxu0 %v3946
        %v4051 = vpop.f32.mrb[0].mxu0
        %v4052 = vadd.f32 %v3932, %v4051
        %v4053 = vpop.f32.mrb[0].mxu0
        %v4054 = vpop.f32.mrb[0].mxu0
        %v4055 = vadd.f32 %v3932, %v4054
        %v4056 = vpop.f32.mrb[0].mxu0
        %4057 = vmatprep.mubr.bf16.mxu0 0
        %4058 = vmatmul.mubr.bf16.gmra.mrb[0].mxu0 %v3949
        %v4059 = vpop.f32.mrb[0].mxu0
        %v4060 = vadd.f32 %v3932, %v4059
        %v4061 = vpop.f32.mrb[0].mxu0
        %v4062 = vpop.f32.mrb[0].mxu0
        %v4063 = vadd.f32 %v3932, %v4062
        %v4064 = vpop.f32.mrb[0].mxu0
        %4065 = vmatprep.mubr.bf16.mxu0 0
        %4066 = vmatmul.mubr.bf16.gmra.mrb[0].mxu0 %v3952
        %v4067 = vpop.f32.mrb[0].mxu0
        %v4068 = vadd.f32 %v3932, %v4067
        %v4069 = vpop.f32.mrb[0].mxu0
        %v4070 = vpop.f32.mrb[0].mxu0
        %v4071 = vadd.f32 %v3932, %v4070
        %v4072 = vpop.f32.mrb[0].mxu0
        %4073 = vmatprep.mubr.bf16.mxu0 0
        %4074 = vmatmul.mubr.bf16.gmra.mrb[0].mxu0 %v3955
        %v4075 = vpop.f32.mrb[0].mxu0
        %v4076 = vadd.f32 %v3932, %v4075
        %v4077 = vpop.f32.mrb[0].mxu0
        %v4078 = vpop.f32.mrb[0].mxu0
        %v4079 = vadd.f32 %v3932, %v4078
        %v4080 = vpop.f32.mrb[0].mxu0
        %4081 = vmatprep.mubr.bf16.mxu0 0
        %4082 = vmatmul.mubr.bf16.gmra.mrb[0].mxu0 %v3958
        %v4083 = vpop.f32.mrb[0].mxu0
        %v4084 = vadd.f32 %v3932, %v4083
        %v4085 = vpop.f32.mrb[0].mxu0
        %v4086 = vpop.f32.mrb[0].mxu0
        %v4087 = vadd.f32 %v3932, %v4086
        %v4088 = vpop.f32.mrb[0].mxu0
        %4089 = vmatprep.mubr.bf16.mxu0 0
        %4090 = vmatmul.mubr.bf16.gmra.mrb[0].mxu0 %v3961
        %v4091 = vpop.f32.mrb[0].mxu0
        %v4092 = vadd.f32 %v3932, %v4091
        %v4093 = vpop.f32.mrb[0].mxu0
        %v4094 = vpop.f32.mrb[0].mxu0
        %v4095 = vadd.f32 %v3932, %v4094
        %v4096 = vpop.f32.mrb[0].mxu0
        %4097 = vmatprep.mubr.bf16.mxu0 0
        %4098 = vmatmul.mubr.bf16.gmra.mrb[0].mxu0 %v3964
        %v4099 = vpop.f32.mrb[0].mxu0
        %v4100 = vadd.f32 %v3932, %v4099
        %v4101 = vpop.f32.mrb[0].mxu0
        %v4102 = vpop.f32.mrb[0].mxu0
        %v4103 = vadd.f32 %v3932, %v4102
        %v4104 = vpop.f32.mrb[0].mxu0
        %4105 = vmatprep.mubr.bf16.mxu0 0
        %4106 = vmatmul.mubr.bf16.gmra.mrb[0].mxu0 %v3967
        %v4107 = vpop.f32.mrb[0].mxu0
        %v4108 = vadd.f32 %v3932, %v4107
        %v4109 = vpop.f32.mrb[0].mxu0
        %v4110 = vpop.f32.mrb[0].mxu0
        %v4111 = vadd.f32 %v3932, %v4110
        %v4112 = vpop.f32.mrb[0].mxu0
        %4113 = vmatprep.mubr.bf16.mxu0 0
        %4114 = vmatmul.mubr.bf16.gmra.mrb[0].mxu0 %v3970
        %v4115 = vpop.f32.mrb[0].mxu0
        %v4116 = vadd.f32 %v3932, %v4115
        %v4117 = vpop.f32.mrb[0].mxu0
        %v4118 = vpop.f32.mrb[0].mxu0
        %v4119 = vadd.f32 %v3932, %v4118
        %v4120 = vpop.f32.mrb[0].mxu0
        %4121 = vmatprep.mubr.bf16.mxu0 0
        %4122 = vmatmul.mubr.bf16.gmra.mrb[0].mxu0 %v3973
        %v4123 = vpop.f32.mrb[0].mxu0
        %v4124 = vadd.f32 %v3932, %v4123
        %v4125 = vpop.f32.mrb[0].mxu0
        %v4126 = vpop.f32.mrb[0].mxu0
        %v4127 = vadd.f32 %v3932, %v4126
        %v4128 = vpop.f32.mrb[0].mxu0
        %4129 = vmatprep.mubr.bf16.mxu0 0
        %4130 = vmatmul.mubr.bf16.gmra.mrb[0].mxu0 %v3976
        %v4131 = vpop.f32.mrb[0].mxu0
        %v4132 = vadd.f32 %v3932, %v4131
        %v4133 = vpop.f32.mrb[0].mxu0
        %v4134 = vpop.f32.mrb[0].mxu0
        %v4135 = vadd.f32 %v3932, %v4134
        %v4136 = vpop.f32.mrb[0].mxu0
        %4137 = vmatprep.mubr.bf16.mxu0 0
        %4138 = vmatmul.mubr.bf16.gmra.mrb[0].mxu0 %v3979
        %v4139 = vpop.f32.mrb[0].mxu0
        %v4140 = vadd.f32 %v3932, %v4139
        %v4141 = vpop.f32.mrb[0].mxu0
        %v4142 = vpop.f32.mrb[0].mxu0
        %v4143 = vadd.f32 %v3932, %v4142
        %v4144 = vpop.f32.mrb[0].mxu0
        %4145 = vdwg.mxu0
        %v4146 = vtanh.pop %v4020
        %v4147 = vtanh.pop %v4023
        %v4148 = vtanh.pop %v4028
        %v4149 = vtanh.pop %v4031
        %v4150 = vtanh.pop %v4036
        %v4151 = vtanh.pop %v4039
        %v4152 = vtanh.pop %v4044
        %v4153 = vtanh.pop %v4047
        %v4154 = vtanh.pop %v4052
        %v4155 = vtanh.pop %v4055
        %v4156 = vtanh.pop %v4060
        %v4157 = vtanh.pop %v4063
        %v4158 = vtanh.pop %v4068
        %v4159 = vtanh.pop %v4071
        %v4160 = vtanh.pop %v4076
        %v4161 = vtanh.pop %v4079
        %v4162 = vtanh.pop %v4084
        %v4163 = vtanh.pop %v4087
        %v4164 = vtanh.pop %v4092
        %v4165 = vtanh.pop %v4095
        %v4166 = vtanh.pop %v4100
        %v4167 = vtanh.pop %v4103
        %v4168 = vtanh.pop %v4108
        %v4169 = vtanh.pop %v4111
        %v4170 = vtanh.pop %v4116
        %v4171 = vtanh.pop %v4119
        %v4172 = vtanh.pop %v4124
        %v4173 = vtanh.pop %v4127
        %v4174 = vtanh.pop %v4132
        %v4175 = vtanh.pop %v4135
        %v4176 = vtanh.pop %v4140
        %v4177 = vtanh.pop %v4143
        %4178 = vst [vmem:[%s498] sm:$0xff] %v4146
        %4179 = vst [vmem:[%s498 + $0x8] sm:$0xff] %v4147
        %4180 = vst [vmem:[%s498 + $0x10] sm:$0xff] %v4148
        %4181 = vst [vmem:[%s498 + $0x18] sm:$0xff] %v4149
        %4182 = vst [vmem:[%s498 + $0x20] sm:$0xff] %v4150
        %4183 = vst [vmem:[%s498 + $0x28] sm:$0xff] %v4151
        %4184 = vst [vmem:[%s498 + $0x30] sm:$0xff] %v4152
        %4185 = vst [vmem:[%s498 + $0x38] sm:$0xff] %v4153
        %4186 = vst [vmem:[%s498 + $0x40] sm:$0xff] %v4154
        %4187 = vst [vmem:[%s498 + $0x48] sm:$0xff] %v4155
        %4188 = vst [vmem:[%s498 + $0x50] sm:$0xff] %v4156
        %4189 = vst [vmem:[%s498 + $0x58] sm:$0xff] %v4157
        %4190 = vst [vmem:[%s498 + $0x60] sm:$0xff] %v4158
        %4191 = vst [vmem:[%s498 + $0x68] sm:$0xff] %v4159
        %4192 = vst [vmem:[%s498 + $0x70] sm:$0xff] %v4160
        %4193 = vst [vmem:[%s498 + $0x78] sm:$0xff] %v4161
        %4194 = vst [vmem:[%s498 + $0x80] sm:$0xff] %v4162
        %4195 = vst [vmem:[%s498 + $0x88] sm:$0xff] %v4163
        %4196 = vst [vmem:[%s498 + $0x90] sm:$0xff] %v4164
        %4197 = vst [vmem:[%s498 + $0x98] sm:$0xff] %v4165
        %4198 = vst [vmem:[%s498 + $0xa0] sm:$0xff] %v4166
        %4199 = vst [vmem:[%s498 + $0xa8] sm:$0xff] %v4167
        %4200 = vst [vmem:[%s498 + $0xb0] sm:$0xff] %v4168
        %4201 = vst [vmem:[%s498 + $0xb8] sm:$0xff] %v4169
        %4202 = vst [vmem:[%s498 + $0xc0] sm:$0xff] %v4170
        %4203 = vst [vmem:[%s498 + $0xc8] sm:$0xff] %v4171
        %4204 = vst [vmem:[%s498 + $0xd0] sm:$0xff] %v4172
        %4205 = vst [vmem:[%s498 + $0xd8] sm:$0xff] %v4173
        %4206 = vst [vmem:[%s498 + $0xe0] sm:$0xff] %v4174
        %4207 = vst [vmem:[%s498 + $0xe8] sm:$0xff] %v4175
        %4208 = vst [vmem:[%s498 + $0xf0] sm:$0xff] %v4176
        %4209 = vst [vmem:[%s498 + $0xf8] sm:$0xff] %v4177
        %s4210 = sand.u32 %s279, 1
        %s4211 = scalar_lea.sflag [#allocation4], %s4210
        %s4212 = sand.u32 %s279, 1
        %s4213 = smul.addr %s4212, 128
        %s4214 = scalar_lea.vmem [#allocation11], %s4213
        %s4215 = sand.u32 %s305, 1
        %s4216 = scalar_lea.sflag [#allocation13], %s4215
        %s4217 = sand.u32 %s305, 1
        %s4218 = smul.addr %s4217, 256
        %s4219 = scalar_lea.vmem [#allocation12], %s4218
        // Predicated region
        $region85: #{tpu_custom_call.1} parent=63 // pred_check
          %p4220 = pneg %p289
        $region86: #{tpu_custom_call.1} parent=63 // pred_check_branch
          %4222 = sbr.rel (%p4220) target = $region88
        $region87: #{tpu_custom_call.1} parent=63 // pred_region
          %s4224 = ssub.s32 2048, 2048
          %4225 = vsyncadd %s4211, %s4224
          %s4226 = smul.addr %s35, 16
          %s4227 = smul.addr %s4226, 128
          %s4228 = scalar_lea.hbm %s11, %s4227
          %s4229 = sshll.u32 %s4214, 4
          %s4230 = int_to_ptr.vmem [resolvable:$true] %s4229
          %4235 = dma.vmem_to_hbm [thread:$0]  %s4230, 2048, %s4228, %s4211, 128, 128, 8
        $region88: #{tpu_custom_call.1} parent=63 // pred_fallthru
          _
        // Predicated region
        $region89: #{tpu_custom_call.1} parent=63 // pred_check
          %p4236 = pneg %p315
        $region90: #{tpu_custom_call.1} parent=63 // pred_check_branch
          %4238 = sbr.rel (%p4236) target = $region92
        $region91: #{tpu_custom_call.1} parent=63 // pred_region
          %s4240 = ssub.s32 4096, 4096
          %4241 = vsyncadd %s4216, %s4240
          %s4242 = smul.addr %s35, 32
          %s4243 = smul.addr %s4242, 128
          %s4244 = scalar_lea.hbm %s12, %s4243
          %s4245 = sshll.u32 %s4219, 4
          %s4246 = int_to_ptr.vmem [resolvable:$true] %s4245
          %4251 = dma.vmem_to_hbm [thread:$0]  %s4246, 4096, %s4244, %s4216, 128, 128, 8
        $region92: #{tpu_custom_call.1} parent=63 // pred_fallthru
          _
      $region64: #{tpu_custom_call.1} parent=5 // pred_fallthru
        _
      %p4252 = scmp.le.s32.totalorder 2, %s30
      // Predicated region
      $region93: #{tpu_custom_call.1} parent=5 // pred_check
        %p4253 = pneg %p4252
      $region94: #{tpu_custom_call.1} parent=5 // pred_check_branch
        %4255 = sbr.rel (%p4253) target = $region96
      $region95: #{tpu_custom_call.1} parent=5 // pred_region
        %s4256 = ssub.s32 %s30, 2
        // Predicated region
        $region97: #{tpu_custom_call.1} parent=95 // pred_check
          %p4257 = pneg %p295
        $region98: #{tpu_custom_call.1} parent=95 // pred_check_branch
          %4259 = sbr.rel (%p4257) target = $region100
        $region99: #{tpu_custom_call.1} parent=95 // pred_region
          %s4260 = sand.u32 %s280, 1
          %s4261 = scalar_lea.sflag [#allocation4], %s4260
          %s4262 = sand.u32 %s280, 1
          %s4263 = smul.addr %s4262, 128
          %s4264 = scalar_lea.vmem [#allocation11], %s4263
          %4265 = dma.done %s4261, 2048
        $region100: #{tpu_custom_call.1} parent=95 // pred_fallthru
          _
        // Predicated region
        $region101: #{tpu_custom_call.1} parent=95 // pred_check
          %p4266 = pneg %p321
        $region102: #{tpu_custom_call.1} parent=95 // pred_check_branch
          %4268 = sbr.rel (%p4266) target = $region104
        $region103: #{tpu_custom_call.1} parent=95 // pred_region
          %s4269 = sand.u32 %s306, 1
          %s4270 = scalar_lea.sflag [#allocation13], %s4269
          %s4271 = sand.u32 %s306, 1
          %s4272 = smul.addr %s4271, 256
          %s4273 = scalar_lea.vmem [#allocation12], %s4272
          %4274 = dma.done %s4270, 4096
        $region104: #{tpu_custom_call.1} parent=95 // pred_fallthru
          _
      $region96: #{tpu_custom_call.1} parent=5 // pred_fallthru
        _
    $region6: #{tpu_custom_call.1} parent=1 // loop_footer
      %s34 = sadd.s32 1, %s30
    $region7: #{tpu_custom_call.1} parent=1 // loop_footer_branch
      %29 = sbr.rel target = $region3
    $region8: #{tpu_custom_call.1} parent=1 // loop_exit
      _
    %4275 = vsyncpa [#allocation3], 1
    %s4276 = scalar_lea.sflag [#allocation3], 1
    %4277 = vsyncpa %s4276, 1
    %4278 = vsyncpa [#allocation6], 1
    %4279 = vsyncpa [#allocation9], 1
    %4280 = vsyncpa [#allocation4], 1
    %s4281 = scalar_lea.sflag [#allocation4], 1
    %4282 = vsyncpa %s4281, 1
    %4283 = vsyncpa [#allocation13], 1
    %s4284 = scalar_lea.sflag [#allocation13], 1
    %4285 = vsyncpa %s4284, 1

</llo_original>
